<compile_context>
chip_gen: v7x
topology: tpu7x:2x2x1
jax: 0.10.0
libtpu: 0.0.40
codegen_flags: <defaults>
</compile_context>

<pallas_src>
import jax
import jax.numpy as jnp
import numpy as np
from jax.experimental import pallas as pl
from jax.experimental.pallas import tpu as pltpu

EPS = 1e-5


def _dot(a, b):
    return jnp.dot(a, b, preferred_element_type=jnp.float32)


# ----------------------------- in-kernel helpers ----------------------------

def _bn_tanh(a, fold, bcast, gamma_b, beta_b):
    """Training-mode BatchNorm2d (batch stats, biased var, eps=1e-5) + tanh on a
    channel-blocked slab a[(b,h), c*wblk + w].  fold (cols, n_chan), bcast
    (n_chan, cols), gamma_b/beta_b (1, cols) are host-precomputed."""
    n_chan = fold.shape[1]
    wblk = a.shape[1] // n_chan
    inv_n = 1.0 / float(a.shape[0] * wblk)                      # 1 / (B*H*W)
    mean_c = _dot(jnp.sum(a, axis=0, keepdims=True), fold) * inv_n   # (1, nc)
    xc = a - _dot(mean_c, bcast)                                # centered
    var_c = _dot(jnp.sum(xc * xc, axis=0, keepdims=True), fold) * inv_n
    scale_b = gamma_b * jax.lax.rsqrt(_dot(var_c, bcast) + EPS)
    return jnp.tanh(xc * scale_b + beta_b)


def _maxpool2x2(a, sel_he, sel_ho, sel_w):
    """2x2 max pool on a channel-blocked slab (rows=(b,h), cols=c*wblk+w).
    Height: two tiny 0/1 row-selection matmuls + element-wise max.
    Width: shift columns left by one + max, then ONE even-column selection
    matmul (halves the big pool matmul and its mask)."""
    hp = jnp.maximum(_dot(sel_he, a), _dot(sel_ho, a))          # (rows/2, cols)
    # column c of `shifted` holds column c+1; the circular wrap only ever lands
    # in odd in-block positions which sel_w discards, so it is exact.
    shifted = jnp.concatenate([hp[:, 1:], hp[:, :1]], axis=1)
    return _dot(jnp.maximum(hp, shifted), sel_w)                # (rows/2, cols/2)


# ------------------------------ fused kernel --------------------------------

def _fused_forward_kernel(
        x_ref,
        w1_ref, sd1_ref, su1_ref, fold1_ref, bcast1_ref, gb1_ref, bb1_ref,
        ph1e_ref, ph1o_ref, pw1_ref,
        w2_ref, sd2_ref, su2_ref, fold2_ref, bcast2_ref, gb2_ref, bb2_ref,
        ph2e_ref, ph2o_ref, pw2_ref,
        wcat_ref, mfc_ref, ffold_ref, selb_ref, bfc1_ref, wfc2_ref, bfc2_ref,
        o_ref):
    # x:  (B*H, Cin*W) slab, cols = c*W + w (no padding; padding is folded into
    #     the banded Toeplitz weights (w) and the 0/1 row-shift matrices (h)).
    x = x_ref[...]

    # ---- conv1 (3x3, pad=1): 3 batch-fused Toeplitz matmuls, BN + tanh, pool --
    a1 = _dot(x, w1_ref[1])
    a1 += _dot(_dot(sd1_ref[...], x), w1_ref[0])      # kh=0 tap (rows shifted down)
    a1 += _dot(_dot(su1_ref[...], x), w1_ref[2])      # kh=2 tap (rows shifted up)
    a1 = _bn_tanh(a1, fold1_ref[...], bcast1_ref[...], gb1_ref[...], bb1_ref[...])
    p1 = _maxpool2x2(a1, ph1e_ref[...], ph1o_ref[...], pw1_ref[...])  # (B*H/2, c1*W/2)

    # ---- conv2 on the pooled slab (same banded-matmul scheme) -----------------
    a2 = _dot(p1, w2_ref[1])
    a2 += _dot(_dot(sd2_ref[...], p1), w2_ref[0])
    a2 += _dot(_dot(su2_ref[...], p1), w2_ref[2])
    a2 = _bn_tanh(a2, fold2_ref[...], bcast2_ref[...], gb2_ref[...], bb2_ref[...])
    p2 = _maxpool2x2(a2, ph2e_ref[...], ph2o_ref[...], pw2_ref[...])  # (B*H3, c2*W3)

    # ---- fc1 + tanh: PyTorch channel-major flatten folded into wcat/mfc/ffold --
    y = _dot(p2, wcat_ref[...])                       # (B*H3, H3*n_hid)
    t = _dot(y * mfc_ref[...], ffold_ref[...])        # (B*H3, n_hid) per-row h-block
    z1 = jnp.tanh(_dot(selb_ref[...], t) + bfc1_ref[...])    # (B, n_hid)
    # ---- fc2 + tanh ------------------------------------------------------------
    o_ref[...] = jnp.tanh(_dot(z1, wfc2_ref[...]) + bfc2_ref[...])


# ----------------------- host-side one-time packing --------------------------

def _toeplitz_conv_weight(w_oihw, width):
    """PyTorch OIHW 3x3 conv weight -> 3 banded matrices (kh, Cin*W, Cout*W).
    Row = c*W + w_in, col = o*W + w_out; the band encodes the kw taps and the
    zero padding along w."""
    co, ci = w_oihw.shape[0], w_oihw.shape[1]
    band = jnp.stack([jnp.eye(width, width, 1 - kw, dtype=jnp.float32)
                      for kw in range(3)])                     # (3, W, W)
    m = jnp.einsum("kpq,ochk->hcpoq", band, w_oihw.astype(jnp.float32))
    return m.reshape(3, ci * width, co * width)


def _shift_mats(batch, h):
    """0/1 row-shift matrices for a (batch*h, :) slab: `down` maps row r -> row
    r-1 within the same batch image (zero otherwise), `up` maps r -> r+1."""
    rows = batch * h
    r = np.arange(rows)
    down = ((r[:, None] - 1 == r[None, :]) &
            ((r % h) != 0)[:, None]).astype(np.float32)
    up = ((r[:, None] + 1 == r[None, :]) &
          ((r % h) != h - 1)[:, None]).astype(np.float32)
    return down, up


def _fold_bcast(n_chan, wblk):
    """Channel fold (cols, n_chan) and broadcast (n_chan, cols) matrices."""
    cols = n_chan * wblk
    c = np.arange(cols)
    fold = (c[:, None] // wblk == np.arange(n_chan)[None, :]).astype(np.float32)
    return fold, np.ascontiguousarray(fold.T)


def _pool_masks(rows, n_chan, wblk):
    """Even/odd row selectors (rows/2, rows) and even-column selector
    (cols, cols/2) for a 2x2 max pool on a channel-blocked slab."""
    ro, wo = rows // 2, wblk // 2
    cols, co = n_chan * wblk, n_chan * wo
    i = np.arange(ro)[:, None]
    rr = np.arange(rows)[None, :]
    sel_he = (rr == 2 * i).astype(np.float32)
    sel_ho = (rr == 2 * i + 1).astype(np.float32)
    j = np.arange(co)[None, :]
    c = np.arange(cols)[:, None]
    src = (j // wo) * wblk + 2 * (j % wo)
    sel_w = (c == src).astype(np.float32)
    return sel_he, sel_ho, sel_w


def prepare_params(params, batch_size, height, width):
    """One-time packing of PyTorch-layout parameters plus all 0/1 geometry
    matrices into kernel layouts.  (Conv biases are omitted: they cancel
    exactly under batch-stat BatchNorm.)"""
    f32 = jnp.float32
    B, H, W = batch_size, height, width
    H2, W2 = H // 2, W // 2
    H3, W3 = H2 // 2, W2 // 2
    c1 = params["conv1_w"].shape[0]
    c2 = params["conv2_w"].shape[0]
    n_hid = params["fc1_w"].shape[0]

    prep = {}
    # conv weights -> banded Toeplitz matrices (kw taps + w zero-padding folded in)
    prep["w1t"] = _toeplitz_conv_weight(params["conv1_w"], W)     # (3, 3W,  c1*W)
    prep["w2t"] = _toeplitz_conv_weight(params["conv2_w"], W2)    # (3, c1*W2, c2*W2)
    # h zero-padding -> tiny 0/1 row-shift matrices
    prep["sd1"], prep["su1"] = _shift_mats(B, H)                  # (B*H, B*H)
    prep["sd2"], prep["su2"] = _shift_mats(B, H2)                 # (B*H2, B*H2)
    # BatchNorm channel fold/broadcast + lane-broadcast affine params
    prep["fold1"], prep["bcast1"] = _fold_bcast(c1, W)
    prep["fold2"], prep["bcast2"] = _fold_bcast(c2, W2)
    prep["gb1"] = jnp.repeat(params["bn1_gamma"].astype(f32), W).reshape(1, c1 * W)
    prep["bb1"] = jnp.repeat(params["bn1_beta"].astype(f32), W).reshape(1, c1 * W)
    prep["gb2"] = jnp.repeat(params["bn2_gamma"].astype(f32), W2).reshape(1, c2 * W2)
    prep["bb2"] = jnp.repeat(params["bn2_beta"].astype(f32), W2).reshape(1, c2 * W2)
    # 2x2 max-pool selectors
    prep["ph1e"], prep["ph1o"], prep["pw1"] = _pool_masks(B * H, c1, W)
    prep["ph2e"], prep["ph2o"], prep["pw2"] = _pool_masks(B * H2, c2, W2)
    # fc1: fold PyTorch's channel-major flatten (view(-1, c2*H3*W3)) into the
    # packed weight + masks (feature f = c*H3*W3 + h*W3 + w).
    wfc1 = (params["fc1_w"].astype(f32).T          # (c2*H3*W3, n_hid)
            .reshape(c2, H3, W3, n_hid)            # [c, h, w, n]
            .transpose(1, 0, 2, 3)                 # [h, c, w, n]
            .reshape(H3, c2 * W3, n_hid))          # (H3, c2*W3, n_hid)
    prep["wcat"] = wfc1.transpose(1, 0, 2).reshape(c2 * W3, H3 * n_hid)  # (64, H3*n)
    r = np.arange(B * H3)
    cidx = np.arange(H3 * n_hid)
    prep["mfc"] = (cidx[None, :] // n_hid == (r % H3)[:, None]).astype(np.float32)
    prep["ffold"] = np.tile(np.eye(n_hid, dtype=np.float32), (H3, 1))    # (H3*n, n)
    prep["selb"] = ((r[None, :] // H3) ==
                    np.arange(B)[:, None]).astype(np.float32)            # (B, B*H3)
    prep["bfc1"] = params["fc1_b"].reshape(1, n_hid).astype(f32)
    prep["wfc2"] = params["fc2_w"].T.astype(f32)                         # (n_hid, 2)
    prep["bfc2"] = params["fc2_b"].reshape(1, -1).astype(f32)
    return prep


# ------------------------------- forward -------------------------------------

_ARG_ORDER = (
    "w1t", "sd1", "su1", "fold1", "bcast1", "gb1", "bb1", "ph1e", "ph1o", "pw1",
    "w2t", "sd2", "su2", "fold2", "bcast2", "gb2", "bb2", "ph2e", "ph2o", "pw2",
    "wcat", "mfc", "ffold", "selb", "bfc1", "wfc2", "bfc2",
)


def forward_prepared(prep, x_nchw):
    """Forward pass given prepared (packed) parameters; x is NCHW like PyTorch."""
    x = x_nchw.astype(jnp.float32)
    B, cin, H, W = x.shape
    # rows = (b, h), cols = c*W + w (lane-dense slab; no host-side padding).
    x_slab = jnp.transpose(x, (0, 2, 1, 3)).reshape(B * H, cin * W)
    args = (x_slab,) + tuple(prep[k] for k in _ARG_ORDER)
    vmem = pl.BlockSpec(memory_space=pltpu.MemorySpace.VMEM)
    n_out = prep["wfc2"].shape[1]
    return pl.pallas_call(
        _fused_forward_kernel,
        out_shape=jax.ShapeDtypeStruct((B, n_out), jnp.float32),
        in_specs=[vmem] * len(args),
        out_specs=vmem,
    )(*args)


def net_batchnorm_forward(params, x_nchw):
    """Convenience wrapper: pack params (one-time) + run the fused kernel."""
    B, _, H, W = x_nchw.shape
    return forward_prepared(prepare_params(params, B, H, W), x_nchw)


# --------------------------- pure-JAX reference ------------------------------

def reference_forward(params, x):
    """Pure-JAX reference of the PyTorch forward (training-mode BatchNorm)."""
    f32 = jnp.float32
    x = x.astype(f32)
    hi = jax.lax.Precision.HIGHEST

    def conv(x, w, b):
        y = jax.lax.conv_general_dilated(
            x, w.astype(f32), window_strides=(1, 1), padding=((1, 1), (1, 1)),
            dimension_numbers=("NCHW", "OIHW", "NCHW"), precision=hi)
        return y + b.astype(f32)[None, :, None, None]

    def bn(x, gamma, beta):
        mean = jnp.mean(x, axis=(0, 2, 3), keepdims=True)
        var = jnp.mean((x - mean) ** 2, axis=(0, 2, 3), keepdims=True)
        xhat = (x - mean) * jax.lax.rsqrt(var + EPS)
        return gamma[None, :, None, None] * xhat + beta[None, :, None, None]

    def pool(x):
        b, c, h, w = x.shape
        return jnp.max(x.reshape(b, c, h // 2, 2, w // 2, 2), axis=(3, 5))

    h = pool(jnp.tanh(bn(conv(x, params["conv1_w"], params["conv1_b"]),
                         params["bn1_gamma"], params["bn1_beta"])))
    h = pool(jnp.tanh(bn(conv(h, params["conv2_w"], params["conv2_b"]),
                         params["bn2_gamma"], params["bn2_beta"])))
    h = h.reshape(h.shape[0], -1)
    h = jnp.tanh(jnp.dot(h, params["fc1_w"].T, precision=hi) + params["fc1_b"])
    return jnp.tanh(jnp.dot(h, params["fc2_w"].T, precision=hi) + params["fc2_b"])


# --------------------------------- params ------------------------------------

def init_params(key, n_chan1=16):
    """Parameters in PyTorch layouts: conv OIHW, linear (out, in)."""
    ks = jax.random.split(key, 12)
    c2 = n_chan1 // 2
    return {
        "conv1_w": 0.1 * jax.random.normal(ks[0], (n_chan1, 3, 3, 3), jnp.float32),
        "conv1_b": 0.1 * jax.random.normal(ks[1], (n_chan1,), jnp.float32),
        "bn1_gamma": 1.0 + 0.1 * jax.random.normal(ks[2], (n_chan1,), jnp.float32),
        "bn1_beta": 0.1 * jax.random.normal(ks[3], (n_chan1,), jnp.float32),
        "conv2_w": 0.1 * jax.random.normal(ks[4], (c2, n_chan1, 3, 3), jnp.float32),
        "conv2_b": 0.1 * jax.random.normal(ks[5], (c2,), jnp.float32),
        "bn2_gamma": 1.0 + 0.1 * jax.random.normal(ks[6], (c2,), jnp.float32),
        "bn2_beta": 0.1 * jax.random.normal(ks[7], (c2,), jnp.float32),
        "fc1_w": 0.05 * jax.random.normal(ks[8], (32, c2 * 8 * 8), jnp.float32),
        "fc1_b": 0.05 * jax.random.normal(ks[9], (32,), jnp.float32),
        "fc2_w": 0.3 * jax.random.normal(ks[10], (2, 32), jnp.float32),
        "fc2_b": 0.05 * jax.random.normal(ks[11], (2,), jnp.float32),
    }


if __name__ == "__main__":
    key = jax.random.PRNGKey(0)
    k_x, k_p = jax.random.split(key)
    # fc1 expects (n_chan1//2)*8*8 features => 32x32 spatial, 3-channel NCHW input
    x = jax.random.normal(k_x, (2, 3, 32, 32), jnp.float32)
    params = init_params(k_p, n_chan1=16)

    prep = prepare_params(params, batch_size=2, height=32, width=32)  # one-time
    fwd = jax.jit(forward_prepared)
    y = fwd(prep, x)
    jax.block_until_ready(y)

    assert y.shape == (2, 2), y.shape
    assert bool(jnp.all(jnp.isfinite(y)))

    # numeric check against the pure-JAX reference of the PyTorch forward
    # (tolerance leaves headroom for MXU f32 emulation / reduction order).
    y_ref = reference_forward(params, x)
    np.testing.assert_allclose(np.asarray(y), np.asarray(y_ref), atol=3e-2, rtol=0)

    print("KERNEL_OK")
</pallas_src>

<mosaic_0001>
module attributes {stable_mosaic.version = 11 : i64} {
  func.func @_fused_forward_kernel(%arg0: memref<64x96xf32, #tpu.memory_space<vmem>>, %arg1: memref<3x96x512xf32, #tpu.memory_space<vmem>>, %arg2: memref<64x64xf32, #tpu.memory_space<vmem>>, %arg3: memref<64x64xf32, #tpu.memory_space<vmem>>, %arg4: memref<512x16xf32, #tpu.memory_space<vmem>>, %arg5: memref<16x512xf32, #tpu.memory_space<vmem>>, %arg6: memref<1x512xf32, #tpu.memory_space<vmem>>, %arg7: memref<1x512xf32, #tpu.memory_space<vmem>>, %arg8: memref<32x64xf32, #tpu.memory_space<vmem>>, %arg9: memref<32x64xf32, #tpu.memory_space<vmem>>, %arg10: memref<512x256xf32, #tpu.memory_space<vmem>>, %arg11: memref<3x256x128xf32, #tpu.memory_space<vmem>>, %arg12: memref<32x32xf32, #tpu.memory_space<vmem>>, %arg13: memref<32x32xf32, #tpu.memory_space<vmem>>, %arg14: memref<128x8xf32, #tpu.memory_space<vmem>>, %arg15: memref<8x128xf32, #tpu.memory_space<vmem>>, %arg16: memref<1x128xf32, #tpu.memory_space<vmem>>, %arg17: memref<1x128xf32, #tpu.memory_space<vmem>>, %arg18: memref<16x32xf32, #tpu.memory_space<vmem>>, %arg19: memref<16x32xf32, #tpu.memory_space<vmem>>, %arg20: memref<128x64xf32, #tpu.memory_space<vmem>>, %arg21: memref<64x256xf32, #tpu.memory_space<vmem>>, %arg22: memref<16x256xf32, #tpu.memory_space<vmem>>, %arg23: memref<256x32xf32, #tpu.memory_space<vmem>>, %arg24: memref<2x16xf32, #tpu.memory_space<vmem>>, %arg25: memref<1x32xf32, #tpu.memory_space<vmem>>, %arg26: memref<32x2xf32, #tpu.memory_space<vmem>>, %arg27: memref<1x2xf32, #tpu.memory_space<vmem>>, %arg28: memref<2x2xf32, #tpu.memory_space<vmem>>) attributes {dimension_semantics = [], scalar_prefetch = 0 : i64, scratch_operands = 0 : i64, tpu.core_type = #tpu.core_type<tc>} {
    %c0 = arith.constant 0 : index
    %c0_0 = arith.constant 0 : index
    %0 = vector.load %arg0[%c0, %c0_0] : memref<64x96xf32, #tpu.memory_space<vmem>>, vector<64x96xf32>
    %c1 = arith.constant 1 : index
    %c0_1 = arith.constant 0 : index
    %c0_2 = arith.constant 0 : index
    %1 = vector.load %arg1[%c1, %c0_1, %c0_2] : memref<3x96x512xf32, #tpu.memory_space<vmem>>, vector<1x96x512xf32>
    %2 = vector.shape_cast %1 : vector<1x96x512xf32> to vector<96x512xf32>
    %cst = arith.constant dense<0.000000e+00> : vector<64x512xf32>
    %3 = tpu.matmul %0, %2, %cst {dimension_numbers = #tpu.dot_dimension_numbers<[1], [0], [0], [1], [0, 0, 1, 1], [], []>} : vector<64x96xf32>, vector<96x512xf32>, vector<64x512xf32> -> vector<64x512xf32>
    %c0_3 = arith.constant 0 : index
    %c0_4 = arith.constant 0 : index
    %4 = vector.load %arg2[%c0_3, %c0_4] : memref<64x64xf32, #tpu.memory_space<vmem>>, vector<64x64xf32>
    %cst_5 = arith.constant dense<0.000000e+00> : vector<64x96xf32>
    %5 = tpu.matmul %4, %0, %cst_5 {dimension_numbers = #tpu.dot_dimension_numbers<[1], [0], [0], [1], [0, 0, 1, 1], [], []>} : vector<64x64xf32>, vector<64x96xf32>, vector<64x96xf32> -> vector<64x96xf32>
    %c0_6 = arith.constant 0 : index
    %c0_7 = arith.constant 0 : index
    %c0_8 = arith.constant 0 : index
    %6 = vector.load %arg1[%c0_6, %c0_7, %c0_8] : memref<3x96x512xf32, #tpu.memory_space<vmem>>, vector<1x96x512xf32>
    %7 = vector.shape_cast %6 : vector<1x96x512xf32> to vector<96x512xf32>
    %cst_9 = arith.constant dense<0.000000e+00> : vector<64x512xf32>
    %8 = tpu.matmul %5, %7, %cst_9 {dimension_numbers = #tpu.dot_dimension_numbers<[1], [0], [0], [1], [0, 0, 1, 1], [], []>} : vector<64x96xf32>, vector<96x512xf32>, vector<64x512xf32> -> vector<64x512xf32>
    %9 = arith.addf %3, %8 : vector<64x512xf32>
    %c0_10 = arith.constant 0 : index
    %c0_11 = arith.constant 0 : index
    %10 = vector.load %arg3[%c0_10, %c0_11] : memref<64x64xf32, #tpu.memory_space<vmem>>, vector<64x64xf32>
    %cst_12 = arith.constant dense<0.000000e+00> : vector<64x96xf32>
    %11 = tpu.matmul %10, %0, %cst_12 {dimension_numbers = #tpu.dot_dimension_numbers<[1], [0], [0], [1], [0, 0, 1, 1], [], []>} : vector<64x64xf32>, vector<64x96xf32>, vector<64x96xf32> -> vector<64x96xf32>
    %c2 = arith.constant 2 : index
    %c0_13 = arith.constant 0 : index
    %c0_14 = arith.constant 0 : index
    %12 = vector.load %arg1[%c2, %c0_13, %c0_14] : memref<3x96x512xf32, #tpu.memory_space<vmem>>, vector<1x96x512xf32>
    %13 = vector.shape_cast %12 : vector<1x96x512xf32> to vector<96x512xf32>
    %cst_15 = arith.constant dense<0.000000e+00> : vector<64x512xf32>
    %14 = tpu.matmul %11, %13, %cst_15 {dimension_numbers = #tpu.dot_dimension_numbers<[1], [0], [0], [1], [0, 0, 1, 1], [], []>} : vector<64x96xf32>, vector<96x512xf32>, vector<64x512xf32> -> vector<64x512xf32>
    %15 = arith.addf %9, %14 : vector<64x512xf32>
    %c0_16 = arith.constant 0 : index
    %c0_17 = arith.constant 0 : index
    %16 = vector.load %arg4[%c0_16, %c0_17] : memref<512x16xf32, #tpu.memory_space<vmem>>, vector<512x16xf32>
    %c0_18 = arith.constant 0 : index
    %c0_19 = arith.constant 0 : index
    %17 = vector.load %arg5[%c0_18, %c0_19] : memref<16x512xf32, #tpu.memory_space<vmem>>, vector<16x512xf32>
    %c0_20 = arith.constant 0 : index
    %c0_21 = arith.constant 0 : index
    %18 = vector.load %arg6[%c0_20, %c0_21] : memref<1x512xf32, #tpu.memory_space<vmem>>, vector<1x512xf32>
    %c0_22 = arith.constant 0 : index
    %c0_23 = arith.constant 0 : index
    %19 = vector.load %arg7[%c0_22, %c0_23] : memref<1x512xf32, #tpu.memory_space<vmem>>, vector<1x512xf32>
    %cst_24 = arith.constant dense<0.000000e+00> : vector<512xf32>
    %20 = vector.multi_reduction <add>, %15, %cst_24 [0] : vector<64x512xf32> to vector<512xf32>
    %21 = vector.shape_cast %20 : vector<512xf32> to vector<1x512xf32>
    %cst_25 = arith.constant dense<0.000000e+00> : vector<1x16xf32>
    %22 = tpu.matmul %21, %16, %cst_25 {dimension_numbers = #tpu.dot_dimension_numbers<[1], [0], [0], [1], [0, 0, 1, 1], [], []>} : vector<1x512xf32>, vector<512x16xf32>, vector<1x16xf32> -> vector<1x16xf32>
    %cst_26 = arith.constant 4.8828125E-4 : f32
    %23 = vector.broadcast %cst_26 : f32 to vector<1x16xf32>
    %24 = arith.mulf %22, %23 : vector<1x16xf32>
    %cst_27 = arith.constant dense<0.000000e+00> : vector<1x512xf32>
    %25 = tpu.matmul %24, %17, %cst_27 {dimension_numbers = #tpu.dot_dimension_numbers<[1], [0], [0], [1], [0, 0, 1, 1], [], []>} : vector<1x16xf32>, vector<16x512xf32>, vector<1x512xf32> -> vector<1x512xf32>
    %26 = vector.broadcast %25 : vector<1x512xf32> to vector<64x512xf32>
    %27 = arith.subf %15, %26 : vector<64x512xf32>
    %28 = arith.mulf %27, %27 : vector<64x512xf32>
    %cst_28 = arith.constant dense<0.000000e+00> : vector<512xf32>
    %29 = vector.multi_reduction <add>, %28, %cst_28 [0] : vector<64x512xf32> to vector<512xf32>
    %30 = vector.shape_cast %29 : vector<512xf32> to vector<1x512xf32>
    %cst_29 = arith.constant dense<0.000000e+00> : vector<1x16xf32>
    %31 = tpu.matmul %30, %16, %cst_29 {dimension_numbers = #tpu.dot_dimension_numbers<[1], [0], [0], [1], [0, 0, 1, 1], [], []>} : vector<1x512xf32>, vector<512x16xf32>, vector<1x16xf32> -> vector<1x16xf32>
    %cst_30 = arith.constant 4.8828125E-4 : f32
    %32 = vector.broadcast %cst_30 : f32 to vector<1x16xf32>
    %33 = arith.mulf %31, %32 : vector<1x16xf32>
    %cst_31 = arith.constant dense<0.000000e+00> : vector<1x512xf32>
    %34 = tpu.matmul %33, %17, %cst_31 {dimension_numbers = #tpu.dot_dimension_numbers<[1], [0], [0], [1], [0, 0, 1, 1], [], []>} : vector<1x16xf32>, vector<16x512xf32>, vector<1x512xf32> -> vector<1x512xf32>
    %cst_32 = arith.constant 9.99999974E-6 : f32
    %35 = vector.broadcast %cst_32 : f32 to vector<1x512xf32>
    %36 = arith.addf %34, %35 : vector<1x512xf32>
    %37 = math.rsqrt %36 : vector<1x512xf32>
    %38 = arith.mulf %18, %37 : vector<1x512xf32>
    %39 = vector.broadcast %38 : vector<1x512xf32> to vector<64x512xf32>
    %40 = arith.mulf %27, %39 : vector<64x512xf32>
    %41 = vector.broadcast %19 : vector<1x512xf32> to vector<64x512xf32>
    %42 = arith.addf %40, %41 : vector<64x512xf32>
    %43 = math.tanh %42 : vector<64x512xf32>
    %c0_33 = arith.constant 0 : index
    %c0_34 = arith.constant 0 : index
    %44 = vector.load %arg8[%c0_33, %c0_34] : memref<32x64xf32, #tpu.memory_space<vmem>>, vector<32x64xf32>
    %c0_35 = arith.constant 0 : index
    %c0_36 = arith.constant 0 : index
    %45 = vector.load %arg9[%c0_35, %c0_36] : memref<32x64xf32, #tpu.memory_space<vmem>>, vector<32x64xf32>
    %c0_37 = arith.constant 0 : index
    %c0_38 = arith.constant 0 : index
    %46 = vector.load %arg10[%c0_37, %c0_38] : memref<512x256xf32, #tpu.memory_space<vmem>>, vector<512x256xf32>
    %cst_39 = arith.constant dense<0.000000e+00> : vector<32x512xf32>
    %47 = tpu.matmul %44, %43, %cst_39 {dimension_numbers = #tpu.dot_dimension_numbers<[1], [0], [0], [1], [0, 0, 1, 1], [], []>} : vector<32x64xf32>, vector<64x512xf32>, vector<32x512xf32> -> vector<32x512xf32>
    %cst_40 = arith.constant dense<0.000000e+00> : vector<32x512xf32>
    %48 = tpu.matmul %45, %43, %cst_40 {dimension_numbers = #tpu.dot_dimension_numbers<[1], [0], [0], [1], [0, 0, 1, 1], [], []>} : vector<32x64xf32>, vector<64x512xf32>, vector<32x512xf32> -> vector<32x512xf32>
    %49 = arith.maximumf %47, %48 : vector<32x512xf32>
    %50 = vector.extract_strided_slice %49 {offsets = [0, 1], sizes = [32, 511], strides = [1, 1]} : vector<32x512xf32> to vector<32x511xf32>
    %51 = vector.extract_strided_slice %49 {offsets = [0, 0], sizes = [32, 1], strides = [1, 1]} : vector<32x512xf32> to vector<32x1xf32>
    %52 = tpu.concatenate %50, %51 in 1 : vector<32x511xf32>, vector<32x1xf32> -> vector<32x512xf32>
    %53 = arith.maximumf %49, %52 : vector<32x512xf32>
    %cst_41 = arith.constant dense<0.000000e+00> : vector<32x256xf32>
    %54 = tpu.matmul %53, %46, %cst_41 {dimension_numbers = #tpu.dot_dimension_numbers<[1], [0], [0], [1], [0, 0, 1, 1], [], []>} : vector<32x512xf32>, vector<512x256xf32>, vector<32x256xf32> -> vector<32x256xf32>
    %c1_42 = arith.constant 1 : index
    %c0_43 = arith.constant 0 : index
    %c0_44 = arith.constant 0 : index
    %55 = vector.load %arg11[%c1_42, %c0_43, %c0_44] : memref<3x256x128xf32, #tpu.memory_space<vmem>>, vector<1x256x128xf32>
    %56 = vector.shape_cast %55 : vector<1x256x128xf32> to vector<256x128xf32>
    %cst_45 = arith.constant dense<0.000000e+00> : vector<32x128xf32>
    %57 = tpu.matmul %54, %56, %cst_45 {dimension_numbers = #tpu.dot_dimension_numbers<[1], [0], [0], [1], [0, 0, 1, 1], [], []>} : vector<32x256xf32>, vector<256x128xf32>, vector<32x128xf32> -> vector<32x128xf32>
    %c0_46 = arith.constant 0 : index
    %c0_47 = arith.constant 0 : index
    %58 = vector.load %arg12[%c0_46, %c0_47] : memref<32x32xf32, #tpu.memory_space<vmem>>, vector<32x32xf32>
    %cst_48 = arith.constant dense<0.000000e+00> : vector<32x256xf32>
    %59 = tpu.matmul %58, %54, %cst_48 {dimension_numbers = #tpu.dot_dimension_numbers<[1], [0], [0], [1], [0, 0, 1, 1], [], []>} : vector<32x32xf32>, vector<32x256xf32>, vector<32x256xf32> -> vector<32x256xf32>
    %c0_49 = arith.constant 0 : index
    %c0_50 = arith.constant 0 : index
    %c0_51 = arith.constant 0 : index
    %60 = vector.load %arg11[%c0_49, %c0_50, %c0_51] : memref<3x256x128xf32, #tpu.memory_space<vmem>>, vector<1x256x128xf32>
    %61 = vector.shape_cast %60 : vector<1x256x128xf32> to vector<256x128xf32>
    %cst_52 = arith.constant dense<0.000000e+00> : vector<32x128xf32>
    %62 = tpu.matmul %59, %61, %cst_52 {dimension_numbers = #tpu.dot_dimension_numbers<[1], [0], [0], [1], [0, 0, 1, 1], [], []>} : vector<32x256xf32>, vector<256x128xf32>, vector<32x128xf32> -> vector<32x128xf32>
    %63 = arith.addf %57, %62 : vector<32x128xf32>
    %c0_53 = arith.constant 0 : index
    %c0_54 = arith.constant 0 : index
    %64 = vector.load %arg13[%c0_53, %c0_54] : memref<32x32xf32, #tpu.memory_space<vmem>>, vector<32x32xf32>
    %cst_55 = arith.constant dense<0.000000e+00> : vector<32x256xf32>
    %65 = tpu.matmul %64, %54, %cst_55 {dimension_numbers = #tpu.dot_dimension_numbers<[1], [0], [0], [1], [0, 0, 1, 1], [], []>} : vector<32x32xf32>, vector<32x256xf32>, vector<32x256xf32> -> vector<32x256xf32>
    %c2_56 = arith.constant 2 : index
    %c0_57 = arith.constant 0 : index
    %c0_58 = arith.constant 0 : index
    %66 = vector.load %arg11[%c2_56, %c0_57, %c0_58] : memref<3x256x128xf32, #tpu.memory_space<vmem>>, vector<1x256x128xf32>
    %67 = vector.shape_cast %66 : vector<1x256x128xf32> to vector<256x128xf32>
    %cst_59 = arith.constant dense<0.000000e+00> : vector<32x128xf32>
    %68 = tpu.matmul %65, %67, %cst_59 {dimension_numbers = #tpu.dot_dimension_numbers<[1], [0], [0], [1], [0, 0, 1, 1], [], []>} : vector<32x256xf32>, vector<256x128xf32>, vector<32x128xf32> -> vector<32x128xf32>
    %69 = arith.addf %63, %68 : vector<32x128xf32>
    %c0_60 = arith.constant 0 : index
    %c0_61 = arith.constant 0 : index
    %70 = vector.load %arg14[%c0_60, %c0_61] : memref<128x8xf32, #tpu.memory_space<vmem>>, vector<128x8xf32>
    %c0_62 = arith.constant 0 : index
    %c0_63 = arith.constant 0 : index
    %71 = vector.load %arg15[%c0_62, %c0_63] : memref<8x128xf32, #tpu.memory_space<vmem>>, vector<8x128xf32>
    %c0_64 = arith.constant 0 : index
    %c0_65 = arith.constant 0 : index
    %72 = vector.load %arg16[%c0_64, %c0_65] : memref<1x128xf32, #tpu.memory_space<vmem>>, vector<1x128xf32>
    %c0_66 = arith.constant 0 : index
    %c0_67 = arith.constant 0 : index
    %73 = vector.load %arg17[%c0_66, %c0_67] : memref<1x128xf32, #tpu.memory_space<vmem>>, vector<1x128xf32>
    %cst_68 = arith.constant dense<0.000000e+00> : vector<128xf32>
    %74 = vector.multi_reduction <add>, %69, %cst_68 [0] : vector<32x128xf32> to vector<128xf32>
    %75 = vector.shape_cast %74 : vector<128xf32> to vector<1x128xf32>
    %cst_69 = arith.constant dense<0.000000e+00> : vector<1x8xf32>
    %76 = tpu.matmul %75, %70, %cst_69 {dimension_numbers = #tpu.dot_dimension_numbers<[1], [0], [0], [1], [0, 0, 1, 1], [], []>} : vector<1x128xf32>, vector<128x8xf32>, vector<1x8xf32> -> vector<1x8xf32>
    %cst_70 = arith.constant 0.001953125 : f32
    %77 = vector.broadcast %cst_70 : f32 to vector<1x8xf32>
    %78 = arith.mulf %76, %77 : vector<1x8xf32>
    %cst_71 = arith.constant dense<0.000000e+00> : vector<1x128xf32>
    %79 = tpu.matmul %78, %71, %cst_71 {dimension_numbers = #tpu.dot_dimension_numbers<[1], [0], [0], [1], [0, 0, 1, 1], [], []>} : vector<1x8xf32>, vector<8x128xf32>, vector<1x128xf32> -> vector<1x128xf32>
    %80 = vector.broadcast %79 : vector<1x128xf32> to vector<32x128xf32>
    %81 = arith.subf %69, %80 : vector<32x128xf32>
    %82 = arith.mulf %81, %81 : vector<32x128xf32>
    %cst_72 = arith.constant dense<0.000000e+00> : vector<128xf32>
    %83 = vector.multi_reduction <add>, %82, %cst_72 [0] : vector<32x128xf32> to vector<128xf32>
    %84 = vector.shape_cast %83 : vector<128xf32> to vector<1x128xf32>
    %cst_73 = arith.constant dense<0.000000e+00> : vector<1x8xf32>
    %85 = tpu.matmul %84, %70, %cst_73 {dimension_numbers = #tpu.dot_dimension_numbers<[1], [0], [0], [1], [0, 0, 1, 1], [], []>} : vector<1x128xf32>, vector<128x8xf32>, vector<1x8xf32> -> vector<1x8xf32>
    %cst_74 = arith.constant 0.001953125 : f32
    %86 = vector.broadcast %cst_74 : f32 to vector<1x8xf32>
    %87 = arith.mulf %85, %86 : vector<1x8xf32>
    %cst_75 = arith.constant dense<0.000000e+00> : vector<1x128xf32>
    %88 = tpu.matmul %87, %71, %cst_75 {dimension_numbers = #tpu.dot_dimension_numbers<[1], [0], [0], [1], [0, 0, 1, 1], [], []>} : vector<1x8xf32>, vector<8x128xf32>, vector<1x128xf32> -> vector<1x128xf32>
    %cst_76 = arith.constant 9.99999974E-6 : f32
    %89 = vector.broadcast %cst_76 : f32 to vector<1x128xf32>
    %90 = arith.addf %88, %89 : vector<1x128xf32>
    %91 = math.rsqrt %90 : vector<1x128xf32>
    %92 = arith.mulf %72, %91 : vector<1x128xf32>
    %93 = vector.broadcast %92 : vector<1x128xf32> to vector<32x128xf32>
    %94 = arith.mulf %81, %93 : vector<32x128xf32>
    %95 = vector.broadcast %73 : vector<1x128xf32> to vector<32x128xf32>
    %96 = arith.addf %94, %95 : vector<32x128xf32>
    %97 = math.tanh %96 : vector<32x128xf32>
    %c0_77 = arith.constant 0 : index
    %c0_78 = arith.constant 0 : index
    %98 = vector.load %arg18[%c0_77, %c0_78] : memref<16x32xf32, #tpu.memory_space<vmem>>, vector<16x32xf32>
    %c0_79 = arith.constant 0 : index
    %c0_80 = arith.constant 0 : index
    %99 = vector.load %arg19[%c0_79, %c0_80] : memref<16x32xf32, #tpu.memory_space<vmem>>, vector<16x32xf32>
    %c0_81 = arith.constant 0 : index
    %c0_82 = arith.constant 0 : index
    %100 = vector.load %arg20[%c0_81, %c0_82] : memref<128x64xf32, #tpu.memory_space<vmem>>, vector<128x64xf32>
    %cst_83 = arith.constant dense<0.000000e+00> : vector<16x128xf32>
    %101 = tpu.matmul %98, %97, %cst_83 {dimension_numbers = #tpu.dot_dimension_numbers<[1], [0], [0], [1], [0, 0, 1, 1], [], []>} : vector<16x32xf32>, vector<32x128xf32>, vector<16x128xf32> -> vector<16x128xf32>
    %cst_84 = arith.constant dense<0.000000e+00> : vector<16x128xf32>
    %102 = tpu.matmul %99, %97, %cst_84 {dimension_numbers = #tpu.dot_dimension_numbers<[1], [0], [0], [1], [0, 0, 1, 1], [], []>} : vector<16x32xf32>, vector<32x128xf32>, vector<16x128xf32> -> vector<16x128xf32>
    %103 = arith.maximumf %101, %102 : vector<16x128xf32>
    %104 = vector.extract_strided_slice %103 {offsets = [0, 1], sizes = [16, 127], strides = [1, 1]} : vector<16x128xf32> to vector<16x127xf32>
    %105 = vector.extract_strided_slice %103 {offsets = [0, 0], sizes = [16, 1], strides = [1, 1]} : vector<16x128xf32> to vector<16x1xf32>
    %106 = tpu.concatenate %104, %105 in 1 : vector<16x127xf32>, vector<16x1xf32> -> vector<16x128xf32>
    %107 = arith.maximumf %103, %106 : vector<16x128xf32>
    %cst_85 = arith.constant dense<0.000000e+00> : vector<16x64xf32>
    %108 = tpu.matmul %107, %100, %cst_85 {dimension_numbers = #tpu.dot_dimension_numbers<[1], [0], [0], [1], [0, 0, 1, 1], [], []>} : vector<16x128xf32>, vector<128x64xf32>, vector<16x64xf32> -> vector<16x64xf32>
    %c0_86 = arith.constant 0 : index
    %c0_87 = arith.constant 0 : index
    %109 = vector.load %arg21[%c0_86, %c0_87] : memref<64x256xf32, #tpu.memory_space<vmem>>, vector<64x256xf32>
    %cst_88 = arith.constant dense<0.000000e+00> : vector<16x256xf32>
    %110 = tpu.matmul %108, %109, %cst_88 {dimension_numbers = #tpu.dot_dimension_numbers<[1], [0], [0], [1], [0, 0, 1, 1], [], []>} : vector<16x64xf32>, vector<64x256xf32>, vector<16x256xf32> -> vector<16x256xf32>
    %c0_89 = arith.constant 0 : index
    %c0_90 = arith.constant 0 : index
    %111 = vector.load %arg22[%c0_89, %c0_90] : memref<16x256xf32, #tpu.memory_space<vmem>>, vector<16x256xf32>
    %112 = arith.mulf %110, %111 : vector<16x256xf32>
    %c0_91 = arith.constant 0 : index
    %c0_92 = arith.constant 0 : index
    %113 = vector.load %arg23[%c0_91, %c0_92] : memref<256x32xf32, #tpu.memory_space<vmem>>, vector<256x32xf32>
    %cst_93 = arith.constant dense<0.000000e+00> : vector<16x32xf32>
    %114 = tpu.matmul %112, %113, %cst_93 {dimension_numbers = #tpu.dot_dimension_numbers<[1], [0], [0], [1], [0, 0, 1, 1], [], []>} : vector<16x256xf32>, vector<256x32xf32>, vector<16x32xf32> -> vector<16x32xf32>
    %c0_94 = arith.constant 0 : index
    %c0_95 = arith.constant 0 : index
    %115 = vector.load %arg24[%c0_94, %c0_95] : memref<2x16xf32, #tpu.memory_space<vmem>>, vector<2x16xf32>
    %cst_96 = arith.constant dense<0.000000e+00> : vector<2x32xf32>
    %116 = tpu.matmul %115, %114, %cst_96 {dimension_numbers = #tpu.dot_dimension_numbers<[1], [0], [0], [1], [0, 0, 1, 1], [], []>} : vector<2x16xf32>, vector<16x32xf32>, vector<2x32xf32> -> vector<2x32xf32>
    %c0_97 = arith.constant 0 : index
    %c0_98 = arith.constant 0 : index
    %117 = vector.load %arg25[%c0_97, %c0_98] : memref<1x32xf32, #tpu.memory_space<vmem>>, vector<1x32xf32>
    %118 = vector.broadcast %117 : vector<1x32xf32> to vector<2x32xf32>
    %119 = arith.addf %116, %118 : vector<2x32xf32>
    %120 = math.tanh %119 : vector<2x32xf32>
    %c0_99 = arith.constant 0 : index
    %c0_100 = arith.constant 0 : index
    %121 = vector.load %arg26[%c0_99, %c0_100] : memref<32x2xf32, #tpu.memory_space<vmem>>, vector<32x2xf32>
    %cst_101 = arith.constant dense<0.000000e+00> : vector<2x2xf32>
    %122 = tpu.matmul %120, %121, %cst_101 {dimension_numbers = #tpu.dot_dimension_numbers<[1], [0], [0], [1], [0, 0, 1, 1], [], []>} : vector<2x32xf32>, vector<32x2xf32>, vector<2x2xf32> -> vector<2x2xf32>
    %c0_102 = arith.constant 0 : index
    %c0_103 = arith.constant 0 : index
    %123 = vector.load %arg27[%c0_102, %c0_103] : memref<1x2xf32, #tpu.memory_space<vmem>>, vector<1x2xf32>
    %124 = vector.broadcast %123 : vector<1x2xf32> to vector<2x2xf32>
    %125 = arith.addf %122, %124 : vector<2x2xf32>
    %126 = math.tanh %125 : vector<2x2xf32>
    %c0_104 = arith.constant 0 : index
    %c0_105 = arith.constant 0 : index
    %127 = vector.load %arg28[%c0_104, %c0_105] : memref<2x2xf32, #tpu.memory_space<vmem>>, vector<2x2xf32>
    tpu.vector_store %arg28[%c0_104, %c0_105], %126 {strides = array<i32>} : memref<2x2xf32, #tpu.memory_space<vmem>>, vector<2x2xf32>,
    return
  }
}

</mosaic_0001>

<llo_original>
// kernel: forward_prepared.1
$region0: #{forward_prepared.1}
  #allocation0 [shape = 'u32[]', space=smem, size = 0x4, offset = 0x4, fixed_abs, tag = 'smem constant byte address 0x4 - core index']
  #allocation1 [shape = 'u32[144,128]{1,0:T(1,128)}', space=vmem, size = 0x12000, scoped, tag = 'internal scratch']
  %s0 = inlined_call_operand.vmem [shape: f32[64,96], index: 0, kind: input, shape index: {}]
  %s1 = inlined_call_operand.vmem [shape: f32[3,96,512], index: 1, kind: input, shape index: {}]
  %s2 = inlined_call_operand.hbm [shape: f32[64,64], index: 2, kind: input, shape index: {}]
  %s3 = inlined_call_operand.hbm [shape: f32[64,64], index: 3, kind: input, shape index: {}]
  %s4 = inlined_call_operand.vmem [shape: f32[512,16], index: 4, kind: input, shape index: {}]
  %s5 = inlined_call_operand.hbm [shape: f32[16,512], index: 5, kind: input, shape index: {}]
  %s6 = inlined_call_operand.hbm [shape: f32[1,512], index: 6, kind: input, shape index: {}]
  %s7 = inlined_call_operand.hbm [shape: f32[1,512], index: 7, kind: input, shape index: {}]
  %s8 = inlined_call_operand.hbm [shape: f32[32,64], index: 8, kind: input, shape index: {}]
  %s9 = inlined_call_operand.hbm [shape: f32[32,64], index: 9, kind: input, shape index: {}]
  %s10 = inlined_call_operand.hbm [shape: f32[512,256], index: 10, kind: input, shape index: {}]
  %s11 = inlined_call_operand.vmem [shape: f32[3,256,128], index: 11, kind: input, shape index: {}]
  %s12 = inlined_call_operand.hbm [shape: f32[32,32], index: 12, kind: input, shape index: {}]
  %s13 = inlined_call_operand.hbm [shape: f32[32,32], index: 13, kind: input, shape index: {}]
  %s14 = inlined_call_operand.vmem [shape: f32[128,8], index: 14, kind: input, shape index: {}]
  %s15 = inlined_call_operand.hbm [shape: f32[8,128], index: 15, kind: input, shape index: {}]
  %s16 = inlined_call_operand.hbm [shape: f32[1,128], index: 16, kind: input, shape index: {}]
  %s17 = inlined_call_operand.hbm [shape: f32[1,128], index: 17, kind: input, shape index: {}]
  %s18 = inlined_call_operand.vmem [shape: f32[16,32], index: 18, kind: input, shape index: {}]
  %s19 = inlined_call_operand.hbm [shape: f32[16,32], index: 19, kind: input, shape index: {}]
  %s20 = inlined_call_operand.vmem [shape: f32[128,64], index: 20, kind: input, shape index: {}]
  %s21 = inlined_call_operand.hbm [shape: f32[64,256], index: 21, kind: input, shape index: {}]
  %s22 = inlined_call_operand.hbm [shape: f32[16,256], index: 22, kind: input, shape index: {}]
  %s23 = inlined_call_operand.vmem [shape: f32[256,32], index: 23, kind: input, shape index: {}]
  %s24 = inlined_call_operand.hbm [shape: f32[2,16], index: 24, kind: input, shape index: {}]
  %s25 = inlined_call_operand.hbm [shape: f32[1,32], index: 25, kind: input, shape index: {}]
  %s26 = inlined_call_operand.vmem [shape: f32[32,2], index: 26, kind: input, shape index: {}]
  %s27 = inlined_call_operand.hbm [shape: f32[1,2], index: 27, kind: input, shape index: {}]
  %s28 = inlined_call_operand.hbm [shape: f32[2,2], index: 28, kind: output, shape index: {}]
  %s29 = sld [smem:[#allocation0]]
  $region198: #{forward_prepared.1} parent=0
    _
  %s31 = ssub.s32 1, %s29
  %s32 = scalar_select 0, %s31, %s29
  $region1: #{forward_prepared.1} parent=0
    #allocation2 [shape = 'u8[32768]{0}', space=vmem, size = 0x8000, scoped, tag = 'input window, operand 2, single buffered']
    #allocation3 [shape = 's32[1]{0}', space=sflag, size = 0x4, scoped, tag = 'scoped memory for forward_prepared.1']
    #allocation4 [shape = 's32[1]{0}', space=sflag, size = 0x4, scoped, tag = 'scoped memory for forward_prepared.1']
    #allocation5 [shape = 'u8[32768]{0}', space=vmem, size = 0x8000, scoped, tag = 'input window, operand 3, single buffered']
    #allocation6 [shape = 's32[1]{0}', space=sflag, size = 0x4, scoped, tag = 'scoped memory for forward_prepared.1']
    #allocation7 [shape = 'u8[32768]{0}', space=vmem, size = 0x8000, scoped, tag = 'input window, operand 5, single buffered']
    #allocation8 [shape = 'u8[2048]{0}', space=vmem, size = 0x800, scoped, tag = 'input window, operand 6, single buffered']
    #allocation9 [shape = 's32[1]{0}', space=sflag, size = 0x4, scoped, tag = 'scoped memory for forward_prepared.1']
    #allocation10 [shape = 'u8[2048]{0}', space=vmem, size = 0x800, scoped, tag = 'input window, operand 7, single buffered']
    #allocation11 [shape = 'u8[16384]{0}', space=vmem, size = 0x4000, scoped, tag = 'input window, operand 8, single buffered']
    #allocation12 [shape = 's32[1]{0}', space=sflag, size = 0x4, scoped, tag = 'scoped memory for forward_prepared.1']
    #allocation13 [shape = 'u8[16384]{0}', space=vmem, size = 0x4000, scoped, tag = 'input window, operand 9, single buffered']
    #allocation14 [shape = 'u8[524288]{0}', space=vmem, size = 0x80000, scoped, tag = 'input window, operand 10, single buffered']
    #allocation15 [shape = 's32[1]{0}', space=sflag, size = 0x4, scoped, tag = 'scoped memory for forward_prepared.1']
    #allocation16 [shape = 'u8[16384]{0}', space=vmem, size = 0x4000, scoped, tag = 'input window, operand 12, single buffered']
    #allocation17 [shape = 'u8[16384]{0}', space=vmem, size = 0x4000, scoped, tag = 'input window, operand 13, single buffered']
    #allocation18 [shape = 's32[1]{0}', space=sflag, size = 0x4, scoped, tag = 'scoped memory for forward_prepared.1']
    #allocation19 [shape = 'u8[4096]{0}', space=vmem, size = 0x1000, scoped, tag = 'input window, operand 15, single buffered']
    #allocation20 [shape = 'u8[512]{0}', space=vmem, size = 0x400, scoped, tag = 'input window, operand 16, single buffered']
    #allocation21 [shape = 's32[1]{0}', space=sflag, size = 0x4, scoped, tag = 'scoped memory for forward_prepared.1']
    #allocation22 [shape = 'u8[512]{0}', space=vmem, size = 0x400, scoped, tag = 'input window, operand 17, single buffered']
    #allocation23 [shape = 'u8[8192]{0}', space=vmem, size = 0x2000, scoped, tag = 'input window, operand 19, single buffered']
    #allocation24 [shape = 's32[1]{0}', space=sflag, size = 0x4, scoped, tag = 'scoped memory for forward_prepared.1']
    #allocation25 [shape = 'u8[65536]{0}', space=vmem, size = 0x10000, scoped, tag = 'input window, operand 21, single buffered']
    #allocation26 [shape = 'u8[16384]{0}', space=vmem, size = 0x4000, scoped, tag = 'input window, operand 22, single buffered']
    #allocation27 [shape = 's32[1]{0}', space=sflag, size = 0x4, scoped, tag = 'scoped memory for forward_prepared.1']
    #allocation28 [shape = 'u8[1024]{0}', space=vmem, size = 0x400, scoped, tag = 'input window, operand 24, single buffered']
    #allocation29 [shape = 'u8[512]{0}', space=vmem, size = 0x400, scoped, tag = 'input window, operand 25, single buffered']
    #allocation30 [shape = 's32[1]{0}', space=sflag, size = 0x4, scoped, tag = 'scoped memory for forward_prepared.1']
    #allocation31 [shape = 'u8[512]{0}', space=vmem, size = 0x400, scoped, tag = 'input window, operand 27, single buffered']
    #allocation32 [shape = 'u8[1024]{0}', space=vmem, size = 0x400, scoped, tag = 'output window, operand 0, single buffered']
    %33 = vsyncpa [#allocation3], 0
    %34 = vsyncpa [#allocation6], 0
    %35 = vsyncpa [#allocation9], 0
    %36 = vsyncpa [#allocation12], 0
    %37 = vsyncpa [#allocation15], 0
    %38 = vsyncpa [#allocation18], 0
    %39 = vsyncpa [#allocation21], 0
    %40 = vsyncpa [#allocation24], 0
    %41 = vsyncpa [#allocation27], 0
    %42 = vsyncpa [#allocation30], 0
    %43 = vsyncpa [#allocation4], 0
    // Predicated region
    $region2: #{forward_prepared.1} parent=1 // pred_check
      _
    $region3: #{forward_prepared.1} parent=1 // pred_check_branch
      %45 = sbr.rel (0) target = $region5
    $region4: #{forward_prepared.1} parent=1 // pred_region
      _
    $region5: #{forward_prepared.1} parent=1 // pred_fallthru
      _
    // Predicated region
    $region6: #{forward_prepared.1} parent=1 // pred_check
      _
    $region7: #{forward_prepared.1} parent=1 // pred_check_branch
      %47 = sbr.rel (0) target = $region9
    $region8: #{forward_prepared.1} parent=1 // pred_region
      _
    $region9: #{forward_prepared.1} parent=1 // pred_fallthru
      _
    // Predicated region
    $region10: #{forward_prepared.1} parent=1 // pred_check
      _
    $region11: #{forward_prepared.1} parent=1 // pred_check_branch
      %49 = sbr.rel (0) target = $region13
    $region12: #{forward_prepared.1} parent=1 // pred_region
      %s51 = ssub.s32 1024, 1024
      %52 = vsyncadd [#allocation3], %s51
      %s53 = sshll.u32 [#allocation2], 4
      %s54 = int_to_ptr.vmem [resolvable:$true] %s53
      %59 = dma.hbm_to_vmem [thread:$0]  %s2, 1024, %s54, [#allocation3], 128, 128, 8
    $region13: #{forward_prepared.1} parent=1 // pred_fallthru
      _
    // Predicated region
    $region14: #{forward_prepared.1} parent=1 // pred_check
      _
    $region15: #{forward_prepared.1} parent=1 // pred_check_branch
      %61 = sbr.rel (0) target = $region17
    $region16: #{forward_prepared.1} parent=1 // pred_region
      %s63 = ssub.s32 1024, 1024
      %64 = vsyncadd [#allocation6], %s63
      %s65 = sshll.u32 [#allocation5], 4
      %s66 = int_to_ptr.vmem [resolvable:$true] %s65
      %71 = dma.hbm_to_vmem [thread:$0]  %s3, 1024, %s66, [#allocation6], 128, 128, 8
    $region17: #{forward_prepared.1} parent=1 // pred_fallthru
      _
    // Predicated region
    $region18: #{forward_prepared.1} parent=1 // pred_check
      _
    $region19: #{forward_prepared.1} parent=1 // pred_check_branch
      %73 = sbr.rel (0) target = $region21
    $region20: #{forward_prepared.1} parent=1 // pred_region
      _
    $region21: #{forward_prepared.1} parent=1 // pred_fallthru
      _
    // Predicated region
    $region22: #{forward_prepared.1} parent=1 // pred_check
      _
    $region23: #{forward_prepared.1} parent=1 // pred_check_branch
      %75 = sbr.rel (0) target = $region25
    $region24: #{forward_prepared.1} parent=1 // pred_region
      %s77 = ssub.s32 1024, 1024
      %78 = vsyncadd [#allocation6], %s77
      %s79 = sshll.u32 [#allocation7], 4
      %s80 = int_to_ptr.vmem [resolvable:$true] %s79
      %85 = dma.hbm_to_vmem [thread:$0]  %s5, 1024, %s80, [#allocation6], 512, 512, 32
    $region25: #{forward_prepared.1} parent=1 // pred_fallthru
      _
    // Predicated region
    $region26: #{forward_prepared.1} parent=1 // pred_check
      _
    $region27: #{forward_prepared.1} parent=1 // pred_check_branch
      %87 = sbr.rel (0) target = $region29
    $region28: #{forward_prepared.1} parent=1 // pred_region
      %s89 = ssub.s32 64, 64
      %90 = vsyncadd [#allocation9], %s89
      %s92 = sshll.u32 [#allocation8], 4
      %s93 = int_to_ptr.vmem [resolvable:$true] %s92
      %95 = dma.hbm_to_vmem [thread:$0]  %s6, 64, %s93, [#allocation9]
    $region29: #{forward_prepared.1} parent=1 // pred_fallthru
      _
    // Predicated region
    $region30: #{forward_prepared.1} parent=1 // pred_check
      _
    $region31: #{forward_prepared.1} parent=1 // pred_check_branch
      %97 = sbr.rel (0) target = $region33
    $region32: #{forward_prepared.1} parent=1 // pred_region
      %s99 = ssub.s32 64, 64
      %100 = vsyncadd [#allocation9], %s99
      %s102 = sshll.u32 [#allocation10], 4
      %s103 = int_to_ptr.vmem [resolvable:$true] %s102
      %105 = dma.hbm_to_vmem [thread:$0]  %s7, 64, %s103, [#allocation9]
    $region33: #{forward_prepared.1} parent=1 // pred_fallthru
      _
    // Predicated region
    $region34: #{forward_prepared.1} parent=1 // pred_check
      _
    $region35: #{forward_prepared.1} parent=1 // pred_check_branch
      %107 = sbr.rel (0) target = $region37
    $region36: #{forward_prepared.1} parent=1 // pred_region
      %s109 = ssub.s32 512, 512
      %110 = vsyncadd [#allocation12], %s109
      %s111 = sshll.u32 [#allocation11], 4
      %s112 = int_to_ptr.vmem [resolvable:$true] %s111
      %117 = dma.hbm_to_vmem [thread:$0]  %s8, 512, %s112, [#allocation12], 128, 128, 8
    $region37: #{forward_prepared.1} parent=1 // pred_fallthru
      _
    // Predicated region
    $region38: #{forward_prepared.1} parent=1 // pred_check
      _
    $region39: #{forward_prepared.1} parent=1 // pred_check_branch
      %119 = sbr.rel (0) target = $region41
    $region40: #{forward_prepared.1} parent=1 // pred_region
      %s121 = ssub.s32 512, 512
      %122 = vsyncadd [#allocation12], %s121
      %s123 = sshll.u32 [#allocation13], 4
      %s124 = int_to_ptr.vmem [resolvable:$true] %s123
      %129 = dma.hbm_to_vmem [thread:$0]  %s9, 512, %s124, [#allocation12], 128, 128, 8
    $region41: #{forward_prepared.1} parent=1 // pred_fallthru
      _
    // Predicated region
    $region42: #{forward_prepared.1} parent=1 // pred_check
      _
    $region43: #{forward_prepared.1} parent=1 // pred_check_branch
      %131 = sbr.rel (0) target = $region45
    $region44: #{forward_prepared.1} parent=1 // pred_region
      %s133 = ssub.s32 16384, 16384
      %134 = vsyncadd [#allocation15], %s133
      %s135 = sshll.u32 [#allocation14], 4
      %s136 = int_to_ptr.vmem [resolvable:$true] %s135
      %141 = dma.hbm_to_vmem [thread:$0]  %s10, 16384, %s136, [#allocation15], 256, 256, 16
    $region45: #{forward_prepared.1} parent=1 // pred_fallthru
      _
    // Predicated region
    $region46: #{forward_prepared.1} parent=1 // pred_check
      _
    $region47: #{forward_prepared.1} parent=1 // pred_check_branch
      %143 = sbr.rel (0) target = $region49
    $region48: #{forward_prepared.1} parent=1 // pred_region
      _
    $region49: #{forward_prepared.1} parent=1 // pred_fallthru
      _
    // Predicated region
    $region50: #{forward_prepared.1} parent=1 // pred_check
      _
    $region51: #{forward_prepared.1} parent=1 // pred_check_branch
      %145 = sbr.rel (0) target = $region53
    $region52: #{forward_prepared.1} parent=1 // pred_region
      %s147 = ssub.s32 512, 512
      %148 = vsyncadd [#allocation15], %s147
      %s149 = sshll.u32 [#allocation16], 4
      %s150 = int_to_ptr.vmem [resolvable:$true] %s149
      %155 = dma.hbm_to_vmem [thread:$0]  %s12, 512, %s150, [#allocation15], 128, 128, 8
    $region53: #{forward_prepared.1} parent=1 // pred_fallthru
      _
    // Predicated region
    $region54: #{forward_prepared.1} parent=1 // pred_check
      _
    $region55: #{forward_prepared.1} parent=1 // pred_check_branch
      %157 = sbr.rel (0) target = $region57
    $region56: #{forward_prepared.1} parent=1 // pred_region
      %s159 = ssub.s32 512, 512
      %160 = vsyncadd [#allocation18], %s159
      %s161 = sshll.u32 [#allocation17], 4
      %s162 = int_to_ptr.vmem [resolvable:$true] %s161
      %167 = dma.hbm_to_vmem [thread:$0]  %s13, 512, %s162, [#allocation18], 128, 128, 8
    $region57: #{forward_prepared.1} parent=1 // pred_fallthru
      _
    // Predicated region
    $region58: #{forward_prepared.1} parent=1 // pred_check
      _
    $region59: #{forward_prepared.1} parent=1 // pred_check_branch
      %169 = sbr.rel (0) target = $region61
    $region60: #{forward_prepared.1} parent=1 // pred_region
      _
    $region61: #{forward_prepared.1} parent=1 // pred_fallthru
      _
    // Predicated region
    $region62: #{forward_prepared.1} parent=1 // pred_check
      _
    $region63: #{forward_prepared.1} parent=1 // pred_check_branch
      %171 = sbr.rel (0) target = $region65
    $region64: #{forward_prepared.1} parent=1 // pred_region
      %s173 = ssub.s32 128, 128
      %174 = vsyncadd [#allocation18], %s173
      %s176 = sshll.u32 [#allocation19], 4
      %s177 = int_to_ptr.vmem [resolvable:$true] %s176
      %179 = dma.hbm_to_vmem [thread:$0]  %s15, 128, %s177, [#allocation18]
    $region65: #{forward_prepared.1} parent=1 // pred_fallthru
      _
    // Predicated region
    $region66: #{forward_prepared.1} parent=1 // pred_check
      _
    $region67: #{forward_prepared.1} parent=1 // pred_check_branch
      %181 = sbr.rel (0) target = $region69
    $region68: #{forward_prepared.1} parent=1 // pred_region
      %s183 = ssub.s32 16, 16
      %184 = vsyncadd [#allocation21], %s183
      %s186 = sshll.u32 [#allocation20], 4
      %s187 = int_to_ptr.vmem [resolvable:$true] %s186
      %189 = dma.hbm_to_vmem [thread:$0]  %s16, 16, %s187, [#allocation21]
    $region69: #{forward_prepared.1} parent=1 // pred_fallthru
      _
    // Predicated region
    $region70: #{forward_prepared.1} parent=1 // pred_check
      _
    $region71: #{forward_prepared.1} parent=1 // pred_check_branch
      %191 = sbr.rel (0) target = $region73
    $region72: #{forward_prepared.1} parent=1 // pred_region
      %s193 = ssub.s32 16, 16
      %194 = vsyncadd [#allocation21], %s193
      %s196 = sshll.u32 [#allocation22], 4
      %s197 = int_to_ptr.vmem [resolvable:$true] %s196
      %199 = dma.hbm_to_vmem [thread:$0]  %s17, 16, %s197, [#allocation21]
    $region73: #{forward_prepared.1} parent=1 // pred_fallthru
      _
    // Predicated region
    $region74: #{forward_prepared.1} parent=1 // pred_check
      _
    $region75: #{forward_prepared.1} parent=1 // pred_check_branch
      %201 = sbr.rel (0) target = $region77
    $region76: #{forward_prepared.1} parent=1 // pred_region
      _
    $region77: #{forward_prepared.1} parent=1 // pred_fallthru
      _
    // Predicated region
    $region78: #{forward_prepared.1} parent=1 // pred_check
      _
    $region79: #{forward_prepared.1} parent=1 // pred_check_branch
      %203 = sbr.rel (0) target = $region81
    $region80: #{forward_prepared.1} parent=1 // pred_region
      %s205 = ssub.s32 256, 256
      %206 = vsyncadd [#allocation24], %s205
      %s207 = sshll.u32 [#allocation23], 4
      %s208 = int_to_ptr.vmem [resolvable:$true] %s207
      %213 = dma.hbm_to_vmem [thread:$0]  %s19, 256, %s208, [#allocation24], 128, 128, 8
    $region81: #{forward_prepared.1} parent=1 // pred_fallthru
      _
    // Predicated region
    $region82: #{forward_prepared.1} parent=1 // pred_check
      _
    $region83: #{forward_prepared.1} parent=1 // pred_check_branch
      %215 = sbr.rel (0) target = $region85
    $region84: #{forward_prepared.1} parent=1 // pred_region
      _
    $region85: #{forward_prepared.1} parent=1 // pred_fallthru
      _
    // Predicated region
    $region86: #{forward_prepared.1} parent=1 // pred_check
      _
    $region87: #{forward_prepared.1} parent=1 // pred_check_branch
      %217 = sbr.rel (0) target = $region89
    $region88: #{forward_prepared.1} parent=1 // pred_region
      %s219 = ssub.s32 2048, 2048
      %220 = vsyncadd [#allocation24], %s219
      %s221 = sshll.u32 [#allocation25], 4
      %s222 = int_to_ptr.vmem [resolvable:$true] %s221
      %227 = dma.hbm_to_vmem [thread:$0]  %s21, 2048, %s222, [#allocation24], 256, 256, 16
    $region89: #{forward_prepared.1} parent=1 // pred_fallthru
      _
    // Predicated region
    $region90: #{forward_prepared.1} parent=1 // pred_check
      _
    $region91: #{forward_prepared.1} parent=1 // pred_check_branch
      %229 = sbr.rel (0) target = $region93
    $region92: #{forward_prepared.1} parent=1 // pred_region
      %s231 = ssub.s32 512, 512
      %232 = vsyncadd [#allocation27], %s231
      %s233 = sshll.u32 [#allocation26], 4
      %s234 = int_to_ptr.vmem [resolvable:$true] %s233
      %239 = dma.hbm_to_vmem [thread:$0]  %s22, 512, %s234, [#allocation27], 256, 256, 16
    $region93: #{forward_prepared.1} parent=1 // pred_fallthru
      _
    // Predicated region
    $region94: #{forward_prepared.1} parent=1 // pred_check
      _
    $region95: #{forward_prepared.1} parent=1 // pred_check_branch
      %241 = sbr.rel (0) target = $region97
    $region96: #{forward_prepared.1} parent=1 // pred_region
      _
    $region97: #{forward_prepared.1} parent=1 // pred_fallthru
      _
    // Predicated region
    $region98: #{forward_prepared.1} parent=1 // pred_check
      _
    $region99: #{forward_prepared.1} parent=1 // pred_check_branch
      %243 = sbr.rel (0) target = $region101
    $region100: #{forward_prepared.1} parent=1 // pred_region
      %s245 = ssub.s32 32, 32
      %246 = vsyncadd [#allocation27], %s245
      %s248 = sshll.u32 [#allocation28], 4
      %s249 = int_to_ptr.vmem [resolvable:$true] %s248
      %251 = dma.hbm_to_vmem [thread:$0]  %s24, 32, %s249, [#allocation27]
    $region101: #{forward_prepared.1} parent=1 // pred_fallthru
      _
    // Predicated region
    $region102: #{forward_prepared.1} parent=1 // pred_check
      _
    $region103: #{forward_prepared.1} parent=1 // pred_check_branch
      %253 = sbr.rel (0) target = $region105
    $region104: #{forward_prepared.1} parent=1 // pred_region
      %s255 = ssub.s32 16, 16
      %256 = vsyncadd [#allocation30], %s255
      %s258 = sshll.u32 [#allocation29], 4
      %s259 = int_to_ptr.vmem [resolvable:$true] %s258
      %261 = dma.hbm_to_vmem [thread:$0]  %s25, 16, %s259, [#allocation30]
    $region105: #{forward_prepared.1} parent=1 // pred_fallthru
      _
    // Predicated region
    $region106: #{forward_prepared.1} parent=1 // pred_check
      _
    $region107: #{forward_prepared.1} parent=1 // pred_check_branch
      %263 = sbr.rel (0) target = $region109
    $region108: #{forward_prepared.1} parent=1 // pred_region
      _
    $region109: #{forward_prepared.1} parent=1 // pred_fallthru
      _
    // Predicated region
    $region110: #{forward_prepared.1} parent=1 // pred_check
      _
    $region111: #{forward_prepared.1} parent=1 // pred_check_branch
      %265 = sbr.rel (0) target = $region113
    $region112: #{forward_prepared.1} parent=1 // pred_region
      %s267 = ssub.s32 16, 16
      %268 = vsyncadd [#allocation30], %s267
      %s270 = sshll.u32 [#allocation31], 4
      %s271 = int_to_ptr.vmem [resolvable:$true] %s270
      %273 = dma.hbm_to_vmem [thread:$0]  %s27, 16, %s271, [#allocation30]
    $region113: #{forward_prepared.1} parent=1 // pred_fallthru
      _
    // Predicated region
    $region114: #{forward_prepared.1} parent=1 // pred_check
      _
    $region115: #{forward_prepared.1} parent=1 // pred_check_branch
      %275 = sbr.rel (0) target = $region117
    $region116: #{forward_prepared.1} parent=1 // pred_region
      %276 = dma.done [#allocation3], 1024
    $region117: #{forward_prepared.1} parent=1 // pred_fallthru
      _
    // Predicated region
    $region118: #{forward_prepared.1} parent=1 // pred_check
      _
    $region119: #{forward_prepared.1} parent=1 // pred_check_branch
      %278 = sbr.rel (0) target = $region121
    $region120: #{forward_prepared.1} parent=1 // pred_region
      %279 = dma.done [#allocation6], 1024
    $region121: #{forward_prepared.1} parent=1 // pred_fallthru
      _
    // Predicated region
    $region122: #{forward_prepared.1} parent=1 // pred_check
      _
    $region123: #{forward_prepared.1} parent=1 // pred_check_branch
      %281 = sbr.rel (0) target = $region125
    $region124: #{forward_prepared.1} parent=1 // pred_region
      %282 = dma.done [#allocation6], 1024
    $region125: #{forward_prepared.1} parent=1 // pred_fallthru
      _
    // Predicated region
    $region126: #{forward_prepared.1} parent=1 // pred_check
      _
    $region127: #{forward_prepared.1} parent=1 // pred_check_branch
      %284 = sbr.rel (0) target = $region129
    $region128: #{forward_prepared.1} parent=1 // pred_region
      %285 = dma.done [#allocation9], 64
    $region129: #{forward_prepared.1} parent=1 // pred_fallthru
      _
    // Predicated region
    $region130: #{forward_prepared.1} parent=1 // pred_check
      _
    $region131: #{forward_prepared.1} parent=1 // pred_check_branch
      %287 = sbr.rel (0) target = $region133
    $region132: #{forward_prepared.1} parent=1 // pred_region
      %288 = dma.done [#allocation9], 64
    $region133: #{forward_prepared.1} parent=1 // pred_fallthru
      _
    // Predicated region
    $region134: #{forward_prepared.1} parent=1 // pred_check
      _
    $region135: #{forward_prepared.1} parent=1 // pred_check_branch
      %290 = sbr.rel (0) target = $region137
    $region136: #{forward_prepared.1} parent=1 // pred_region
      %291 = dma.done [#allocation12], 512
    $region137: #{forward_prepared.1} parent=1 // pred_fallthru
      _
    // Predicated region
    $region138: #{forward_prepared.1} parent=1 // pred_check
      _
    $region139: #{forward_prepared.1} parent=1 // pred_check_branch
      %293 = sbr.rel (0) target = $region141
    $region140: #{forward_prepared.1} parent=1 // pred_region
      %294 = dma.done [#allocation12], 512
    $region141: #{forward_prepared.1} parent=1 // pred_fallthru
      _
    // Predicated region
    $region142: #{forward_prepared.1} parent=1 // pred_check
      _
    $region143: #{forward_prepared.1} parent=1 // pred_check_branch
      %296 = sbr.rel (0) target = $region145
    $region144: #{forward_prepared.1} parent=1 // pred_region
      %297 = dma.done [#allocation15], 16384
    $region145: #{forward_prepared.1} parent=1 // pred_fallthru
      _
    // Predicated region
    $region146: #{forward_prepared.1} parent=1 // pred_check
      _
    $region147: #{forward_prepared.1} parent=1 // pred_check_branch
      %299 = sbr.rel (0) target = $region149
    $region148: #{forward_prepared.1} parent=1 // pred_region
      %300 = dma.done [#allocation15], 512
    $region149: #{forward_prepared.1} parent=1 // pred_fallthru
      _
    // Predicated region
    $region150: #{forward_prepared.1} parent=1 // pred_check
      _
    $region151: #{forward_prepared.1} parent=1 // pred_check_branch
      %302 = sbr.rel (0) target = $region153
    $region152: #{forward_prepared.1} parent=1 // pred_region
      %303 = dma.done [#allocation18], 512
    $region153: #{forward_prepared.1} parent=1 // pred_fallthru
      _
    // Predicated region
    $region154: #{forward_prepared.1} parent=1 // pred_check
      _
    $region155: #{forward_prepared.1} parent=1 // pred_check_branch
      %305 = sbr.rel (0) target = $region157
    $region156: #{forward_prepared.1} parent=1 // pred_region
      %306 = dma.done [#allocation18], 128
    $region157: #{forward_prepared.1} parent=1 // pred_fallthru
      _
    // Predicated region
    $region158: #{forward_prepared.1} parent=1 // pred_check
      _
    $region159: #{forward_prepared.1} parent=1 // pred_check_branch
      %308 = sbr.rel (0) target = $region161
    $region160: #{forward_prepared.1} parent=1 // pred_region
      %309 = dma.done [#allocation21], 16
    $region161: #{forward_prepared.1} parent=1 // pred_fallthru
      _
    // Predicated region
    $region162: #{forward_prepared.1} parent=1 // pred_check
      _
    $region163: #{forward_prepared.1} parent=1 // pred_check_branch
      %311 = sbr.rel (0) target = $region165
    $region164: #{forward_prepared.1} parent=1 // pred_region
      %312 = dma.done [#allocation21], 16
    $region165: #{forward_prepared.1} parent=1 // pred_fallthru
      _
    // Predicated region
    $region166: #{forward_prepared.1} parent=1 // pred_check
      _
    $region167: #{forward_prepared.1} parent=1 // pred_check_branch
      %314 = sbr.rel (0) target = $region169
    $region168: #{forward_prepared.1} parent=1 // pred_region
      %315 = dma.done [#allocation24], 256
    $region169: #{forward_prepared.1} parent=1 // pred_fallthru
      _
    // Predicated region
    $region170: #{forward_prepared.1} parent=1 // pred_check
      _
    $region171: #{forward_prepared.1} parent=1 // pred_check_branch
      %317 = sbr.rel (0) target = $region173
    $region172: #{forward_prepared.1} parent=1 // pred_region
      %318 = dma.done [#allocation24], 2048
    $region173: #{forward_prepared.1} parent=1 // pred_fallthru
      _
    // Predicated region
    $region174: #{forward_prepared.1} parent=1 // pred_check
      _
    $region175: #{forward_prepared.1} parent=1 // pred_check_branch
      %320 = sbr.rel (0) target = $region177
    $region176: #{forward_prepared.1} parent=1 // pred_region
      %321 = dma.done [#allocation27], 512
    $region177: #{forward_prepared.1} parent=1 // pred_fallthru
      _
    // Predicated region
    $region178: #{forward_prepared.1} parent=1 // pred_check
      _
    $region179: #{forward_prepared.1} parent=1 // pred_check_branch
      %323 = sbr.rel (0) target = $region181
    $region180: #{forward_prepared.1} parent=1 // pred_region
      %324 = dma.done [#allocation27], 32
    $region181: #{forward_prepared.1} parent=1 // pred_fallthru
      _
    // Predicated region
    $region182: #{forward_prepared.1} parent=1 // pred_check
      _
    $region183: #{forward_prepared.1} parent=1 // pred_check_branch
      %326 = sbr.rel (0) target = $region185
    $region184: #{forward_prepared.1} parent=1 // pred_region
      %327 = dma.done [#allocation30], 16
    $region185: #{forward_prepared.1} parent=1 // pred_fallthru
      _
    // Predicated region
    $region186: #{forward_prepared.1} parent=1 // pred_check
      _
    $region187: #{forward_prepared.1} parent=1 // pred_check_branch
      %329 = sbr.rel (0) target = $region189
    $region188: #{forward_prepared.1} parent=1 // pred_region
      %330 = dma.done [#allocation30], 16
    $region189: #{forward_prepared.1} parent=1 // pred_fallthru
      _
    %v331 = vld [vmem:[%s0] sm:$0xff]
    %v332 = vld [vmem:[%s0 + $0x8] sm:$0xff]
    %v333 = vld [vmem:[%s0 + $0x10] sm:$0xff]
    %v334 = vld [vmem:[%s0 + $0x18] sm:$0xff]
    %v335 = vld [vmem:[%s0 + $0x20] sm:$0xff]
    %v336 = vld [vmem:[%s0 + $0x28] sm:$0xff]
    %v337 = vld [vmem:[%s0 + $0x30] sm:$0xff]
    %v338 = vld [vmem:[%s0 + $0x38] sm:$0xff]
    %s339 = scalar_lea.vmem %s1, 384
    %v340 = vld [vmem:[%s339] sm:$0xff]
    %v341 = vld [vmem:[%s339 + $0x8] sm:$0xff]
    %v342 = vld [vmem:[%s339 + $0x10] sm:$0xff]
    %v343 = vld [vmem:[%s339 + $0x18] sm:$0xff]
    %v344 = vld [vmem:[%s339 + $0x20] sm:$0xff]
    %v345 = vld [vmem:[%s339 + $0x28] sm:$0xff]
    %v346 = vld [vmem:[%s339 + $0x30] sm:$0xff]
    %v347 = vld [vmem:[%s339 + $0x38] sm:$0xff]
    %v348 = vld [vmem:[%s339 + $0x40] sm:$0xff]
    %v349 = vld [vmem:[%s339 + $0x48] sm:$0xff]
    %v350 = vld [vmem:[%s339 + $0x50] sm:$0xff]
    %v351 = vld [vmem:[%s339 + $0x58] sm:$0xff]
    %v352 = vld [vmem:[%s339 + $0x60] sm:$0xff]
    %v353 = vld [vmem:[%s339 + $0x68] sm:$0xff]
    %v354 = vld [vmem:[%s339 + $0x70] sm:$0xff]
    %v355 = vld [vmem:[%s339 + $0x78] sm:$0xff]
    %v356 = vld [vmem:[%s339 + $0x80] sm:$0xff]
    %v357 = vld [vmem:[%s339 + $0x88] sm:$0xff]
    %v358 = vld [vmem:[%s339 + $0x90] sm:$0xff]
    %v359 = vld [vmem:[%s339 + $0x98] sm:$0xff]
    %v360 = vld [vmem:[%s339 + $0xa0] sm:$0xff]
    %v361 = vld [vmem:[%s339 + $0xa8] sm:$0xff]
    %v362 = vld [vmem:[%s339 + $0xb0] sm:$0xff]
    %v363 = vld [vmem:[%s339 + $0xb8] sm:$0xff]
    %v364 = vld [vmem:[%s339 + $0xc0] sm:$0xff]
    %v365 = vld [vmem:[%s339 + $0xc8] sm:$0xff]
    %v366 = vld [vmem:[%s339 + $0xd0] sm:$0xff]
    %v367 = vld [vmem:[%s339 + $0xd8] sm:$0xff]
    %v368 = vld [vmem:[%s339 + $0xe0] sm:$0xff]
    %v369 = vld [vmem:[%s339 + $0xe8] sm:$0xff]
    %v370 = vld [vmem:[%s339 + $0xf0] sm:$0xff]
    %v371 = vld [vmem:[%s339 + $0xf8] sm:$0xff]
    %v372 = vld [vmem:[%s339 + $0x100] sm:$0xff]
    %v373 = vld [vmem:[%s339 + $0x108] sm:$0xff]
    %v374 = vld [vmem:[%s339 + $0x110] sm:$0xff]
    %v375 = vld [vmem:[%s339 + $0x118] sm:$0xff]
    %v376 = vld [vmem:[%s339 + $0x120] sm:$0xff]
    %v377 = vld [vmem:[%s339 + $0x128] sm:$0xff]
    %v378 = vld [vmem:[%s339 + $0x130] sm:$0xff]
    %v379 = vld [vmem:[%s339 + $0x138] sm:$0xff]
    %v380 = vld [vmem:[%s339 + $0x140] sm:$0xff]
    %v381 = vld [vmem:[%s339 + $0x148] sm:$0xff]
    %v382 = vld [vmem:[%s339 + $0x150] sm:$0xff]
    %v383 = vld [vmem:[%s339 + $0x158] sm:$0xff]
    %v384 = vld [vmem:[%s339 + $0x160] sm:$0xff]
    %v385 = vld [vmem:[%s339 + $0x168] sm:$0xff]
    %v386 = vld [vmem:[%s339 + $0x170] sm:$0xff]
    %v387 = vld [vmem:[%s339 + $0x178] sm:$0xff]
    %v388 = vld [vmem:[#allocation2] sm:$0xff]
    %v389 = vld [vmem:[#allocation2 + $0x8] sm:$0xff]
    %v390 = vld [vmem:[#allocation2 + $0x10] sm:$0xff]
    %v391 = vld [vmem:[#allocation2 + $0x18] sm:$0xff]
    %v392 = vld [vmem:[#allocation2 + $0x20] sm:$0xff]
    %v393 = vld [vmem:[#allocation2 + $0x28] sm:$0xff]
    %v394 = vld [vmem:[#allocation2 + $0x30] sm:$0xff]
    %v395 = vld [vmem:[#allocation2 + $0x38] sm:$0xff]
    %vm396 = vcmask 523264
    %v398 = vsel %vm396, %v388, 0
    %v401 = vsel %vm396, %v389, 0
    %v404 = vsel %vm396, %v390, 0
    %v407 = vsel %vm396, %v391, 0
    %v410 = vsel %vm396, %v392, 0
    %v413 = vsel %vm396, %v393, 0
    %v416 = vsel %vm396, %v394, 0
    %v419 = vsel %vm396, %v395, 0
    %421 = vmatprep.subr.mxu0 0.0
    %422 = vmatpush1.msra.mxu0 %v331
    %423 = vmatprep.subr.mxu0 0.0
    %424 = vmatpush1.msra.mxu0 %v332
    %425 = vmatprep.subr.mxu0 0.0
    %426 = vmatpush1.msra.mxu0 %v333
    %427 = vmatprep.subr.mxu0 0.0
    %428 = vmatpush1.msra.mxu0 %v334
    %429 = vmatprep.subr.mxu0 0.0
    %430 = vmatpush1.msra.mxu0 %v335
    %431 = vmatprep.subr.mxu0 0.0
    %432 = vmatpush1.msra.mxu0 %v336
    %433 = vmatprep.subr.mxu0 0.0
    %434 = vmatpush1.msra.mxu0 %v337
    %435 = vmatprep.subr.mxu0 0.0
    %436 = vmatpush1.msra.mxu0 %v338
    %437 = vmatprep.subr.mxu0 0.0
    %438 = vmatpush1.msra.mxu0 0.0
    %439 = vmatprep.subr.mxu0 0.0
    %440 = vmatpush1.msra.mxu0 0.0
    %441 = vmatprep.subr.mxu0 0.0
    %442 = vmatpush1.msra.mxu0 0.0
    %443 = vmatprep.subr.mxu0 0.0
    %444 = vmatpush1.msra.mxu0 0.0
    %445 = vmatprep.subr.mxu0 0.0
    %446 = vmatpush1.msra.mxu0 0.0
    %447 = vmatprep.subr.mxu0 0.0
    %448 = vmatpush1.msra.mxu0 0.0
    %449 = vmatprep.subr.mxu0 0.0
    %450 = vmatpush1.msra.mxu0 0.0
    %451 = vmatprep.subr.mxu0 0.0
    %452 = vmatpush1.msra.mxu0 0.0
    %453 = vmatprep.subr.mxu0 0.0
    %454 = vmatpush1.msra.mxu0 0.0
    %455 = vmatprep.subr.mxu0 0.0
    %456 = vmatpush1.msra.mxu0 0.0
    %457 = vmatprep.subr.mxu0 0.0
    %458 = vmatpush1.msra.mxu0 0.0
    %459 = vmatprep.subr.mxu0 0.0
    %460 = vmatpush1.msra.mxu0 0.0
    %461 = vmatprep.subr.mxu0 0.0
    %462 = vmatpush1.msra.mxu0 0.0
    %463 = vmatprep.subr.mxu0 0.0
    %464 = vmatpush1.msra.mxu0 0.0
    %465 = vmatprep.subr.mxu0 0.0
    %466 = vmatpush1.msra.mxu0 0.0
    %467 = vmatprep.subr.mxu0 0.0
    %468 = vmatpush1.msra.mxu0 0.0
    %469 = vmatprep.subr.mxu0 0.0
    %470 = vmatpush1.msra.mxu0 0.0
    %471 = vmatprep.subr.mxu0 0.0
    %472 = vmatpush1.msra.mxu0 0.0
    %473 = vmatprep.subr.mxu0 0.0
    %474 = vmatpush1.msra.mxu0 0.0
    %475 = vmatprep.subr.mxu0 0.0
    %476 = vmatpush1.msra.mxu0 0.0
    %477 = vmatprep.subr.mxu0 0.0
    %478 = vmatpush1.msra.mxu0 0.0
    %479 = vmatprep.subr.mxu0 0.0
    %480 = vmatpush1.msra.mxu0 0.0
    %481 = vmatprep.subr.mxu0 0.0
    %482 = vmatpush1.msra.mxu0 0.0
    %483 = vmatprep.subr.mxu0 0.0
    %484 = vmatpush1.msra.mxu0 0.0
    %485 = vmatprep.mubr.f32.mxu0 0.0
    %486 = vmatmul.mubr.f32.gmra.mrb[0].mxu0 %v398
    %v487 = vpop.f32.mrb[0].mxu0
    %v488 = vadd.f32 0.0, %v487
    %v489 = vpop.f32.mrb[0].mxu0
    %490 = vmatprep.mubr.f32.mxu0 0.0
    %491 = vmatmul.mubr.f32.gmra.mrb[0].mxu0 %v401
    %v492 = vpop.f32.mrb[0].mxu0
    %v493 = vadd.f32 0.0, %v492
    %v494 = vpop.f32.mrb[0].mxu0
    %495 = vmatprep.mubr.f32.mxu0 0.0
    %496 = vmatmul.mubr.f32.gmra.mrb[0].mxu0 %v404
    %v497 = vpop.f32.mrb[0].mxu0
    %v498 = vadd.f32 0.0, %v497
    %v499 = vpop.f32.mrb[0].mxu0
    %500 = vmatprep.mubr.f32.mxu0 0.0
    %501 = vmatmul.mubr.f32.gmra.mrb[0].mxu0 %v407
    %v502 = vpop.f32.mrb[0].mxu0
    %v503 = vadd.f32 0.0, %v502
    %v504 = vpop.f32.mrb[0].mxu0
    %505 = vmatprep.mubr.f32.mxu0 0.0
    %506 = vmatmul.mubr.f32.gmra.mrb[0].mxu0 %v410
    %v507 = vpop.f32.mrb[0].mxu0
    %v508 = vadd.f32 0.0, %v507
    %v509 = vpop.f32.mrb[0].mxu0
    %510 = vmatprep.mubr.f32.mxu0 0.0
    %511 = vmatmul.mubr.f32.gmra.mrb[0].mxu0 %v413
    %v512 = vpop.f32.mrb[0].mxu0
    %v513 = vadd.f32 0.0, %v512
    %v514 = vpop.f32.mrb[0].mxu0
    %515 = vmatprep.mubr.f32.mxu0 0.0
    %516 = vmatmul.mubr.f32.gmra.mrb[0].mxu0 %v416
    %v517 = vpop.f32.mrb[0].mxu0
    %v518 = vadd.f32 0.0, %v517
    %v519 = vpop.f32.mrb[0].mxu0
    %520 = vmatprep.mubr.f32.mxu0 0.0
    %521 = vmatmul.mubr.f32.gmra.mrb[0].mxu0 %v419
    %v522 = vpop.f32.mrb[0].mxu0
    %v523 = vadd.f32 0.0, %v522
    %v524 = vpop.f32.mrb[0].mxu0
    %525 = vdwg.mxu0
    %v526 = vld [vmem:[%s1] sm:$0xff]
    %v527 = vld [vmem:[%s1 + $0x8] sm:$0xff]
    %v528 = vld [vmem:[%s1 + $0x10] sm:$0xff]
    %v529 = vld [vmem:[%s1 + $0x18] sm:$0xff]
    %v530 = vld [vmem:[%s1 + $0x20] sm:$0xff]
    %v531 = vld [vmem:[%s1 + $0x28] sm:$0xff]
    %v532 = vld [vmem:[%s1 + $0x30] sm:$0xff]
    %v533 = vld [vmem:[%s1 + $0x38] sm:$0xff]
    %v534 = vld [vmem:[%s1 + $0x40] sm:$0xff]
    %v535 = vld [vmem:[%s1 + $0x48] sm:$0xff]
    %v536 = vld [vmem:[%s1 + $0x50] sm:$0xff]
    %v537 = vld [vmem:[%s1 + $0x58] sm:$0xff]
    %v538 = vld [vmem:[%s1 + $0x60] sm:$0xff]
    %v539 = vld [vmem:[%s1 + $0x68] sm:$0xff]
    %v540 = vld [vmem:[%s1 + $0x70] sm:$0xff]
    %v541 = vld [vmem:[%s1 + $0x78] sm:$0xff]
    %v542 = vld [vmem:[%s1 + $0x80] sm:$0xff]
    %v543 = vld [vmem:[%s1 + $0x88] sm:$0xff]
    %v544 = vld [vmem:[%s1 + $0x90] sm:$0xff]
    %v545 = vld [vmem:[%s1 + $0x98] sm:$0xff]
    %v546 = vld [vmem:[%s1 + $0xa0] sm:$0xff]
    %v547 = vld [vmem:[%s1 + $0xa8] sm:$0xff]
    %v548 = vld [vmem:[%s1 + $0xb0] sm:$0xff]
    %v549 = vld [vmem:[%s1 + $0xb8] sm:$0xff]
    %v550 = vld [vmem:[%s1 + $0xc0] sm:$0xff]
    %v551 = vld [vmem:[%s1 + $0xc8] sm:$0xff]
    %v552 = vld [vmem:[%s1 + $0xd0] sm:$0xff]
    %v553 = vld [vmem:[%s1 + $0xd8] sm:$0xff]
    %v554 = vld [vmem:[%s1 + $0xe0] sm:$0xff]
    %v555 = vld [vmem:[%s1 + $0xe8] sm:$0xff]
    %v556 = vld [vmem:[%s1 + $0xf0] sm:$0xff]
    %v557 = vld [vmem:[%s1 + $0xf8] sm:$0xff]
    %v558 = vld [vmem:[%s1 + $0x100] sm:$0xff]
    %v559 = vld [vmem:[%s1 + $0x108] sm:$0xff]
    %v560 = vld [vmem:[%s1 + $0x110] sm:$0xff]
    %v561 = vld [vmem:[%s1 + $0x118] sm:$0xff]
    %v562 = vld [vmem:[%s1 + $0x120] sm:$0xff]
    %v563 = vld [vmem:[%s1 + $0x128] sm:$0xff]
    %v564 = vld [vmem:[%s1 + $0x130] sm:$0xff]
    %v565 = vld [vmem:[%s1 + $0x138] sm:$0xff]
    %v566 = vld [vmem:[%s1 + $0x140] sm:$0xff]
    %v567 = vld [vmem:[%s1 + $0x148] sm:$0xff]
    %v568 = vld [vmem:[%s1 + $0x150] sm:$0xff]
    %v569 = vld [vmem:[%s1 + $0x158] sm:$0xff]
    %v570 = vld [vmem:[%s1 + $0x160] sm:$0xff]
    %v571 = vld [vmem:[%s1 + $0x168] sm:$0xff]
    %v572 = vld [vmem:[%s1 + $0x170] sm:$0xff]
    %v573 = vld [vmem:[%s1 + $0x178] sm:$0xff]
    %vm574 = vcmask 785408
    %v576 = vsel %vm574, %v488, 0
    %v579 = vsel %vm574, %v493, 0
    %v582 = vsel %vm574, %v498, 0
    %v585 = vsel %vm574, %v503, 0
    %v588 = vsel %vm574, %v508, 0
    %v591 = vsel %vm574, %v513, 0
    %v594 = vsel %vm574, %v518, 0
    %v597 = vsel %vm574, %v523, 0
    %599 = vmatprep.subr.mxu0 %v527
    %600 = vmatpush1.msra.mxu0 %v526
    %601 = vmatprep.subr.mxu0 %v531
    %602 = vmatpush1.msra.mxu0 %v530
    %603 = vmatprep.subr.mxu0 %v535
    %604 = vmatpush1.msra.mxu0 %v534
    %605 = vmatprep.subr.mxu0 %v539
    %606 = vmatpush1.msra.mxu0 %v538
    %607 = vmatprep.subr.mxu0 %v543
    %608 = vmatpush1.msra.mxu0 %v542
    %609 = vmatprep.subr.mxu0 %v547
    %610 = vmatpush1.msra.mxu0 %v546
    %611 = vmatprep.subr.mxu0 %v551
    %612 = vmatpush1.msra.mxu0 %v550
    %613 = vmatprep.subr.mxu0 %v555
    %614 = vmatpush1.msra.mxu0 %v554
    %615 = vmatprep.subr.mxu0 %v559
    %616 = vmatpush1.msra.mxu0 %v558
    %617 = vmatprep.subr.mxu0 %v563
    %618 = vmatpush1.msra.mxu0 %v562
    %619 = vmatprep.subr.mxu0 %v567
    %620 = vmatpush1.msra.mxu0 %v566
    %621 = vmatprep.subr.mxu0 %v571
    %622 = vmatpush1.msra.mxu0 %v570
    %623 = vmatprep.subr.mxu0 0.0
    %624 = vmatpush1.msra.mxu0 0.0
    %625 = vmatprep.subr.mxu0 0.0
    %626 = vmatpush1.msra.mxu0 0.0
    %627 = vmatprep.subr.mxu0 0.0
    %628 = vmatpush1.msra.mxu0 0.0
    %629 = vmatprep.subr.mxu0 0.0
    %630 = vmatpush1.msra.mxu0 0.0
    %631 = vmatprep.subr.mxu0 0.0
    %632 = vmatpush1.msra.mxu0 0.0
    %633 = vmatprep.subr.mxu0 0.0
    %634 = vmatpush1.msra.mxu0 0.0
    %635 = vmatprep.subr.mxu0 0.0
    %636 = vmatpush1.msra.mxu0 0.0
    %637 = vmatprep.subr.mxu0 0.0
    %638 = vmatpush1.msra.mxu0 0.0
    %639 = vmatprep.subr.mxu0 0.0
    %640 = vmatpush1.msra.mxu0 0.0
    %641 = vmatprep.subr.mxu0 0.0
    %642 = vmatpush1.msra.mxu0 0.0
    %643 = vmatprep.subr.mxu0 0.0
    %644 = vmatpush1.msra.mxu0 0.0
    %645 = vmatprep.subr.mxu0 0.0
    %646 = vmatpush1.msra.mxu0 0.0
    %647 = vmatprep.subr.mxu0 0.0
    %648 = vmatpush1.msra.mxu0 0.0
    %649 = vmatprep.subr.mxu0 0.0
    %650 = vmatpush1.msra.mxu0 0.0
    %651 = vmatprep.subr.mxu0 0.0
    %652 = vmatpush1.msra.mxu0 0.0
    %653 = vmatprep.subr.mxu0 0.0
    %654 = vmatpush1.msra.mxu0 0.0
    %655 = vmatprep.subr.mxu0 0.0
    %656 = vmatpush1.msra.mxu0 0.0
    %657 = vmatprep.subr.mxu0 0.0
    %658 = vmatpush1.msra.mxu0 0.0
    %659 = vmatprep.subr.mxu0 0.0
    %660 = vmatpush1.msra.mxu0 0.0
    %661 = vmatprep.subr.mxu0 0.0
    %662 = vmatpush1.msra.mxu0 0.0
    %663 = vmatprep.mubr.f32.mxu0 0.0
    %664 = vmatmul.mubr.f32.gmra.mrb[0].mxu0 %v576
    %v665 = vpop.f32.mrb[0].mxu0
    %v666 = vadd.f32 0.0, %v665
    %v667 = vpop.f32.mrb[0].mxu0
    %v668 = vadd.f32 0.0, %v667
    %669 = vmatprep.mubr.f32.mxu0 0.0
    %670 = vmatmul.mubr.f32.gmra.mrb[0].mxu0 %v579
    %v671 = vpop.f32.mrb[0].mxu0
    %v672 = vadd.f32 0.0, %v671
    %v673 = vpop.f32.mrb[0].mxu0
    %v674 = vadd.f32 0.0, %v673
    %675 = vmatprep.mubr.f32.mxu0 0.0
    %676 = vmatmul.mubr.f32.gmra.mrb[0].mxu0 %v582
    %v677 = vpop.f32.mrb[0].mxu0
    %v678 = vadd.f32 0.0, %v677
    %v679 = vpop.f32.mrb[0].mxu0
    %v680 = vadd.f32 0.0, %v679
    %681 = vmatprep.mubr.f32.mxu0 0.0
    %682 = vmatmul.mubr.f32.gmra.mrb[0].mxu0 %v585
    %v683 = vpop.f32.mrb[0].mxu0
    %v684 = vadd.f32 0.0, %v683
    %v685 = vpop.f32.mrb[0].mxu0
    %v686 = vadd.f32 0.0, %v685
    %687 = vmatprep.mubr.f32.mxu0 0.0
    %688 = vmatmul.mubr.f32.gmra.mrb[0].mxu0 %v588
    %v689 = vpop.f32.mrb[0].mxu0
    %v690 = vadd.f32 0.0, %v689
    %v691 = vpop.f32.mrb[0].mxu0
    %v692 = vadd.f32 0.0, %v691
    %693 = vmatprep.mubr.f32.mxu0 0.0
    %694 = vmatmul.mubr.f32.gmra.mrb[0].mxu0 %v591
    %v695 = vpop.f32.mrb[0].mxu0
    %v696 = vadd.f32 0.0, %v695
    %v697 = vpop.f32.mrb[0].mxu0
    %v698 = vadd.f32 0.0, %v697
    %699 = vmatprep.mubr.f32.mxu0 0.0
    %700 = vmatmul.mubr.f32.gmra.mrb[0].mxu0 %v594
    %v701 = vpop.f32.mrb[0].mxu0
    %v702 = vadd.f32 0.0, %v701
    %v703 = vpop.f32.mrb[0].mxu0
    %v704 = vadd.f32 0.0, %v703
    %705 = vmatprep.mubr.f32.mxu0 0.0
    %706 = vmatmul.mubr.f32.gmra.mrb[0].mxu0 %v597
    %v707 = vpop.f32.mrb[0].mxu0
    %v708 = vadd.f32 0.0, %v707
    %v709 = vpop.f32.mrb[0].mxu0
    %v710 = vadd.f32 0.0, %v709
    %711 = vdwg.mxu0
    %712 = vmatprep.subr.mxu0 %v529
    %713 = vmatpush1.msra.mxu0 %v528
    %714 = vmatprep.subr.mxu0 %v533
    %715 = vmatpush1.msra.mxu0 %v532
    %716 = vmatprep.subr.mxu0 %v537
    %717 = vmatpush1.msra.mxu0 %v536
    %718 = vmatprep.subr.mxu0 %v541
    %719 = vmatpush1.msra.mxu0 %v540
    %720 = vmatprep.subr.mxu0 %v545
    %721 = vmatpush1.msra.mxu0 %v544
    %722 = vmatprep.subr.mxu0 %v549
    %723 = vmatpush1.msra.mxu0 %v548
    %724 = vmatprep.subr.mxu0 %v553
    %725 = vmatpush1.msra.mxu0 %v552
    %726 = vmatprep.subr.mxu0 %v557
    %727 = vmatpush1.msra.mxu0 %v556
    %728 = vmatprep.subr.mxu0 %v561
    %729 = vmatpush1.msra.mxu0 %v560
    %730 = vmatprep.subr.mxu0 %v565
    %731 = vmatpush1.msra.mxu0 %v564
    %732 = vmatprep.subr.mxu0 %v569
    %733 = vmatpush1.msra.mxu0 %v568
    %734 = vmatprep.subr.mxu0 %v573
    %735 = vmatpush1.msra.mxu0 %v572
    %736 = vmatprep.subr.mxu0 0.0
    %737 = vmatpush1.msra.mxu0 0.0
    %738 = vmatprep.subr.mxu0 0.0
    %739 = vmatpush1.msra.mxu0 0.0
    %740 = vmatprep.subr.mxu0 0.0
    %741 = vmatpush1.msra.mxu0 0.0
    %742 = vmatprep.subr.mxu0 0.0
    %743 = vmatpush1.msra.mxu0 0.0
    %744 = vmatprep.subr.mxu0 0.0
    %745 = vmatpush1.msra.mxu0 0.0
    %746 = vmatprep.subr.mxu0 0.0
    %747 = vmatpush1.msra.mxu0 0.0
    %748 = vmatprep.subr.mxu0 0.0
    %749 = vmatpush1.msra.mxu0 0.0
    %750 = vmatprep.subr.mxu0 0.0
    %751 = vmatpush1.msra.mxu0 0.0
    %752 = vmatprep.subr.mxu0 0.0
    %753 = vmatpush1.msra.mxu0 0.0
    %754 = vmatprep.subr.mxu0 0.0
    %755 = vmatpush1.msra.mxu0 0.0
    %756 = vmatprep.subr.mxu0 0.0
    %757 = vmatpush1.msra.mxu0 0.0
    %758 = vmatprep.subr.mxu0 0.0
    %759 = vmatpush1.msra.mxu0 0.0
    %760 = vmatprep.subr.mxu0 0.0
    %761 = vmatpush1.msra.mxu0 0.0
    %762 = vmatprep.subr.mxu0 0.0
    %763 = vmatpush1.msra.mxu0 0.0
    %764 = vmatprep.subr.mxu0 0.0
    %765 = vmatpush1.msra.mxu0 0.0
    %766 = vmatprep.subr.mxu0 0.0
    %767 = vmatpush1.msra.mxu0 0.0
    %768 = vmatprep.subr.mxu0 0.0
    %769 = vmatpush1.msra.mxu0 0.0
    %770 = vmatprep.subr.mxu0 0.0
    %771 = vmatpush1.msra.mxu0 0.0
    %772 = vmatprep.subr.mxu0 0.0
    %773 = vmatpush1.msra.mxu0 0.0
    %774 = vmatprep.subr.mxu0 0.0
    %775 = vmatpush1.msra.mxu0 0.0
    %776 = vmatprep.mubr.f32.mxu0 0.0
    %777 = vmatmul.mubr.f32.gmra.mrb[0].mxu0 %v576
    %v778 = vpop.f32.mrb[0].mxu0
    %v779 = vadd.f32 0.0, %v778
    %v780 = vpop.f32.mrb[0].mxu0
    %v781 = vadd.f32 0.0, %v780
    %782 = vmatprep.mubr.f32.mxu0 0.0
    %783 = vmatmul.mubr.f32.gmra.mrb[0].mxu0 %v579
    %v784 = vpop.f32.mrb[0].mxu0
    %v785 = vadd.f32 0.0, %v784
    %v786 = vpop.f32.mrb[0].mxu0
    %v787 = vadd.f32 0.0, %v786
    %788 = vmatprep.mubr.f32.mxu0 0.0
    %789 = vmatmul.mubr.f32.gmra.mrb[0].mxu0 %v582
    %v790 = vpop.f32.mrb[0].mxu0
    %v791 = vadd.f32 0.0, %v790
    %v792 = vpop.f32.mrb[0].mxu0
    %v793 = vadd.f32 0.0, %v792
    %794 = vmatprep.mubr.f32.mxu0 0.0
    %795 = vmatmul.mubr.f32.gmra.mrb[0].mxu0 %v585
    %v796 = vpop.f32.mrb[0].mxu0
    %v797 = vadd.f32 0.0, %v796
    %v798 = vpop.f32.mrb[0].mxu0
    %v799 = vadd.f32 0.0, %v798
    %800 = vmatprep.mubr.f32.mxu0 0.0
    %801 = vmatmul.mubr.f32.gmra.mrb[0].mxu0 %v588
    %v802 = vpop.f32.mrb[0].mxu0
    %v803 = vadd.f32 0.0, %v802
    %v804 = vpop.f32.mrb[0].mxu0
    %v805 = vadd.f32 0.0, %v804
    %806 = vmatprep.mubr.f32.mxu0 0.0
    %807 = vmatmul.mubr.f32.gmra.mrb[0].mxu0 %v591
    %v808 = vpop.f32.mrb[0].mxu0
    %v809 = vadd.f32 0.0, %v808
    %v810 = vpop.f32.mrb[0].mxu0
    %v811 = vadd.f32 0.0, %v810
    %812 = vmatprep.mubr.f32.mxu0 0.0
    %813 = vmatmul.mubr.f32.gmra.mrb[0].mxu0 %v594
    %v814 = vpop.f32.mrb[0].mxu0
    %v815 = vadd.f32 0.0, %v814
    %v816 = vpop.f32.mrb[0].mxu0
    %v817 = vadd.f32 0.0, %v816
    %818 = vmatprep.mubr.f32.mxu0 0.0
    %819 = vmatmul.mubr.f32.gmra.mrb[0].mxu0 %v597
    %v820 = vpop.f32.mrb[0].mxu0
    %v821 = vadd.f32 0.0, %v820
    %v822 = vpop.f32.mrb[0].mxu0
    %v823 = vadd.f32 0.0, %v822
    %824 = vdwg.mxu0
    %v826 = vsel %vm574, %v331, 0
    %v829 = vsel %vm574, %v332, 0
    %v832 = vsel %vm574, %v333, 0
    %v835 = vsel %vm574, %v334, 0
    %v838 = vsel %vm574, %v335, 0
    %v841 = vsel %vm574, %v336, 0
    %v844 = vsel %vm574, %v337, 0
    %v847 = vsel %vm574, %v338, 0
    %849 = vmatprep.subr.mxu0 %v341
    %850 = vmatpush1.msra.mxu0 %v340
    %851 = vmatprep.subr.mxu0 %v345
    %852 = vmatpush1.msra.mxu0 %v344
    %853 = vmatprep.subr.mxu0 %v349
    %854 = vmatpush1.msra.mxu0 %v348
    %855 = vmatprep.subr.mxu0 %v353
    %856 = vmatpush1.msra.mxu0 %v352
    %857 = vmatprep.subr.mxu0 %v357
    %858 = vmatpush1.msra.mxu0 %v356
    %859 = vmatprep.subr.mxu0 %v361
    %860 = vmatpush1.msra.mxu0 %v360
    %861 = vmatprep.subr.mxu0 %v365
    %862 = vmatpush1.msra.mxu0 %v364
    %863 = vmatprep.subr.mxu0 %v369
    %864 = vmatpush1.msra.mxu0 %v368
    %865 = vmatprep.subr.mxu0 %v373
    %866 = vmatpush1.msra.mxu0 %v372
    %867 = vmatprep.subr.mxu0 %v377
    %868 = vmatpush1.msra.mxu0 %v376
    %869 = vmatprep.subr.mxu0 %v381
    %870 = vmatpush1.msra.mxu0 %v380
    %871 = vmatprep.subr.mxu0 %v385
    %872 = vmatpush1.msra.mxu0 %v384
    %873 = vmatprep.subr.mxu0 0.0
    %874 = vmatpush1.msra.mxu0 0.0
    %875 = vmatprep.subr.mxu0 0.0
    %876 = vmatpush1.msra.mxu0 0.0
    %877 = vmatprep.subr.mxu0 0.0
    %878 = vmatpush1.msra.mxu0 0.0
    %879 = vmatprep.subr.mxu0 0.0
    %880 = vmatpush1.msra.mxu0 0.0
    %881 = vmatprep.subr.mxu0 0.0
    %882 = vmatpush1.msra.mxu0 0.0
    %883 = vmatprep.subr.mxu0 0.0
    %884 = vmatpush1.msra.mxu0 0.0
    %885 = vmatprep.subr.mxu0 0.0
    %886 = vmatpush1.msra.mxu0 0.0
    %887 = vmatprep.subr.mxu0 0.0
    %888 = vmatpush1.msra.mxu0 0.0
    %889 = vmatprep.subr.mxu0 0.0
    %890 = vmatpush1.msra.mxu0 0.0
    %891 = vmatprep.subr.mxu0 0.0
    %892 = vmatpush1.msra.mxu0 0.0
    %893 = vmatprep.subr.mxu0 0.0
    %894 = vmatpush1.msra.mxu0 0.0
    %895 = vmatprep.subr.mxu0 0.0
    %896 = vmatpush1.msra.mxu0 0.0
    %897 = vmatprep.subr.mxu0 0.0
    %898 = vmatpush1.msra.mxu0 0.0
    %899 = vmatprep.subr.mxu0 0.0
    %900 = vmatpush1.msra.mxu0 0.0
    %901 = vmatprep.subr.mxu0 0.0
    %902 = vmatpush1.msra.mxu0 0.0
    %903 = vmatprep.subr.mxu0 0.0
    %904 = vmatpush1.msra.mxu0 0.0
    %905 = vmatprep.subr.mxu0 0.0
    %906 = vmatpush1.msra.mxu0 0.0
    %907 = vmatprep.subr.mxu0 0.0
    %908 = vmatpush1.msra.mxu0 0.0
    %909 = vmatprep.subr.mxu0 0.0
    %910 = vmatpush1.msra.mxu0 0.0
    %911 = vmatprep.subr.mxu0 0.0
    %912 = vmatpush1.msra.mxu0 0.0
    %913 = vmatprep.mubr.f32.mxu0 0.0
    %914 = vmatmul.mubr.f32.gmra.mrb[0].mxu0 %v826
    %v915 = vpop.f32.mrb[0].mxu0
    %v916 = vadd.f32 %v666, %v915
    %v917 = vpop.f32.mrb[0].mxu0
    %v918 = vadd.f32 %v668, %v917
    %919 = vmatprep.mubr.f32.mxu0 0.0
    %920 = vmatmul.mubr.f32.gmra.mrb[0].mxu0 %v829
    %v921 = vpop.f32.mrb[0].mxu0
    %v922 = vadd.f32 %v672, %v921
    %v923 = vpop.f32.mrb[0].mxu0
    %v924 = vadd.f32 %v674, %v923
    %925 = vmatprep.mubr.f32.mxu0 0.0
    %926 = vmatmul.mubr.f32.gmra.mrb[0].mxu0 %v832
    %v927 = vpop.f32.mrb[0].mxu0
    %v928 = vadd.f32 %v678, %v927
    %v929 = vpop.f32.mrb[0].mxu0
    %v930 = vadd.f32 %v680, %v929
    %931 = vmatprep.mubr.f32.mxu0 0.0
    %932 = vmatmul.mubr.f32.gmra.mrb[0].mxu0 %v835
    %v933 = vpop.f32.mrb[0].mxu0
    %v934 = vadd.f32 %v684, %v933
    %v935 = vpop.f32.mrb[0].mxu0
    %v936 = vadd.f32 %v686, %v935
    %937 = vmatprep.mubr.f32.mxu0 0.0
    %938 = vmatmul.mubr.f32.gmra.mrb[0].mxu0 %v838
    %v939 = vpop.f32.mrb[0].mxu0
    %v940 = vadd.f32 %v690, %v939
    %v941 = vpop.f32.mrb[0].mxu0
    %v942 = vadd.f32 %v692, %v941
    %943 = vmatprep.mubr.f32.mxu0 0.0
    %944 = vmatmul.mubr.f32.gmra.mrb[0].mxu0 %v841
    %v945 = vpop.f32.mrb[0].mxu0
    %v946 = vadd.f32 %v696, %v945
    %v947 = vpop.f32.mrb[0].mxu0
    %v948 = vadd.f32 %v698, %v947
    %949 = vmatprep.mubr.f32.mxu0 0.0
    %950 = vmatmul.mubr.f32.gmra.mrb[0].mxu0 %v844
    %v951 = vpop.f32.mrb[0].mxu0
    %v952 = vadd.f32 %v702, %v951
    %v953 = vpop.f32.mrb[0].mxu0
    %v954 = vadd.f32 %v704, %v953
    %955 = vmatprep.mubr.f32.mxu0 0.0
    %956 = vmatmul.mubr.f32.gmra.mrb[0].mxu0 %v847
    %v957 = vpop.f32.mrb[0].mxu0
    %v958 = vadd.f32 %v708, %v957
    %v959 = vpop.f32.mrb[0].mxu0
    %v960 = vadd.f32 %v710, %v959
    %961 = vdwg.mxu0
    %962 = vmatprep.subr.mxu0 %v343
    %963 = vmatpush1.msra.mxu0 %v342
    %964 = vmatprep.subr.mxu0 %v347
    %965 = vmatpush1.msra.mxu0 %v346
    %966 = vmatprep.subr.mxu0 %v351
    %967 = vmatpush1.msra.mxu0 %v350
    %968 = vmatprep.subr.mxu0 %v355
    %969 = vmatpush1.msra.mxu0 %v354
    %970 = vmatprep.subr.mxu0 %v359
    %971 = vmatpush1.msra.mxu0 %v358
    %972 = vmatprep.subr.mxu0 %v363
    %973 = vmatpush1.msra.mxu0 %v362
    %974 = vmatprep.subr.mxu0 %v367
    %975 = vmatpush1.msra.mxu0 %v366
    %976 = vmatprep.subr.mxu0 %v371
    %977 = vmatpush1.msra.mxu0 %v370
    %978 = vmatprep.subr.mxu0 %v375
    %979 = vmatpush1.msra.mxu0 %v374
    %980 = vmatprep.subr.mxu0 %v379
    %981 = vmatpush1.msra.mxu0 %v378
    %982 = vmatprep.subr.mxu0 %v383
    %983 = vmatpush1.msra.mxu0 %v382
    %984 = vmatprep.subr.mxu0 %v387
    %985 = vmatpush1.msra.mxu0 %v386
    %986 = vmatprep.subr.mxu0 0.0
    %987 = vmatpush1.msra.mxu0 0.0
    %988 = vmatprep.subr.mxu0 0.0
    %989 = vmatpush1.msra.mxu0 0.0
    %990 = vmatprep.subr.mxu0 0.0
    %991 = vmatpush1.msra.mxu0 0.0
    %992 = vmatprep.subr.mxu0 0.0
    %993 = vmatpush1.msra.mxu0 0.0
    %994 = vmatprep.subr.mxu0 0.0
    %995 = vmatpush1.msra.mxu0 0.0
    %996 = vmatprep.subr.mxu0 0.0
    %997 = vmatpush1.msra.mxu0 0.0
    %998 = vmatprep.subr.mxu0 0.0
    %999 = vmatpush1.msra.mxu0 0.0
    %1000 = vmatprep.subr.mxu0 0.0
    %1001 = vmatpush1.msra.mxu0 0.0
    %1002 = vmatprep.subr.mxu0 0.0
    %1003 = vmatpush1.msra.mxu0 0.0
    %1004 = vmatprep.subr.mxu0 0.0
    %1005 = vmatpush1.msra.mxu0 0.0
    %1006 = vmatprep.subr.mxu0 0.0
    %1007 = vmatpush1.msra.mxu0 0.0
    %1008 = vmatprep.subr.mxu0 0.0
    %1009 = vmatpush1.msra.mxu0 0.0
    %1010 = vmatprep.subr.mxu0 0.0
    %1011 = vmatpush1.msra.mxu0 0.0
    %1012 = vmatprep.subr.mxu0 0.0
    %1013 = vmatpush1.msra.mxu0 0.0
    %1014 = vmatprep.subr.mxu0 0.0
    %1015 = vmatpush1.msra.mxu0 0.0
    %1016 = vmatprep.subr.mxu0 0.0
    %1017 = vmatpush1.msra.mxu0 0.0
    %1018 = vmatprep.subr.mxu0 0.0
    %1019 = vmatpush1.msra.mxu0 0.0
    %1020 = vmatprep.subr.mxu0 0.0
    %1021 = vmatpush1.msra.mxu0 0.0
    %1022 = vmatprep.subr.mxu0 0.0
    %1023 = vmatpush1.msra.mxu0 0.0
    %1024 = vmatprep.subr.mxu0 0.0
    %1025 = vmatpush1.msra.mxu0 0.0
    %1026 = vmatprep.mubr.f32.mxu0 0.0
    %1027 = vmatmul.mubr.f32.gmra.mrb[0].mxu0 %v826
    %v1028 = vpop.f32.mrb[0].mxu0
    %v1029 = vadd.f32 %v779, %v1028
    %v1030 = vpop.f32.mrb[0].mxu0
    %v1031 = vadd.f32 %v781, %v1030
    %1032 = vmatprep.mubr.f32.mxu0 0.0
    %1033 = vmatmul.mubr.f32.gmra.mrb[0].mxu0 %v829
    %v1034 = vpop.f32.mrb[0].mxu0
    %v1035 = vadd.f32 %v785, %v1034
    %v1036 = vpop.f32.mrb[0].mxu0
    %v1037 = vadd.f32 %v787, %v1036
    %1038 = vmatprep.mubr.f32.mxu0 0.0
    %1039 = vmatmul.mubr.f32.gmra.mrb[0].mxu0 %v832
    %v1040 = vpop.f32.mrb[0].mxu0
    %v1041 = vadd.f32 %v791, %v1040
    %v1042 = vpop.f32.mrb[0].mxu0
    %v1043 = vadd.f32 %v793, %v1042
    %1044 = vmatprep.mubr.f32.mxu0 0.0
    %1045 = vmatmul.mubr.f32.gmra.mrb[0].mxu0 %v835
    %v1046 = vpop.f32.mrb[0].mxu0
    %v1047 = vadd.f32 %v797, %v1046
    %v1048 = vpop.f32.mrb[0].mxu0
    %v1049 = vadd.f32 %v799, %v1048
    %1050 = vmatprep.mubr.f32.mxu0 0.0
    %1051 = vmatmul.mubr.f32.gmra.mrb[0].mxu0 %v838
    %v1052 = vpop.f32.mrb[0].mxu0
    %v1053 = vadd.f32 %v803, %v1052
    %v1054 = vpop.f32.mrb[0].mxu0
    %v1055 = vadd.f32 %v805, %v1054
    %1056 = vmatprep.mubr.f32.mxu0 0.0
    %1057 = vmatmul.mubr.f32.gmra.mrb[0].mxu0 %v841
    %v1058 = vpop.f32.mrb[0].mxu0
    %v1059 = vadd.f32 %v809, %v1058
    %v1060 = vpop.f32.mrb[0].mxu0
    %v1061 = vadd.f32 %v811, %v1060
    %1062 = vmatprep.mubr.f32.mxu0 0.0
    %1063 = vmatmul.mubr.f32.gmra.mrb[0].mxu0 %v844
    %v1064 = vpop.f32.mrb[0].mxu0
    %v1065 = vadd.f32 %v815, %v1064
    %v1066 = vpop.f32.mrb[0].mxu0
    %v1067 = vadd.f32 %v817, %v1066
    %1068 = vmatprep.mubr.f32.mxu0 0.0
    %1069 = vmatmul.mubr.f32.gmra.mrb[0].mxu0 %v847
    %v1070 = vpop.f32.mrb[0].mxu0
    %v1071 = vadd.f32 %v821, %v1070
    %v1072 = vpop.f32.mrb[0].mxu0
    %v1073 = vadd.f32 %v823, %v1072
    %1074 = vdwg.mxu0
    %v1075 = vld [vmem:[#allocation5] sm:$0xff]
    %v1076 = vld [vmem:[#allocation5 + $0x8] sm:$0xff]
    %v1077 = vld [vmem:[#allocation5 + $0x10] sm:$0xff]
    %v1078 = vld [vmem:[#allocation5 + $0x18] sm:$0xff]
    %v1079 = vld [vmem:[#allocation5 + $0x20] sm:$0xff]
    %v1080 = vld [vmem:[#allocation5 + $0x28] sm:$0xff]
    %v1081 = vld [vmem:[#allocation5 + $0x30] sm:$0xff]
    %v1082 = vld [vmem:[#allocation5 + $0x38] sm:$0xff]
    %v1084 = vsel %vm396, %v1075, 0
    %v1087 = vsel %vm396, %v1076, 0
    %v1090 = vsel %vm396, %v1077, 0
    %v1093 = vsel %vm396, %v1078, 0
    %v1096 = vsel %vm396, %v1079, 0
    %v1099 = vsel %vm396, %v1080, 0
    %v1102 = vsel %vm396, %v1081, 0
    %v1105 = vsel %vm396, %v1082, 0
    %1107 = vmatprep.subr.mxu0 0.0
    %1108 = vmatpush1.msra.mxu0 %v331
    %1109 = vmatprep.subr.mxu0 0.0
    %1110 = vmatpush1.msra.mxu0 %v332
    %1111 = vmatprep.subr.mxu0 0.0
    %1112 = vmatpush1.msra.mxu0 %v333
    %1113 = vmatprep.subr.mxu0 0.0
    %1114 = vmatpush1.msra.mxu0 %v334
    %1115 = vmatprep.subr.mxu0 0.0
    %1116 = vmatpush1.msra.mxu0 %v335
    %1117 = vmatprep.subr.mxu0 0.0
    %1118 = vmatpush1.msra.mxu0 %v336
    %1119 = vmatprep.subr.mxu0 0.0
    %1120 = vmatpush1.msra.mxu0 %v337
    %1121 = vmatprep.subr.mxu0 0.0
    %1122 = vmatpush1.msra.mxu0 %v338
    %1123 = vmatprep.subr.mxu0 0.0
    %1124 = vmatpush1.msra.mxu0 0.0
    %1125 = vmatprep.subr.mxu0 0.0
    %1126 = vmatpush1.msra.mxu0 0.0
    %1127 = vmatprep.subr.mxu0 0.0
    %1128 = vmatpush1.msra.mxu0 0.0
    %1129 = vmatprep.subr.mxu0 0.0
    %1130 = vmatpush1.msra.mxu0 0.0
    %1131 = vmatprep.subr.mxu0 0.0
    %1132 = vmatpush1.msra.mxu0 0.0
    %1133 = vmatprep.subr.mxu0 0.0
    %1134 = vmatpush1.msra.mxu0 0.0
    %1135 = vmatprep.subr.mxu0 0.0
    %1136 = vmatpush1.msra.mxu0 0.0
    %1137 = vmatprep.subr.mxu0 0.0
    %1138 = vmatpush1.msra.mxu0 0.0
    %1139 = vmatprep.subr.mxu0 0.0
    %1140 = vmatpush1.msra.mxu0 0.0
    %1141 = vmatprep.subr.mxu0 0.0
    %1142 = vmatpush1.msra.mxu0 0.0
    %1143 = vmatprep.subr.mxu0 0.0
    %1144 = vmatpush1.msra.mxu0 0.0
    %1145 = vmatprep.subr.mxu0 0.0
    %1146 = vmatpush1.msra.mxu0 0.0
    %1147 = vmatprep.subr.mxu0 0.0
    %1148 = vmatpush1.msra.mxu0 0.0
    %1149 = vmatprep.subr.mxu0 0.0
    %1150 = vmatpush1.msra.mxu0 0.0
    %1151 = vmatprep.subr.mxu0 0.0
    %1152 = vmatpush1.msra.mxu0 0.0
    %1153 = vmatprep.subr.mxu0 0.0
    %1154 = vmatpush1.msra.mxu0 0.0
    %1155 = vmatprep.subr.mxu0 0.0
    %1156 = vmatpush1.msra.mxu0 0.0
    %1157 = vmatprep.subr.mxu0 0.0
    %1158 = vmatpush1.msra.mxu0 0.0
    %1159 = vmatprep.subr.mxu0 0.0
    %1160 = vmatpush1.msra.mxu0 0.0
    %1161 = vmatprep.subr.mxu0 0.0
    %1162 = vmatpush1.msra.mxu0 0.0
    %1163 = vmatprep.subr.mxu0 0.0
    %1164 = vmatpush1.msra.mxu0 0.0
    %1165 = vmatprep.subr.mxu0 0.0
    %1166 = vmatpush1.msra.mxu0 0.0
    %1167 = vmatprep.subr.mxu0 0.0
    %1168 = vmatpush1.msra.mxu0 0.0
    %1169 = vmatprep.subr.mxu0 0.0
    %1170 = vmatpush1.msra.mxu0 0.0
    %1171 = vmatprep.mubr.f32.mxu0 0.0
    %1172 = vmatmul.mubr.f32.gmra.mrb[0].mxu0 %v1084
    %v1173 = vpop.f32.mrb[0].mxu0
    %v1174 = vadd.f32 0.0, %v1173
    %v1175 = vpop.f32.mrb[0].mxu0
    %1176 = vmatprep.mubr.f32.mxu0 0.0
    %1177 = vmatmul.mubr.f32.gmra.mrb[0].mxu0 %v1087
    %v1178 = vpop.f32.mrb[0].mxu0
    %v1179 = vadd.f32 0.0, %v1178
    %v1180 = vpop.f32.mrb[0].mxu0
    %1181 = vmatprep.mubr.f32.mxu0 0.0
    %1182 = vmatmul.mubr.f32.gmra.mrb[0].mxu0 %v1090
    %v1183 = vpop.f32.mrb[0].mxu0
    %v1184 = vadd.f32 0.0, %v1183
    %v1185 = vpop.f32.mrb[0].mxu0
    %1186 = vmatprep.mubr.f32.mxu0 0.0
    %1187 = vmatmul.mubr.f32.gmra.mrb[0].mxu0 %v1093
    %v1188 = vpop.f32.mrb[0].mxu0
    %v1189 = vadd.f32 0.0, %v1188
    %v1190 = vpop.f32.mrb[0].mxu0
    %1191 = vmatprep.mubr.f32.mxu0 0.0
    %1192 = vmatmul.mubr.f32.gmra.mrb[0].mxu0 %v1096
    %v1193 = vpop.f32.mrb[0].mxu0
    %v1194 = vadd.f32 0.0, %v1193
    %v1195 = vpop.f32.mrb[0].mxu0
    %1196 = vmatprep.mubr.f32.mxu0 0.0
    %1197 = vmatmul.mubr.f32.gmra.mrb[0].mxu0 %v1099
    %v1198 = vpop.f32.mrb[0].mxu0
    %v1199 = vadd.f32 0.0, %v1198
    %v1200 = vpop.f32.mrb[0].mxu0
    %1201 = vmatprep.mubr.f32.mxu0 0.0
    %1202 = vmatmul.mubr.f32.gmra.mrb[0].mxu0 %v1102
    %v1203 = vpop.f32.mrb[0].mxu0
    %v1204 = vadd.f32 0.0, %v1203
    %v1205 = vpop.f32.mrb[0].mxu0
    %1206 = vmatprep.mubr.f32.mxu0 0.0
    %1207 = vmatmul.mubr.f32.gmra.mrb[0].mxu0 %v1105
    %v1208 = vpop.f32.mrb[0].mxu0
    %v1209 = vadd.f32 0.0, %v1208
    %v1210 = vpop.f32.mrb[0].mxu0
    %1211 = vdwg.mxu0
    %s1212 = scalar_lea.vmem %s1, 768
    %v1213 = vld [vmem:[%s1212] sm:$0xff]
    %v1214 = vld [vmem:[%s1212 + $0x8] sm:$0xff]
    %v1215 = vld [vmem:[%s1212 + $0x10] sm:$0xff]
    %v1216 = vld [vmem:[%s1212 + $0x18] sm:$0xff]
    %v1217 = vld [vmem:[%s1212 + $0x20] sm:$0xff]
    %v1218 = vld [vmem:[%s1212 + $0x28] sm:$0xff]
    %v1219 = vld [vmem:[%s1212 + $0x30] sm:$0xff]
    %v1220 = vld [vmem:[%s1212 + $0x38] sm:$0xff]
    %v1221 = vld [vmem:[%s1212 + $0x40] sm:$0xff]
    %v1222 = vld [vmem:[%s1212 + $0x48] sm:$0xff]
    %v1223 = vld [vmem:[%s1212 + $0x50] sm:$0xff]
    %v1224 = vld [vmem:[%s1212 + $0x58] sm:$0xff]
    %v1225 = vld [vmem:[%s1212 + $0x60] sm:$0xff]
    %v1226 = vld [vmem:[%s1212 + $0x68] sm:$0xff]
    %v1227 = vld [vmem:[%s1212 + $0x70] sm:$0xff]
    %v1228 = vld [vmem:[%s1212 + $0x78] sm:$0xff]
    %v1229 = vld [vmem:[%s1212 + $0x80] sm:$0xff]
    %v1230 = vld [vmem:[%s1212 + $0x88] sm:$0xff]
    %v1231 = vld [vmem:[%s1212 + $0x90] sm:$0xff]
    %v1232 = vld [vmem:[%s1212 + $0x98] sm:$0xff]
    %v1233 = vld [vmem:[%s1212 + $0xa0] sm:$0xff]
    %v1234 = vld [vmem:[%s1212 + $0xa8] sm:$0xff]
    %v1235 = vld [vmem:[%s1212 + $0xb0] sm:$0xff]
    %v1236 = vld [vmem:[%s1212 + $0xb8] sm:$0xff]
    %v1237 = vld [vmem:[%s1212 + $0xc0] sm:$0xff]
    %v1238 = vld [vmem:[%s1212 + $0xc8] sm:$0xff]
    %v1239 = vld [vmem:[%s1212 + $0xd0] sm:$0xff]
    %v1240 = vld [vmem:[%s1212 + $0xd8] sm:$0xff]
    %v1241 = vld [vmem:[%s1212 + $0xe0] sm:$0xff]
    %v1242 = vld [vmem:[%s1212 + $0xe8] sm:$0xff]
    %v1243 = vld [vmem:[%s1212 + $0xf0] sm:$0xff]
    %v1244 = vld [vmem:[%s1212 + $0xf8] sm:$0xff]
    %v1245 = vld [vmem:[%s1212 + $0x100] sm:$0xff]
    %v1246 = vld [vmem:[%s1212 + $0x108] sm:$0xff]
    %v1247 = vld [vmem:[%s1212 + $0x110] sm:$0xff]
    %v1248 = vld [vmem:[%s1212 + $0x118] sm:$0xff]
    %v1249 = vld [vmem:[%s1212 + $0x120] sm:$0xff]
    %v1250 = vld [vmem:[%s1212 + $0x128] sm:$0xff]
    %v1251 = vld [vmem:[%s1212 + $0x130] sm:$0xff]
    %v1252 = vld [vmem:[%s1212 + $0x138] sm:$0xff]
    %v1253 = vld [vmem:[%s1212 + $0x140] sm:$0xff]
    %v1254 = vld [vmem:[%s1212 + $0x148] sm:$0xff]
    %v1255 = vld [vmem:[%s1212 + $0x150] sm:$0xff]
    %v1256 = vld [vmem:[%s1212 + $0x158] sm:$0xff]
    %v1257 = vld [vmem:[%s1212 + $0x160] sm:$0xff]
    %v1258 = vld [vmem:[%s1212 + $0x168] sm:$0xff]
    %v1259 = vld [vmem:[%s1212 + $0x170] sm:$0xff]
    %v1260 = vld [vmem:[%s1212 + $0x178] sm:$0xff]
    %v1262 = vsel %vm574, %v1174, 0
    %v1265 = vsel %vm574, %v1179, 0
    %v1268 = vsel %vm574, %v1184, 0
    %v1271 = vsel %vm574, %v1189, 0
    %v1274 = vsel %vm574, %v1194, 0
    %v1277 = vsel %vm574, %v1199, 0
    %v1280 = vsel %vm574, %v1204, 0
    %v1283 = vsel %vm574, %v1209, 0
    %1285 = vmatprep.subr.mxu0 %v1214
    %1286 = vmatpush1.msra.mxu0 %v1213
    %1287 = vmatprep.subr.mxu0 %v1218
    %1288 = vmatpush1.msra.mxu0 %v1217
    %1289 = vmatprep.subr.mxu0 %v1222
    %1290 = vmatpush1.msra.mxu0 %v1221
    %1291 = vmatprep.subr.mxu0 %v1226
    %1292 = vmatpush1.msra.mxu0 %v1225
    %1293 = vmatprep.subr.mxu0 %v1230
    %1294 = vmatpush1.msra.mxu0 %v1229
    %1295 = vmatprep.subr.mxu0 %v1234
    %1296 = vmatpush1.msra.mxu0 %v1233
    %1297 = vmatprep.subr.mxu0 %v1238
    %1298 = vmatpush1.msra.mxu0 %v1237
    %1299 = vmatprep.subr.mxu0 %v1242
    %1300 = vmatpush1.msra.mxu0 %v1241
    %1301 = vmatprep.subr.mxu0 %v1246
    %1302 = vmatpush1.msra.mxu0 %v1245
    %1303 = vmatprep.subr.mxu0 %v1250
    %1304 = vmatpush1.msra.mxu0 %v1249
    %1305 = vmatprep.subr.mxu0 %v1254
    %1306 = vmatpush1.msra.mxu0 %v1253
    %1307 = vmatprep.subr.mxu0 %v1258
    %1308 = vmatpush1.msra.mxu0 %v1257
    %1309 = vmatprep.subr.mxu0 0.0
    %1310 = vmatpush1.msra.mxu0 0.0
    %1311 = vmatprep.subr.mxu0 0.0
    %1312 = vmatpush1.msra.mxu0 0.0
    %1313 = vmatprep.subr.mxu0 0.0
    %1314 = vmatpush1.msra.mxu0 0.0
    %1315 = vmatprep.subr.mxu0 0.0
    %1316 = vmatpush1.msra.mxu0 0.0
    %1317 = vmatprep.subr.mxu0 0.0
    %1318 = vmatpush1.msra.mxu0 0.0
    %1319 = vmatprep.subr.mxu0 0.0
    %1320 = vmatpush1.msra.mxu0 0.0
    %1321 = vmatprep.subr.mxu0 0.0
    %1322 = vmatpush1.msra.mxu0 0.0
    %1323 = vmatprep.subr.mxu0 0.0
    %1324 = vmatpush1.msra.mxu0 0.0
    %1325 = vmatprep.subr.mxu0 0.0
    %1326 = vmatpush1.msra.mxu0 0.0
    %1327 = vmatprep.subr.mxu0 0.0
    %1328 = vmatpush1.msra.mxu0 0.0
    %1329 = vmatprep.subr.mxu0 0.0
    %1330 = vmatpush1.msra.mxu0 0.0
    %1331 = vmatprep.subr.mxu0 0.0
    %1332 = vmatpush1.msra.mxu0 0.0
    %1333 = vmatprep.subr.mxu0 0.0
    %1334 = vmatpush1.msra.mxu0 0.0
    %1335 = vmatprep.subr.mxu0 0.0
    %1336 = vmatpush1.msra.mxu0 0.0
    %1337 = vmatprep.subr.mxu0 0.0
    %1338 = vmatpush1.msra.mxu0 0.0
    %1339 = vmatprep.subr.mxu0 0.0
    %1340 = vmatpush1.msra.mxu0 0.0
    %1341 = vmatprep.subr.mxu0 0.0
    %1342 = vmatpush1.msra.mxu0 0.0
    %1343 = vmatprep.subr.mxu0 0.0
    %1344 = vmatpush1.msra.mxu0 0.0
    %1345 = vmatprep.subr.mxu0 0.0
    %1346 = vmatpush1.msra.mxu0 0.0
    %1347 = vmatprep.subr.mxu0 0.0
    %1348 = vmatpush1.msra.mxu0 0.0
    %1349 = vmatprep.mubr.f32.mxu0 0.0
    %1350 = vmatmul.mubr.f32.gmra.mrb[0].mxu0 %v1262
    %v1351 = vpop.f32.mrb[0].mxu0
    %v1352 = vadd.f32 0.0, %v1351
    %v1353 = vpop.f32.mrb[0].mxu0
    %v1354 = vadd.f32 0.0, %v1353
    %1355 = vmatprep.mubr.f32.mxu0 0.0
    %1356 = vmatmul.mubr.f32.gmra.mrb[0].mxu0 %v1265
    %v1357 = vpop.f32.mrb[0].mxu0
    %v1358 = vadd.f32 0.0, %v1357
    %v1359 = vpop.f32.mrb[0].mxu0
    %v1360 = vadd.f32 0.0, %v1359
    %1361 = vmatprep.mubr.f32.mxu0 0.0
    %1362 = vmatmul.mubr.f32.gmra.mrb[0].mxu0 %v1268
    %v1363 = vpop.f32.mrb[0].mxu0
    %v1364 = vadd.f32 0.0, %v1363
    %v1365 = vpop.f32.mrb[0].mxu0
    %v1366 = vadd.f32 0.0, %v1365
    %1367 = vmatprep.mubr.f32.mxu0 0.0
    %1368 = vmatmul.mubr.f32.gmra.mrb[0].mxu0 %v1271
    %v1369 = vpop.f32.mrb[0].mxu0
    %v1370 = vadd.f32 0.0, %v1369
    %v1371 = vpop.f32.mrb[0].mxu0
    %v1372 = vadd.f32 0.0, %v1371
    %1373 = vmatprep.mubr.f32.mxu0 0.0
    %1374 = vmatmul.mubr.f32.gmra.mrb[0].mxu0 %v1274
    %v1375 = vpop.f32.mrb[0].mxu0
    %v1376 = vadd.f32 0.0, %v1375
    %v1377 = vpop.f32.mrb[0].mxu0
    %v1378 = vadd.f32 0.0, %v1377
    %1379 = vmatprep.mubr.f32.mxu0 0.0
    %1380 = vmatmul.mubr.f32.gmra.mrb[0].mxu0 %v1277
    %v1381 = vpop.f32.mrb[0].mxu0
    %v1382 = vadd.f32 0.0, %v1381
    %v1383 = vpop.f32.mrb[0].mxu0
    %v1384 = vadd.f32 0.0, %v1383
    %1385 = vmatprep.mubr.f32.mxu0 0.0
    %1386 = vmatmul.mubr.f32.gmra.mrb[0].mxu0 %v1280
    %v1387 = vpop.f32.mrb[0].mxu0
    %v1388 = vadd.f32 0.0, %v1387
    %v1389 = vpop.f32.mrb[0].mxu0
    %v1390 = vadd.f32 0.0, %v1389
    %1391 = vmatprep.mubr.f32.mxu0 0.0
    %1392 = vmatmul.mubr.f32.gmra.mrb[0].mxu0 %v1283
    %v1393 = vpop.f32.mrb[0].mxu0
    %v1394 = vadd.f32 0.0, %v1393
    %v1395 = vpop.f32.mrb[0].mxu0
    %v1396 = vadd.f32 0.0, %v1395
    %1397 = vdwg.mxu0
    %1398 = vmatprep.subr.mxu0 %v1216
    %1399 = vmatpush1.msra.mxu0 %v1215
    %1400 = vmatprep.subr.mxu0 %v1220
    %1401 = vmatpush1.msra.mxu0 %v1219
    %1402 = vmatprep.subr.mxu0 %v1224
    %1403 = vmatpush1.msra.mxu0 %v1223
    %1404 = vmatprep.subr.mxu0 %v1228
    %1405 = vmatpush1.msra.mxu0 %v1227
    %1406 = vmatprep.subr.mxu0 %v1232
    %1407 = vmatpush1.msra.mxu0 %v1231
    %1408 = vmatprep.subr.mxu0 %v1236
    %1409 = vmatpush1.msra.mxu0 %v1235
    %1410 = vmatprep.subr.mxu0 %v1240
    %1411 = vmatpush1.msra.mxu0 %v1239
    %1412 = vmatprep.subr.mxu0 %v1244
    %1413 = vmatpush1.msra.mxu0 %v1243
    %1414 = vmatprep.subr.mxu0 %v1248
    %1415 = vmatpush1.msra.mxu0 %v1247
    %1416 = vmatprep.subr.mxu0 %v1252
    %1417 = vmatpush1.msra.mxu0 %v1251
    %1418 = vmatprep.subr.mxu0 %v1256
    %1419 = vmatpush1.msra.mxu0 %v1255
    %1420 = vmatprep.subr.mxu0 %v1260
    %1421 = vmatpush1.msra.mxu0 %v1259
    %1422 = vmatprep.subr.mxu0 0.0
    %1423 = vmatpush1.msra.mxu0 0.0
    %1424 = vmatprep.subr.mxu0 0.0
    %1425 = vmatpush1.msra.mxu0 0.0
    %1426 = vmatprep.subr.mxu0 0.0
    %1427 = vmatpush1.msra.mxu0 0.0
    %1428 = vmatprep.subr.mxu0 0.0
    %1429 = vmatpush1.msra.mxu0 0.0
    %1430 = vmatprep.subr.mxu0 0.0
    %1431 = vmatpush1.msra.mxu0 0.0
    %1432 = vmatprep.subr.mxu0 0.0
    %1433 = vmatpush1.msra.mxu0 0.0
    %1434 = vmatprep.subr.mxu0 0.0
    %1435 = vmatpush1.msra.mxu0 0.0
    %1436 = vmatprep.subr.mxu0 0.0
    %1437 = vmatpush1.msra.mxu0 0.0
    %1438 = vmatprep.subr.mxu0 0.0
    %1439 = vmatpush1.msra.mxu0 0.0
    %1440 = vmatprep.subr.mxu0 0.0
    %1441 = vmatpush1.msra.mxu0 0.0
    %1442 = vmatprep.subr.mxu0 0.0
    %1443 = vmatpush1.msra.mxu0 0.0
    %1444 = vmatprep.subr.mxu0 0.0
    %1445 = vmatpush1.msra.mxu0 0.0
    %1446 = vmatprep.subr.mxu0 0.0
    %1447 = vmatpush1.msra.mxu0 0.0
    %1448 = vmatprep.subr.mxu0 0.0
    %1449 = vmatpush1.msra.mxu0 0.0
    %1450 = vmatprep.subr.mxu0 0.0
    %1451 = vmatpush1.msra.mxu0 0.0
    %1452 = vmatprep.subr.mxu0 0.0
    %1453 = vmatpush1.msra.mxu0 0.0
    %1454 = vmatprep.subr.mxu0 0.0
    %1455 = vmatpush1.msra.mxu0 0.0
    %1456 = vmatprep.subr.mxu0 0.0
    %1457 = vmatpush1.msra.mxu0 0.0
    %1458 = vmatprep.subr.mxu0 0.0
    %1459 = vmatpush1.msra.mxu0 0.0
    %1460 = vmatprep.subr.mxu0 0.0
    %1461 = vmatpush1.msra.mxu0 0.0
    %1462 = vmatprep.mubr.f32.mxu0 0.0
    %1463 = vmatmul.mubr.f32.gmra.mrb[0].mxu0 %v1262
    %v1464 = vpop.f32.mrb[0].mxu0
    %v1465 = vadd.f32 0.0, %v1464
    %v1466 = vpop.f32.mrb[0].mxu0
    %v1467 = vadd.f32 0.0, %v1466
    %1468 = vmatprep.mubr.f32.mxu0 0.0
    %1469 = vmatmul.mubr.f32.gmra.mrb[0].mxu0 %v1265
    %v1470 = vpop.f32.mrb[0].mxu0
    %v1471 = vadd.f32 0.0, %v1470
    %v1472 = vpop.f32.mrb[0].mxu0
    %v1473 = vadd.f32 0.0, %v1472
    %1474 = vmatprep.mubr.f32.mxu0 0.0
    %1475 = vmatmul.mubr.f32.gmra.mrb[0].mxu0 %v1268
    %v1476 = vpop.f32.mrb[0].mxu0
    %v1477 = vadd.f32 0.0, %v1476
    %v1478 = vpop.f32.mrb[0].mxu0
    %v1479 = vadd.f32 0.0, %v1478
    %1480 = vmatprep.mubr.f32.mxu0 0.0
    %1481 = vmatmul.mubr.f32.gmra.mrb[0].mxu0 %v1271
    %v1482 = vpop.f32.mrb[0].mxu0
    %v1483 = vadd.f32 0.0, %v1482
    %v1484 = vpop.f32.mrb[0].mxu0
    %v1485 = vadd.f32 0.0, %v1484
    %1486 = vmatprep.mubr.f32.mxu0 0.0
    %1487 = vmatmul.mubr.f32.gmra.mrb[0].mxu0 %v1274
    %v1488 = vpop.f32.mrb[0].mxu0
    %v1489 = vadd.f32 0.0, %v1488
    %v1490 = vpop.f32.mrb[0].mxu0
    %v1491 = vadd.f32 0.0, %v1490
    %1492 = vmatprep.mubr.f32.mxu0 0.0
    %1493 = vmatmul.mubr.f32.gmra.mrb[0].mxu0 %v1277
    %v1494 = vpop.f32.mrb[0].mxu0
    %v1495 = vadd.f32 0.0, %v1494
    %v1496 = vpop.f32.mrb[0].mxu0
    %v1497 = vadd.f32 0.0, %v1496
    %1498 = vmatprep.mubr.f32.mxu0 0.0
    %1499 = vmatmul.mubr.f32.gmra.mrb[0].mxu0 %v1280
    %v1500 = vpop.f32.mrb[0].mxu0
    %v1501 = vadd.f32 0.0, %v1500
    %v1502 = vpop.f32.mrb[0].mxu0
    %v1503 = vadd.f32 0.0, %v1502
    %1504 = vmatprep.mubr.f32.mxu0 0.0
    %1505 = vmatmul.mubr.f32.gmra.mrb[0].mxu0 %v1283
    %v1506 = vpop.f32.mrb[0].mxu0
    %v1507 = vadd.f32 0.0, %v1506
    %v1508 = vpop.f32.mrb[0].mxu0
    %v1509 = vadd.f32 0.0, %v1508
    %1510 = vdwg.mxu0
    %v1511 = vadd.f32 %v916, %v1352
    %v1512 = vadd.f32 %v918, %v1354
    %v1513 = vadd.f32 %v1029, %v1465
    %v1514 = vadd.f32 %v1031, %v1467
    %v1515 = vadd.f32 %v922, %v1358
    %v1516 = vadd.f32 %v924, %v1360
    %v1517 = vadd.f32 %v1035, %v1471
    %v1518 = vadd.f32 %v1037, %v1473
    %v1519 = vadd.f32 %v928, %v1364
    %v1520 = vadd.f32 %v930, %v1366
    %v1521 = vadd.f32 %v1041, %v1477
    %v1522 = vadd.f32 %v1043, %v1479
    %v1523 = vadd.f32 %v934, %v1370
    %v1524 = vadd.f32 %v936, %v1372
    %v1525 = vadd.f32 %v1047, %v1483
    %v1526 = vadd.f32 %v1049, %v1485
    %v1527 = vadd.f32 %v940, %v1376
    %v1528 = vadd.f32 %v942, %v1378
    %v1529 = vadd.f32 %v1053, %v1489
    %v1530 = vadd.f32 %v1055, %v1491
    %v1531 = vadd.f32 %v946, %v1382
    %v1532 = vadd.f32 %v948, %v1384
    %v1533 = vadd.f32 %v1059, %v1495
    %v1534 = vadd.f32 %v1061, %v1497
    %v1535 = vadd.f32 %v952, %v1388
    %v1536 = vadd.f32 %v954, %v1390
    %v1537 = vadd.f32 %v1065, %v1501
    %v1538 = vadd.f32 %v1067, %v1503
    %v1539 = vadd.f32 %v958, %v1394
    %v1540 = vadd.f32 %v960, %v1396
    %v1541 = vadd.f32 %v1071, %v1507
    %v1542 = vadd.f32 %v1073, %v1509
    %v1543 = vld [vmem:[%s4] sm:$0xff]
    %v1544 = vld [vmem:[%s4 + $0x8] sm:$0xff]
    %v1545 = vld [vmem:[%s4 + $0x10] sm:$0xff]
    %v1546 = vld [vmem:[%s4 + $0x18] sm:$0xff]
    %v1547 = vld [vmem:[%s4 + $0x20] sm:$0xff]
    %v1548 = vld [vmem:[%s4 + $0x28] sm:$0xff]
    %v1549 = vld [vmem:[%s4 + $0x30] sm:$0xff]
    %v1550 = vld [vmem:[%s4 + $0x38] sm:$0xff]
    %v1551 = vld [vmem:[%s4 + $0x40] sm:$0xff]
    %v1552 = vld [vmem:[%s4 + $0x48] sm:$0xff]
    %v1553 = vld [vmem:[%s4 + $0x50] sm:$0xff]
    %v1554 = vld [vmem:[%s4 + $0x58] sm:$0xff]
    %v1555 = vld [vmem:[%s4 + $0x60] sm:$0xff]
    %v1556 = vld [vmem:[%s4 + $0x68] sm:$0xff]
    %v1557 = vld [vmem:[%s4 + $0x70] sm:$0xff]
    %v1558 = vld [vmem:[%s4 + $0x78] sm:$0xff]
    %v1559 = vld [vmem:[%s4 + $0x80] sm:$0xff]
    %v1560 = vld [vmem:[%s4 + $0x88] sm:$0xff]
    %v1561 = vld [vmem:[%s4 + $0x90] sm:$0xff]
    %v1562 = vld [vmem:[%s4 + $0x98] sm:$0xff]
    %v1563 = vld [vmem:[%s4 + $0xa0] sm:$0xff]
    %v1564 = vld [vmem:[%s4 + $0xa8] sm:$0xff]
    %v1565 = vld [vmem:[%s4 + $0xb0] sm:$0xff]
    %v1566 = vld [vmem:[%s4 + $0xb8] sm:$0xff]
    %v1567 = vld [vmem:[%s4 + $0xc0] sm:$0xff]
    %v1568 = vld [vmem:[%s4 + $0xc8] sm:$0xff]
    %v1569 = vld [vmem:[%s4 + $0xd0] sm:$0xff]
    %v1570 = vld [vmem:[%s4 + $0xd8] sm:$0xff]
    %v1571 = vld [vmem:[%s4 + $0xe0] sm:$0xff]
    %v1572 = vld [vmem:[%s4 + $0xe8] sm:$0xff]
    %v1573 = vld [vmem:[%s4 + $0xf0] sm:$0xff]
    %v1574 = vld [vmem:[%s4 + $0xf8] sm:$0xff]
    %v1575 = vld [vmem:[%s4 + $0x100] sm:$0xff]
    %v1576 = vld [vmem:[%s4 + $0x108] sm:$0xff]
    %v1577 = vld [vmem:[%s4 + $0x110] sm:$0xff]
    %v1578 = vld [vmem:[%s4 + $0x118] sm:$0xff]
    %v1579 = vld [vmem:[%s4 + $0x120] sm:$0xff]
    %v1580 = vld [vmem:[%s4 + $0x128] sm:$0xff]
    %v1581 = vld [vmem:[%s4 + $0x130] sm:$0xff]
    %v1582 = vld [vmem:[%s4 + $0x138] sm:$0xff]
    %v1583 = vld [vmem:[%s4 + $0x140] sm:$0xff]
    %v1584 = vld [vmem:[%s4 + $0x148] sm:$0xff]
    %v1585 = vld [vmem:[%s4 + $0x150] sm:$0xff]
    %v1586 = vld [vmem:[%s4 + $0x158] sm:$0xff]
    %v1587 = vld [vmem:[%s4 + $0x160] sm:$0xff]
    %v1588 = vld [vmem:[%s4 + $0x168] sm:$0xff]
    %v1589 = vld [vmem:[%s4 + $0x170] sm:$0xff]
    %v1590 = vld [vmem:[%s4 + $0x178] sm:$0xff]
    %v1591 = vld [vmem:[%s4 + $0x180] sm:$0xff]
    %v1592 = vld [vmem:[%s4 + $0x188] sm:$0xff]
    %v1593 = vld [vmem:[%s4 + $0x190] sm:$0xff]
    %v1594 = vld [vmem:[%s4 + $0x198] sm:$0xff]
    %v1595 = vld [vmem:[%s4 + $0x1a0] sm:$0xff]
    %v1596 = vld [vmem:[%s4 + $0x1a8] sm:$0xff]
    %v1597 = vld [vmem:[%s4 + $0x1b0] sm:$0xff]
    %v1598 = vld [vmem:[%s4 + $0x1b8] sm:$0xff]
    %v1599 = vld [vmem:[%s4 + $0x1c0] sm:$0xff]
    %v1600 = vld [vmem:[%s4 + $0x1c8] sm:$0xff]
    %v1601 = vld [vmem:[%s4 + $0x1d0] sm:$0xff]
    %v1602 = vld [vmem:[%s4 + $0x1d8] sm:$0xff]
    %v1603 = vld [vmem:[%s4 + $0x1e0] sm:$0xff]
    %v1604 = vld [vmem:[%s4 + $0x1e8] sm:$0xff]
    %v1605 = vld [vmem:[%s4 + $0x1f0] sm:$0xff]
    %v1606 = vld [vmem:[%s4 + $0x1f8] sm:$0xff]
    %v1607 = vld [vmem:[#allocation7] sm:$0xff]
    %v1608 = vld [vmem:[#allocation7 + $0x8] sm:$0xff]
    %v1609 = vld [vmem:[#allocation7 + $0x10] sm:$0xff]
    %v1610 = vld [vmem:[#allocation7 + $0x18] sm:$0xff]
    %v1611 = vld [vmem:[#allocation7 + $0x20] sm:$0xff]
    %v1612 = vld [vmem:[#allocation7 + $0x28] sm:$0xff]
    %v1613 = vld [vmem:[#allocation7 + $0x30] sm:$0xff]
    %v1614 = vld [vmem:[#allocation7 + $0x38] sm:$0xff]
    %v1615 = vld [vmem:[#allocation8] sm:$0xf]
    %v1616 = vld [vmem:[#allocation10] sm:$0xf]
    %v1617 = vadd.f32 %v1511, %v1515
    %v1618 = vadd.f32 %v1617, %v1519
    %v1619 = vadd.f32 %v1618, %v1523
    %v1620 = vadd.f32 %v1619, %v1527
    %v1621 = vadd.f32 %v1620, %v1531
    %v1622 = vadd.f32 %v1621, %v1535
    %v1623 = vadd.f32 %v1622, %v1539
    %v1624 = vrot.slane %v1623, 4
    %v1625 = vadd.f32 %v1623, %v1624
    %v1626 = vrot.slane %v1625, 2
    %v1627 = vadd.f32 %v1625, %v1626
    %v1628 = vrot.slane %v1627, 1
    %v1629 = vadd.f32 %v1627, %v1628
    %v1630 = vadd.f32 %v1512, %v1516
    %v1631 = vadd.f32 %v1630, %v1520
    %v1632 = vadd.f32 %v1631, %v1524
    %v1633 = vadd.f32 %v1632, %v1528
    %v1634 = vadd.f32 %v1633, %v1532
    %v1635 = vadd.f32 %v1634, %v1536
    %v1636 = vadd.f32 %v1635, %v1540
    %v1637 = vrot.slane %v1636, 4
    %v1638 = vadd.f32 %v1636, %v1637
    %v1639 = vrot.slane %v1638, 2
    %v1640 = vadd.f32 %v1638, %v1639
    %v1641 = vrot.slane %v1640, 1
    %v1642 = vadd.f32 %v1640, %v1641
    %v1643 = vadd.f32 %v1513, %v1517
    %v1644 = vadd.f32 %v1643, %v1521
    %v1645 = vadd.f32 %v1644, %v1525
    %v1646 = vadd.f32 %v1645, %v1529
    %v1647 = vadd.f32 %v1646, %v1533
    %v1648 = vadd.f32 %v1647, %v1537
    %v1649 = vadd.f32 %v1648, %v1541
    %v1650 = vrot.slane %v1649, 4
    %v1651 = vadd.f32 %v1649, %v1650
    %v1652 = vrot.slane %v1651, 2
    %v1653 = vadd.f32 %v1651, %v1652
    %v1654 = vrot.slane %v1653, 1
    %v1655 = vadd.f32 %v1653, %v1654
    %v1656 = vadd.f32 %v1514, %v1518
    %v1657 = vadd.f32 %v1656, %v1522
    %v1658 = vadd.f32 %v1657, %v1526
    %v1659 = vadd.f32 %v1658, %v1530
    %v1660 = vadd.f32 %v1659, %v1534
    %v1661 = vadd.f32 %v1660, %v1538
    %v1662 = vadd.f32 %v1661, %v1542
    %v1663 = vrot.slane %v1662, 4
    %v1664 = vadd.f32 %v1662, %v1663
    %v1665 = vrot.slane %v1664, 2
    %v1666 = vadd.f32 %v1664, %v1665
    %v1667 = vrot.slane %v1666, 1
    %v1668 = vadd.f32 %v1666, %v1667
    %1669 = vmatprep.subr.mxu0 0.0
    %1670 = vmatpush1.msra.mxu0 %v1543
    %1671 = vmatprep.subr.mxu0 0.0
    %1672 = vmatpush1.msra.mxu0 %v1544
    %1673 = vmatprep.subr.mxu0 0.0
    %1674 = vmatpush1.msra.mxu0 %v1545
    %1675 = vmatprep.subr.mxu0 0.0
    %1676 = vmatpush1.msra.mxu0 %v1546
    %1677 = vmatprep.subr.mxu0 0.0
    %1678 = vmatpush1.msra.mxu0 %v1547
    %1679 = vmatprep.subr.mxu0 0.0
    %1680 = vmatpush1.msra.mxu0 %v1548
    %1681 = vmatprep.subr.mxu0 0.0
    %1682 = vmatpush1.msra.mxu0 %v1549
    %1683 = vmatprep.subr.mxu0 0.0
    %1684 = vmatpush1.msra.mxu0 %v1550
    %1685 = vmatprep.subr.mxu0 0.0
    %1686 = vmatpush1.msra.mxu0 %v1551
    %1687 = vmatprep.subr.mxu0 0.0
    %1688 = vmatpush1.msra.mxu0 %v1552
    %1689 = vmatprep.subr.mxu0 0.0
    %1690 = vmatpush1.msra.mxu0 %v1553
    %1691 = vmatprep.subr.mxu0 0.0
    %1692 = vmatpush1.msra.mxu0 %v1554
    %1693 = vmatprep.subr.mxu0 0.0
    %1694 = vmatpush1.msra.mxu0 %v1555
    %1695 = vmatprep.subr.mxu0 0.0
    %1696 = vmatpush1.msra.mxu0 %v1556
    %1697 = vmatprep.subr.mxu0 0.0
    %1698 = vmatpush1.msra.mxu0 %v1557
    %1699 = vmatprep.subr.mxu0 0.0
    %1700 = vmatpush1.msra.mxu0 %v1558
    %1701 = vmatprep.subr.mxu0 0.0
    %1702 = vmatpush1.msra.mxu0 %v1559
    %1703 = vmatprep.subr.mxu0 0.0
    %1704 = vmatpush1.msra.mxu0 %v1560
    %1705 = vmatprep.subr.mxu0 0.0
    %1706 = vmatpush1.msra.mxu0 %v1561
    %1707 = vmatprep.subr.mxu0 0.0
    %1708 = vmatpush1.msra.mxu0 %v1562
    %1709 = vmatprep.subr.mxu0 0.0
    %1710 = vmatpush1.msra.mxu0 %v1563
    %1711 = vmatprep.subr.mxu0 0.0
    %1712 = vmatpush1.msra.mxu0 %v1564
    %1713 = vmatprep.subr.mxu0 0.0
    %1714 = vmatpush1.msra.mxu0 %v1565
    %1715 = vmatprep.subr.mxu0 0.0
    %1716 = vmatpush1.msra.mxu0 %v1566
    %1717 = vmatprep.subr.mxu0 0.0
    %1718 = vmatpush1.msra.mxu0 %v1567
    %1719 = vmatprep.subr.mxu0 0.0
    %1720 = vmatpush1.msra.mxu0 %v1568
    %1721 = vmatprep.subr.mxu0 0.0
    %1722 = vmatpush1.msra.mxu0 %v1569
    %1723 = vmatprep.subr.mxu0 0.0
    %1724 = vmatpush1.msra.mxu0 %v1570
    %1725 = vmatprep.subr.mxu0 0.0
    %1726 = vmatpush1.msra.mxu0 %v1571
    %1727 = vmatprep.subr.mxu0 0.0
    %1728 = vmatpush1.msra.mxu0 %v1572
    %1729 = vmatprep.subr.mxu0 0.0
    %1730 = vmatpush1.msra.mxu0 %v1573
    %1731 = vmatprep.subr.mxu0 0.0
    %1732 = vmatpush1.msra.mxu0 %v1574
    %1733 = vmatprep.mubr.f32.mxu0 %v1642
    %1734 = vmatmul.mubr.f32.gmra.mrb[0].mxu0 %v1629
    %v1735 = vpop.f32.mrb[0].mxu0
    %v1736 = vadd.f32 0.0, %v1735
    %v1737 = vpop.f32.mrb[0].mxu0
    %1738 = vdwg.mxu0
    %1739 = vmatprep.subr.mxu0 0.0
    %1740 = vmatpush1.msra.mxu0 %v1575
    %1741 = vmatprep.subr.mxu0 0.0
    %1742 = vmatpush1.msra.mxu0 %v1576
    %1743 = vmatprep.subr.mxu0 0.0
    %1744 = vmatpush1.msra.mxu0 %v1577
    %1745 = vmatprep.subr.mxu0 0.0
    %1746 = vmatpush1.msra.mxu0 %v1578
    %1747 = vmatprep.subr.mxu0 0.0
    %1748 = vmatpush1.msra.mxu0 %v1579
    %1749 = vmatprep.subr.mxu0 0.0
    %1750 = vmatpush1.msra.mxu0 %v1580
    %1751 = vmatprep.subr.mxu0 0.0
    %1752 = vmatpush1.msra.mxu0 %v1581
    %1753 = vmatprep.subr.mxu0 0.0
    %1754 = vmatpush1.msra.mxu0 %v1582
    %1755 = vmatprep.subr.mxu0 0.0
    %1756 = vmatpush1.msra.mxu0 %v1583
    %1757 = vmatprep.subr.mxu0 0.0
    %1758 = vmatpush1.msra.mxu0 %v1584
    %1759 = vmatprep.subr.mxu0 0.0
    %1760 = vmatpush1.msra.mxu0 %v1585
    %1761 = vmatprep.subr.mxu0 0.0
    %1762 = vmatpush1.msra.mxu0 %v1586
    %1763 = vmatprep.subr.mxu0 0.0
    %1764 = vmatpush1.msra.mxu0 %v1587
    %1765 = vmatprep.subr.mxu0 0.0
    %1766 = vmatpush1.msra.mxu0 %v1588
    %1767 = vmatprep.subr.mxu0 0.0
    %1768 = vmatpush1.msra.mxu0 %v1589
    %1769 = vmatprep.subr.mxu0 0.0
    %1770 = vmatpush1.msra.mxu0 %v1590
    %1771 = vmatprep.subr.mxu0 0.0
    %1772 = vmatpush1.msra.mxu0 %v1591
    %1773 = vmatprep.subr.mxu0 0.0
    %1774 = vmatpush1.msra.mxu0 %v1592
    %1775 = vmatprep.subr.mxu0 0.0
    %1776 = vmatpush1.msra.mxu0 %v1593
    %1777 = vmatprep.subr.mxu0 0.0
    %1778 = vmatpush1.msra.mxu0 %v1594
    %1779 = vmatprep.subr.mxu0 0.0
    %1780 = vmatpush1.msra.mxu0 %v1595
    %1781 = vmatprep.subr.mxu0 0.0
    %1782 = vmatpush1.msra.mxu0 %v1596
    %1783 = vmatprep.subr.mxu0 0.0
    %1784 = vmatpush1.msra.mxu0 %v1597
    %1785 = vmatprep.subr.mxu0 0.0
    %1786 = vmatpush1.msra.mxu0 %v1598
    %1787 = vmatprep.subr.mxu0 0.0
    %1788 = vmatpush1.msra.mxu0 %v1599
    %1789 = vmatprep.subr.mxu0 0.0
    %1790 = vmatpush1.msra.mxu0 %v1600
    %1791 = vmatprep.subr.mxu0 0.0
    %1792 = vmatpush1.msra.mxu0 %v1601
    %1793 = vmatprep.subr.mxu0 0.0
    %1794 = vmatpush1.msra.mxu0 %v1602
    %1795 = vmatprep.subr.mxu0 0.0
    %1796 = vmatpush1.msra.mxu0 %v1603
    %1797 = vmatprep.subr.mxu0 0.0
    %1798 = vmatpush1.msra.mxu0 %v1604
    %1799 = vmatprep.subr.mxu0 0.0
    %1800 = vmatpush1.msra.mxu0 %v1605
    %1801 = vmatprep.subr.mxu0 0.0
    %1802 = vmatpush1.msra.mxu0 %v1606
    %1803 = vmatprep.mubr.f32.mxu0 %v1668
    %1804 = vmatmul.mubr.f32.gmra.mrb[0].mxu0 %v1655
    %v1805 = vpop.f32.mrb[0].mxu0
    %v1806 = vadd.f32 %v1736, %v1805
    %v1807 = vpop.f32.mrb[0].mxu0
    %1808 = vdwg.mxu0
    %v1809 = vmul.f32 %v1806, 0.00048828125
    %vm1810 = vcmask 130048
    %v1812 = vsel %vm1810, %v1809, 0
    %1814 = vmatprep.subr.mxu0 %v1608
    %1815 = vmatpush1.msra.mxu0 %v1607
    %1816 = vmatprep.subr.mxu0 %v1612
    %1817 = vmatpush1.msra.mxu0 %v1611
    %1818 = vmatprep.subr.mxu0 0.0
    %1819 = vmatpush1.msra.mxu0 0.0
    %1820 = vmatprep.subr.mxu0 0.0
    %1821 = vmatpush1.msra.mxu0 0.0
    %1822 = vmatprep.subr.mxu0 0.0
    %1823 = vmatpush1.msra.mxu0 0.0
    %1824 = vmatprep.subr.mxu0 0.0
    %1825 = vmatpush1.msra.mxu0 0.0
    %1826 = vmatprep.subr.mxu0 0.0
    %1827 = vmatpush1.msra.mxu0 0.0
    %1828 = vmatprep.subr.mxu0 0.0
    %1829 = vmatpush1.msra.mxu0 0.0
    %1830 = vmatprep.subr.mxu0 0.0
    %1831 = vmatpush1.msra.mxu0 0.0
    %1832 = vmatprep.subr.mxu0 0.0
    %1833 = vmatpush1.msra.mxu0 0.0
    %1834 = vmatprep.subr.mxu0 0.0
    %1835 = vmatpush1.msra.mxu0 0.0
    %1836 = vmatprep.subr.mxu0 0.0
    %1837 = vmatpush1.msra.mxu0 0.0
    %1838 = vmatprep.subr.mxu0 0.0
    %1839 = vmatpush1.msra.mxu0 0.0
    %1840 = vmatprep.subr.mxu0 0.0
    %1841 = vmatpush1.msra.mxu0 0.0
    %1842 = vmatprep.subr.mxu0 0.0
    %1843 = vmatpush1.msra.mxu0 0.0
    %1844 = vmatprep.subr.mxu0 0.0
    %1845 = vmatpush1.msra.mxu0 0.0
    %1846 = vmatprep.subr.mxu0 0.0
    %1847 = vmatpush1.msra.mxu0 0.0
    %1848 = vmatprep.subr.mxu0 0.0
    %1849 = vmatpush1.msra.mxu0 0.0
    %1850 = vmatprep.subr.mxu0 0.0
    %1851 = vmatpush1.msra.mxu0 0.0
    %1852 = vmatprep.subr.mxu0 0.0
    %1853 = vmatpush1.msra.mxu0 0.0
    %1854 = vmatprep.subr.mxu0 0.0
    %1855 = vmatpush1.msra.mxu0 0.0
    %1856 = vmatprep.subr.mxu0 0.0
    %1857 = vmatpush1.msra.mxu0 0.0
    %1858 = vmatprep.subr.mxu0 0.0
    %1859 = vmatpush1.msra.mxu0 0.0
    %1860 = vmatprep.subr.mxu0 0.0
    %1861 = vmatpush1.msra.mxu0 0.0
    %1862 = vmatprep.subr.mxu0 0.0
    %1863 = vmatpush1.msra.mxu0 0.0
    %1864 = vmatprep.subr.mxu0 0.0
    %1865 = vmatpush1.msra.mxu0 0.0
    %1866 = vmatprep.subr.mxu0 0.0
    %1867 = vmatpush1.msra.mxu0 0.0
    %1868 = vmatprep.subr.mxu0 0.0
    %1869 = vmatpush1.msra.mxu0 0.0
    %1870 = vmatprep.subr.mxu0 0.0
    %1871 = vmatpush1.msra.mxu0 0.0
    %1872 = vmatprep.subr.mxu0 0.0
    %1873 = vmatpush1.msra.mxu0 0.0
    %1874 = vmatprep.subr.mxu0 0.0
    %1875 = vmatpush1.msra.mxu0 0.0
    %1876 = vmatprep.subr.mxu0 0.0
    %1877 = vmatpush1.msra.mxu0 0.0
    %1878 = vmatprep.mubr.f32.mxu0 0.0
    %1879 = vmatmul.mubr.f32.gmra.mrb[0].mxu0 %v1812
    %v1880 = vpop.f32.mrb[0].mxu0
    %v1881 = vadd.f32 0.0, %v1880
    %v1882 = vpop.f32.mrb[0].mxu0
    %v1883 = vadd.f32 0.0, %v1882
    %1884 = vdwg.mxu0
    %1885 = vmatprep.subr.mxu0 %v1610
    %1886 = vmatpush1.msra.mxu0 %v1609
    %1887 = vmatprep.subr.mxu0 %v1614
    %1888 = vmatpush1.msra.mxu0 %v1613
    %1889 = vmatprep.subr.mxu0 0.0
    %1890 = vmatpush1.msra.mxu0 0.0
    %1891 = vmatprep.subr.mxu0 0.0
    %1892 = vmatpush1.msra.mxu0 0.0
    %1893 = vmatprep.subr.mxu0 0.0
    %1894 = vmatpush1.msra.mxu0 0.0
    %1895 = vmatprep.subr.mxu0 0.0
    %1896 = vmatpush1.msra.mxu0 0.0
    %1897 = vmatprep.subr.mxu0 0.0
    %1898 = vmatpush1.msra.mxu0 0.0
    %1899 = vmatprep.subr.mxu0 0.0
    %1900 = vmatpush1.msra.mxu0 0.0
    %1901 = vmatprep.subr.mxu0 0.0
    %1902 = vmatpush1.msra.mxu0 0.0
    %1903 = vmatprep.subr.mxu0 0.0
    %1904 = vmatpush1.msra.mxu0 0.0
    %1905 = vmatprep.subr.mxu0 0.0
    %1906 = vmatpush1.msra.mxu0 0.0
    %1907 = vmatprep.subr.mxu0 0.0
    %1908 = vmatpush1.msra.mxu0 0.0
    %1909 = vmatprep.subr.mxu0 0.0
    %1910 = vmatpush1.msra.mxu0 0.0
    %1911 = vmatprep.subr.mxu0 0.0
    %1912 = vmatpush1.msra.mxu0 0.0
    %1913 = vmatprep.subr.mxu0 0.0
    %1914 = vmatpush1.msra.mxu0 0.0
    %1915 = vmatprep.subr.mxu0 0.0
    %1916 = vmatpush1.msra.mxu0 0.0
    %1917 = vmatprep.subr.mxu0 0.0
    %1918 = vmatpush1.msra.mxu0 0.0
    %1919 = vmatprep.subr.mxu0 0.0
    %1920 = vmatpush1.msra.mxu0 0.0
    %1921 = vmatprep.subr.mxu0 0.0
    %1922 = vmatpush1.msra.mxu0 0.0
    %1923 = vmatprep.subr.mxu0 0.0
    %1924 = vmatpush1.msra.mxu0 0.0
    %1925 = vmatprep.subr.mxu0 0.0
    %1926 = vmatpush1.msra.mxu0 0.0
    %1927 = vmatprep.subr.mxu0 0.0
    %1928 = vmatpush1.msra.mxu0 0.0
    %1929 = vmatprep.subr.mxu0 0.0
    %1930 = vmatpush1.msra.mxu0 0.0
    %1931 = vmatprep.subr.mxu0 0.0
    %1932 = vmatpush1.msra.mxu0 0.0
    %1933 = vmatprep.subr.mxu0 0.0
    %1934 = vmatpush1.msra.mxu0 0.0
    %1935 = vmatprep.subr.mxu0 0.0
    %1936 = vmatpush1.msra.mxu0 0.0
    %1937 = vmatprep.subr.mxu0 0.0
    %1938 = vmatpush1.msra.mxu0 0.0
    %1939 = vmatprep.subr.mxu0 0.0
    %1940 = vmatpush1.msra.mxu0 0.0
    %1941 = vmatprep.subr.mxu0 0.0
    %1942 = vmatpush1.msra.mxu0 0.0
    %1943 = vmatprep.subr.mxu0 0.0
    %1944 = vmatpush1.msra.mxu0 0.0
    %1945 = vmatprep.subr.mxu0 0.0
    %1946 = vmatpush1.msra.mxu0 0.0
    %1947 = vmatprep.subr.mxu0 0.0
    %1948 = vmatpush1.msra.mxu0 0.0
    %1949 = vmatprep.mubr.f32.mxu0 0.0
    %1950 = vmatmul.mubr.f32.gmra.mrb[0].mxu0 %v1812
    %v1951 = vpop.f32.mrb[0].mxu0
    %v1952 = vadd.f32 0.0, %v1951
    %v1953 = vpop.f32.mrb[0].mxu0
    %v1954 = vadd.f32 0.0, %v1953
    %1955 = vdwg.mxu0
    %v1956 = vlaneseq
    %v1957 = vshrl.u32 %v1956, 7
    %v1958 = vsub.s32 0, %v1957
    %v1959 = vrot.slane %v1881, %v1958
    %v1960 = vlaneseq
    %v1961 = vshrl.u32 %v1960, 7
    %v1962 = vsub.s32 0, %v1961
    %v1963 = vrot.slane %v1883, %v1962
    %v1964 = vlaneseq
    %v1965 = vshrl.u32 %v1964, 7
    %v1966 = vsub.s32 0, %v1965
    %v1967 = vrot.slane %v1952, %v1966
    %v1968 = vlaneseq
    %v1969 = vshrl.u32 %v1968, 7
    %v1970 = vsub.s32 0, %v1969
    %v1971 = vrot.slane %v1954, %v1970
    %v1972 = vsub.f32 %v1511, %v1959
    %v1973 = vsub.f32 %v1512, %v1963
    %v1974 = vsub.f32 %v1513, %v1967
    %v1975 = vsub.f32 %v1514, %v1971
    %v1976 = vsub.f32 %v1515, %v1959
    %v1977 = vsub.f32 %v1516, %v1963
    %v1978 = vsub.f32 %v1517, %v1967
    %v1979 = vsub.f32 %v1518, %v1971
    %v1980 = vsub.f32 %v1519, %v1959
    %v1981 = vsub.f32 %v1520, %v1963
    %v1982 = vsub.f32 %v1521, %v1967
    %v1983 = vsub.f32 %v1522, %v1971
    %v1984 = vsub.f32 %v1523, %v1959
    %v1985 = vsub.f32 %v1524, %v1963
    %v1986 = vsub.f32 %v1525, %v1967
    %v1987 = vsub.f32 %v1526, %v1971
    %v1988 = vsub.f32 %v1527, %v1959
    %v1989 = vsub.f32 %v1528, %v1963
    %v1990 = vsub.f32 %v1529, %v1967
    %v1991 = vsub.f32 %v1530, %v1971
    %v1992 = vsub.f32 %v1531, %v1959
    %v1993 = vsub.f32 %v1532, %v1963
    %v1994 = vsub.f32 %v1533, %v1967
    %v1995 = vsub.f32 %v1534, %v1971
    %v1996 = vsub.f32 %v1535, %v1959
    %v1997 = vsub.f32 %v1536, %v1963
    %v1998 = vsub.f32 %v1537, %v1967
    %v1999 = vsub.f32 %v1538, %v1971
    %v2000 = vsub.f32 %v1539, %v1959
    %v2001 = vsub.f32 %v1540, %v1963
    %v2002 = vsub.f32 %v1541, %v1967
    %v2003 = vsub.f32 %v1542, %v1971
    %v2004 = vmul.f32 %v1972, %v1972
    %v2005 = vmul.f32 %v1973, %v1973
    %v2006 = vmul.f32 %v1974, %v1974
    %v2007 = vmul.f32 %v1975, %v1975
    %v2008 = vmul.f32 %v1976, %v1976
    %v2009 = vmul.f32 %v1977, %v1977
    %v2010 = vmul.f32 %v1978, %v1978
    %v2011 = vmul.f32 %v1979, %v1979
    %v2012 = vmul.f32 %v1980, %v1980
    %v2013 = vmul.f32 %v1981, %v1981
    %v2014 = vmul.f32 %v1982, %v1982
    %v2015 = vmul.f32 %v1983, %v1983
    %v2016 = vmul.f32 %v1984, %v1984
    %v2017 = vmul.f32 %v1985, %v1985
    %v2018 = vmul.f32 %v1986, %v1986
    %v2019 = vmul.f32 %v1987, %v1987
    %v2020 = vmul.f32 %v1988, %v1988
    %v2021 = vmul.f32 %v1989, %v1989
    %v2022 = vmul.f32 %v1990, %v1990
    %v2023 = vmul.f32 %v1991, %v1991
    %v2024 = vmul.f32 %v1992, %v1992
    %v2025 = vmul.f32 %v1993, %v1993
    %v2026 = vmul.f32 %v1994, %v1994
    %v2027 = vmul.f32 %v1995, %v1995
    %v2028 = vmul.f32 %v1996, %v1996
    %v2029 = vmul.f32 %v1997, %v1997
    %v2030 = vmul.f32 %v1998, %v1998
    %v2031 = vmul.f32 %v1999, %v1999
    %v2032 = vmul.f32 %v2000, %v2000
    %v2033 = vmul.f32 %v2001, %v2001
    %v2034 = vmul.f32 %v2002, %v2002
    %v2035 = vmul.f32 %v2003, %v2003
    %v2036 = vadd.f32 %v2004, %v2008
    %v2037 = vadd.f32 %v2036, %v2012
    %v2038 = vadd.f32 %v2037, %v2016
    %v2039 = vadd.f32 %v2038, %v2020
    %v2040 = vadd.f32 %v2039, %v2024
    %v2041 = vadd.f32 %v2040, %v2028
    %v2042 = vadd.f32 %v2041, %v2032
    %v2043 = vrot.slane %v2042, 4
    %v2044 = vadd.f32 %v2042, %v2043
    %v2045 = vrot.slane %v2044, 2
    %v2046 = vadd.f32 %v2044, %v2045
    %v2047 = vrot.slane %v2046, 1
    %v2048 = vadd.f32 %v2046, %v2047
    %v2049 = vadd.f32 %v2005, %v2009
    %v2050 = vadd.f32 %v2049, %v2013
    %v2051 = vadd.f32 %v2050, %v2017
    %v2052 = vadd.f32 %v2051, %v2021
    %v2053 = vadd.f32 %v2052, %v2025
    %v2054 = vadd.f32 %v2053, %v2029
    %v2055 = vadd.f32 %v2054, %v2033
    %v2056 = vrot.slane %v2055, 4
    %v2057 = vadd.f32 %v2055, %v2056
    %v2058 = vrot.slane %v2057, 2
    %v2059 = vadd.f32 %v2057, %v2058
    %v2060 = vrot.slane %v2059, 1
    %v2061 = vadd.f32 %v2059, %v2060
    %v2062 = vadd.f32 %v2006, %v2010
    %v2063 = vadd.f32 %v2062, %v2014
    %v2064 = vadd.f32 %v2063, %v2018
    %v2065 = vadd.f32 %v2064, %v2022
    %v2066 = vadd.f32 %v2065, %v2026
    %v2067 = vadd.f32 %v2066, %v2030
    %v2068 = vadd.f32 %v2067, %v2034
    %v2069 = vrot.slane %v2068, 4
    %v2070 = vadd.f32 %v2068, %v2069
    %v2071 = vrot.slane %v2070, 2
    %v2072 = vadd.f32 %v2070, %v2071
    %v2073 = vrot.slane %v2072, 1
    %v2074 = vadd.f32 %v2072, %v2073
    %v2075 = vadd.f32 %v2007, %v2011
    %v2076 = vadd.f32 %v2075, %v2015
    %v2077 = vadd.f32 %v2076, %v2019
    %v2078 = vadd.f32 %v2077, %v2023
    %v2079 = vadd.f32 %v2078, %v2027
    %v2080 = vadd.f32 %v2079, %v2031
    %v2081 = vadd.f32 %v2080, %v2035
    %v2082 = vrot.slane %v2081, 4
    %v2083 = vadd.f32 %v2081, %v2082
    %v2084 = vrot.slane %v2083, 2
    %v2085 = vadd.f32 %v2083, %v2084
    %v2086 = vrot.slane %v2085, 1
    %v2087 = vadd.f32 %v2085, %v2086
    %2088 = vmatprep.subr.mxu0 0.0
    %2089 = vmatpush1.msra.mxu0 %v1543
    %2090 = vmatprep.subr.mxu0 0.0
    %2091 = vmatpush1.msra.mxu0 %v1544
    %2092 = vmatprep.subr.mxu0 0.0
    %2093 = vmatpush1.msra.mxu0 %v1545
    %2094 = vmatprep.subr.mxu0 0.0
    %2095 = vmatpush1.msra.mxu0 %v1546
    %2096 = vmatprep.subr.mxu0 0.0
    %2097 = vmatpush1.msra.mxu0 %v1547
    %2098 = vmatprep.subr.mxu0 0.0
    %2099 = vmatpush1.msra.mxu0 %v1548
    %2100 = vmatprep.subr.mxu0 0.0
    %2101 = vmatpush1.msra.mxu0 %v1549
    %2102 = vmatprep.subr.mxu0 0.0
    %2103 = vmatpush1.msra.mxu0 %v1550
    %2104 = vmatprep.subr.mxu0 0.0
    %2105 = vmatpush1.msra.mxu0 %v1551
    %2106 = vmatprep.subr.mxu0 0.0
    %2107 = vmatpush1.msra.mxu0 %v1552
    %2108 = vmatprep.subr.mxu0 0.0
    %2109 = vmatpush1.msra.mxu0 %v1553
    %2110 = vmatprep.subr.mxu0 0.0
    %2111 = vmatpush1.msra.mxu0 %v1554
    %2112 = vmatprep.subr.mxu0 0.0
    %2113 = vmatpush1.msra.mxu0 %v1555
    %2114 = vmatprep.subr.mxu0 0.0
    %2115 = vmatpush1.msra.mxu0 %v1556
    %2116 = vmatprep.subr.mxu0 0.0
    %2117 = vmatpush1.msra.mxu0 %v1557
    %2118 = vmatprep.subr.mxu0 0.0
    %2119 = vmatpush1.msra.mxu0 %v1558
    %2120 = vmatprep.subr.mxu0 0.0
    %2121 = vmatpush1.msra.mxu0 %v1559
    %2122 = vmatprep.subr.mxu0 0.0
    %2123 = vmatpush1.msra.mxu0 %v1560
    %2124 = vmatprep.subr.mxu0 0.0
    %2125 = vmatpush1.msra.mxu0 %v1561
    %2126 = vmatprep.subr.mxu0 0.0
    %2127 = vmatpush1.msra.mxu0 %v1562
    %2128 = vmatprep.subr.mxu0 0.0
    %2129 = vmatpush1.msra.mxu0 %v1563
    %2130 = vmatprep.subr.mxu0 0.0
    %2131 = vmatpush1.msra.mxu0 %v1564
    %2132 = vmatprep.subr.mxu0 0.0
    %2133 = vmatpush1.msra.mxu0 %v1565
    %2134 = vmatprep.subr.mxu0 0.0
    %2135 = vmatpush1.msra.mxu0 %v1566
    %2136 = vmatprep.subr.mxu0 0.0
    %2137 = vmatpush1.msra.mxu0 %v1567
    %2138 = vmatprep.subr.mxu0 0.0
    %2139 = vmatpush1.msra.mxu0 %v1568
    %2140 = vmatprep.subr.mxu0 0.0
    %2141 = vmatpush1.msra.mxu0 %v1569
    %2142 = vmatprep.subr.mxu0 0.0
    %2143 = vmatpush1.msra.mxu0 %v1570
    %2144 = vmatprep.subr.mxu0 0.0
    %2145 = vmatpush1.msra.mxu0 %v1571
    %2146 = vmatprep.subr.mxu0 0.0
    %2147 = vmatpush1.msra.mxu0 %v1572
    %2148 = vmatprep.subr.mxu0 0.0
    %2149 = vmatpush1.msra.mxu0 %v1573
    %2150 = vmatprep.subr.mxu0 0.0
    %2151 = vmatpush1.msra.mxu0 %v1574
    %2152 = vmatprep.mubr.f32.mxu0 %v2061
    %2153 = vmatmul.mubr.f32.gmra.mrb[0].mxu0 %v2048
    %v2154 = vpop.f32.mrb[0].mxu0
    %v2155 = vadd.f32 0.0, %v2154
    %v2156 = vpop.f32.mrb[0].mxu0
    %2157 = vdwg.mxu0
    %2158 = vmatprep.subr.mxu0 0.0
    %2159 = vmatpush1.msra.mxu0 %v1575
    %2160 = vmatprep.subr.mxu0 0.0
    %2161 = vmatpush1.msra.mxu0 %v1576
    %2162 = vmatprep.subr.mxu0 0.0
    %2163 = vmatpush1.msra.mxu0 %v1577
    %2164 = vmatprep.subr.mxu0 0.0
    %2165 = vmatpush1.msra.mxu0 %v1578
    %2166 = vmatprep.subr.mxu0 0.0
    %2167 = vmatpush1.msra.mxu0 %v1579
    %2168 = vmatprep.subr.mxu0 0.0
    %2169 = vmatpush1.msra.mxu0 %v1580
    %2170 = vmatprep.subr.mxu0 0.0
    %2171 = vmatpush1.msra.mxu0 %v1581
    %2172 = vmatprep.subr.mxu0 0.0
    %2173 = vmatpush1.msra.mxu0 %v1582
    %2174 = vmatprep.subr.mxu0 0.0
    %2175 = vmatpush1.msra.mxu0 %v1583
    %2176 = vmatprep.subr.mxu0 0.0
    %2177 = vmatpush1.msra.mxu0 %v1584
    %2178 = vmatprep.subr.mxu0 0.0
    %2179 = vmatpush1.msra.mxu0 %v1585
    %2180 = vmatprep.subr.mxu0 0.0
    %2181 = vmatpush1.msra.mxu0 %v1586
    %2182 = vmatprep.subr.mxu0 0.0
    %2183 = vmatpush1.msra.mxu0 %v1587
    %2184 = vmatprep.subr.mxu0 0.0
    %2185 = vmatpush1.msra.mxu0 %v1588
    %2186 = vmatprep.subr.mxu0 0.0
    %2187 = vmatpush1.msra.mxu0 %v1589
    %2188 = vmatprep.subr.mxu0 0.0
    %2189 = vmatpush1.msra.mxu0 %v1590
    %2190 = vmatprep.subr.mxu0 0.0
    %2191 = vmatpush1.msra.mxu0 %v1591
    %2192 = vmatprep.subr.mxu0 0.0
    %2193 = vmatpush1.msra.mxu0 %v1592
    %2194 = vmatprep.subr.mxu0 0.0
    %2195 = vmatpush1.msra.mxu0 %v1593
    %2196 = vmatprep.subr.mxu0 0.0
    %2197 = vmatpush1.msra.mxu0 %v1594
    %2198 = vmatprep.subr.mxu0 0.0
    %2199 = vmatpush1.msra.mxu0 %v1595
    %2200 = vmatprep.subr.mxu0 0.0
    %2201 = vmatpush1.msra.mxu0 %v1596
    %2202 = vmatprep.subr.mxu0 0.0
    %2203 = vmatpush1.msra.mxu0 %v1597
    %2204 = vmatprep.subr.mxu0 0.0
    %2205 = vmatpush1.msra.mxu0 %v1598
    %2206 = vmatprep.subr.mxu0 0.0
    %2207 = vmatpush1.msra.mxu0 %v1599
    %2208 = vmatprep.subr.mxu0 0.0
    %2209 = vmatpush1.msra.mxu0 %v1600
    %2210 = vmatprep.subr.mxu0 0.0
    %2211 = vmatpush1.msra.mxu0 %v1601
    %2212 = vmatprep.subr.mxu0 0.0
    %2213 = vmatpush1.msra.mxu0 %v1602
    %2214 = vmatprep.subr.mxu0 0.0
    %2215 = vmatpush1.msra.mxu0 %v1603
    %2216 = vmatprep.subr.mxu0 0.0
    %2217 = vmatpush1.msra.mxu0 %v1604
    %2218 = vmatprep.subr.mxu0 0.0
    %2219 = vmatpush1.msra.mxu0 %v1605
    %2220 = vmatprep.subr.mxu0 0.0
    %2221 = vmatpush1.msra.mxu0 %v1606
    %2222 = vmatprep.mubr.f32.mxu0 %v2087
    %2223 = vmatmul.mubr.f32.gmra.mrb[0].mxu0 %v2074
    %v2224 = vpop.f32.mrb[0].mxu0
    %v2225 = vadd.f32 %v2155, %v2224
    %v2226 = vpop.f32.mrb[0].mxu0
    %2227 = vdwg.mxu0
    %v2228 = vmul.f32 %v2225, 0.00048828125
    %v2230 = vsel %vm1810, %v2228, 0
    %2232 = vmatprep.subr.mxu0 %v1608
    %2233 = vmatpush1.msra.mxu0 %v1607
    %2234 = vmatprep.subr.mxu0 %v1612
    %2235 = vmatpush1.msra.mxu0 %v1611
    %2236 = vmatprep.subr.mxu0 0.0
    %2237 = vmatpush1.msra.mxu0 0.0
    %2238 = vmatprep.subr.mxu0 0.0
    %2239 = vmatpush1.msra.mxu0 0.0
    %2240 = vmatprep.subr.mxu0 0.0
    %2241 = vmatpush1.msra.mxu0 0.0
    %2242 = vmatprep.subr.mxu0 0.0
    %2243 = vmatpush1.msra.mxu0 0.0
    %2244 = vmatprep.subr.mxu0 0.0
    %2245 = vmatpush1.msra.mxu0 0.0
    %2246 = vmatprep.subr.mxu0 0.0
    %2247 = vmatpush1.msra.mxu0 0.0
    %2248 = vmatprep.subr.mxu0 0.0
    %2249 = vmatpush1.msra.mxu0 0.0
    %2250 = vmatprep.subr.mxu0 0.0
    %2251 = vmatpush1.msra.mxu0 0.0
    %2252 = vmatprep.subr.mxu0 0.0
    %2253 = vmatpush1.msra.mxu0 0.0
    %2254 = vmatprep.subr.mxu0 0.0
    %2255 = vmatpush1.msra.mxu0 0.0
    %2256 = vmatprep.subr.mxu0 0.0
    %2257 = vmatpush1.msra.mxu0 0.0
    %2258 = vmatprep.subr.mxu0 0.0
    %2259 = vmatpush1.msra.mxu0 0.0
    %2260 = vmatprep.subr.mxu0 0.0
    %2261 = vmatpush1.msra.mxu0 0.0
    %2262 = vmatprep.subr.mxu0 0.0
    %2263 = vmatpush1.msra.mxu0 0.0
    %2264 = vmatprep.subr.mxu0 0.0
    %2265 = vmatpush1.msra.mxu0 0.0
    %2266 = vmatprep.subr.mxu0 0.0
    %2267 = vmatpush1.msra.mxu0 0.0
    %2268 = vmatprep.subr.mxu0 0.0
    %2269 = vmatpush1.msra.mxu0 0.0
    %2270 = vmatprep.subr.mxu0 0.0
    %2271 = vmatpush1.msra.mxu0 0.0
    %2272 = vmatprep.subr.mxu0 0.0
    %2273 = vmatpush1.msra.mxu0 0.0
    %2274 = vmatprep.subr.mxu0 0.0
    %2275 = vmatpush1.msra.mxu0 0.0
    %2276 = vmatprep.subr.mxu0 0.0
    %2277 = vmatpush1.msra.mxu0 0.0
    %2278 = vmatprep.subr.mxu0 0.0
    %2279 = vmatpush1.msra.mxu0 0.0
    %2280 = vmatprep.subr.mxu0 0.0
    %2281 = vmatpush1.msra.mxu0 0.0
    %2282 = vmatprep.subr.mxu0 0.0
    %2283 = vmatpush1.msra.mxu0 0.0
    %2284 = vmatprep.subr.mxu0 0.0
    %2285 = vmatpush1.msra.mxu0 0.0
    %2286 = vmatprep.subr.mxu0 0.0
    %2287 = vmatpush1.msra.mxu0 0.0
    %2288 = vmatprep.subr.mxu0 0.0
    %2289 = vmatpush1.msra.mxu0 0.0
    %2290 = vmatprep.subr.mxu0 0.0
    %2291 = vmatpush1.msra.mxu0 0.0
    %2292 = vmatprep.subr.mxu0 0.0
    %2293 = vmatpush1.msra.mxu0 0.0
    %2294 = vmatprep.subr.mxu0 0.0
    %2295 = vmatpush1.msra.mxu0 0.0
    %2296 = vmatprep.mubr.f32.mxu0 0.0
    %2297 = vmatmul.mubr.f32.gmra.mrb[0].mxu0 %v2230
    %v2298 = vpop.f32.mrb[0].mxu0
    %v2299 = vadd.f32 1e-05, %v2298
    %v2300 = vpop.f32.mrb[0].mxu0
    %v2301 = vadd.f32 1e-05, %v2300
    %2302 = vdwg.mxu0
    %2303 = vmatprep.subr.mxu0 %v1610
    %2304 = vmatpush1.msra.mxu0 %v1609
    %2305 = vmatprep.subr.mxu0 %v1614
    %2306 = vmatpush1.msra.mxu0 %v1613
    %2307 = vmatprep.subr.mxu0 0.0
    %2308 = vmatpush1.msra.mxu0 0.0
    %2309 = vmatprep.subr.mxu0 0.0
    %2310 = vmatpush1.msra.mxu0 0.0
    %2311 = vmatprep.subr.mxu0 0.0
    %2312 = vmatpush1.msra.mxu0 0.0
    %2313 = vmatprep.subr.mxu0 0.0
    %2314 = vmatpush1.msra.mxu0 0.0
    %2315 = vmatprep.subr.mxu0 0.0
    %2316 = vmatpush1.msra.mxu0 0.0
    %2317 = vmatprep.subr.mxu0 0.0
    %2318 = vmatpush1.msra.mxu0 0.0
    %2319 = vmatprep.subr.mxu0 0.0
    %2320 = vmatpush1.msra.mxu0 0.0
    %2321 = vmatprep.subr.mxu0 0.0
    %2322 = vmatpush1.msra.mxu0 0.0
    %2323 = vmatprep.subr.mxu0 0.0
    %2324 = vmatpush1.msra.mxu0 0.0
    %2325 = vmatprep.subr.mxu0 0.0
    %2326 = vmatpush1.msra.mxu0 0.0
    %2327 = vmatprep.subr.mxu0 0.0
    %2328 = vmatpush1.msra.mxu0 0.0
    %2329 = vmatprep.subr.mxu0 0.0
    %2330 = vmatpush1.msra.mxu0 0.0
    %2331 = vmatprep.subr.mxu0 0.0
    %2332 = vmatpush1.msra.mxu0 0.0
    %2333 = vmatprep.subr.mxu0 0.0
    %2334 = vmatpush1.msra.mxu0 0.0
    %2335 = vmatprep.subr.mxu0 0.0
    %2336 = vmatpush1.msra.mxu0 0.0
    %2337 = vmatprep.subr.mxu0 0.0
    %2338 = vmatpush1.msra.mxu0 0.0
    %2339 = vmatprep.subr.mxu0 0.0
    %2340 = vmatpush1.msra.mxu0 0.0
    %2341 = vmatprep.subr.mxu0 0.0
    %2342 = vmatpush1.msra.mxu0 0.0
    %2343 = vmatprep.subr.mxu0 0.0
    %2344 = vmatpush1.msra.mxu0 0.0
    %2345 = vmatprep.subr.mxu0 0.0
    %2346 = vmatpush1.msra.mxu0 0.0
    %2347 = vmatprep.subr.mxu0 0.0
    %2348 = vmatpush1.msra.mxu0 0.0
    %2349 = vmatprep.subr.mxu0 0.0
    %2350 = vmatpush1.msra.mxu0 0.0
    %2351 = vmatprep.subr.mxu0 0.0
    %2352 = vmatpush1.msra.mxu0 0.0
    %2353 = vmatprep.subr.mxu0 0.0
    %2354 = vmatpush1.msra.mxu0 0.0
    %2355 = vmatprep.subr.mxu0 0.0
    %2356 = vmatpush1.msra.mxu0 0.0
    %2357 = vmatprep.subr.mxu0 0.0
    %2358 = vmatpush1.msra.mxu0 0.0
    %2359 = vmatprep.subr.mxu0 0.0
    %2360 = vmatpush1.msra.mxu0 0.0
    %2361 = vmatprep.subr.mxu0 0.0
    %2362 = vmatpush1.msra.mxu0 0.0
    %2363 = vmatprep.subr.mxu0 0.0
    %2364 = vmatpush1.msra.mxu0 0.0
    %2365 = vmatprep.subr.mxu0 0.0
    %2366 = vmatpush1.msra.mxu0 0.0
    %2367 = vmatprep.mubr.f32.mxu0 0.0
    %2368 = vmatmul.mubr.f32.gmra.mrb[0].mxu0 %v2230
    %v2369 = vpop.f32.mrb[0].mxu0
    %v2370 = vadd.f32 1e-05, %v2369
    %v2371 = vpop.f32.mrb[0].mxu0
    %v2372 = vadd.f32 1e-05, %v2371
    %2373 = vdwg.mxu0
    %v2374 = vrsqrt.pop %v2299
    %v2375 = vrsqrt.pop %v2301
    %v2376 = vrsqrt.pop %v2370
    %v2377 = vrsqrt.pop %v2372
    %v2382 = vcombine.low %v2374, %v2375
    %v2383 = vcombine.low %v2376, %v2377
    %v2385 = vunpack.c.l.s4 1966171168
    %v2386 = vunpack.c.0.s8 %v2385
    %v2387 = vlaneseq
    %v2388 = vshrl.u32 %v2387, 7
    %v2389 = vsub.s32 %v2386, %v2388
    %v2390 = vrot.slane %v2382, %v2389
    %v2392 = vunpack.c.l.s4 1966171168
    %v2393 = vunpack.c.0.s8 %v2392
    %v2394 = vlaneseq
    %v2395 = vshrl.u32 %v2394, 7
    %v2396 = vsub.s32 %v2393, %v2395
    %v2397 = vrot.slane %v2383, %v2396
    %v2398 = vcombine.low %v2390, %v2397
    %v2400 = vunpack.c.l.s4 1966171168
    %v2401 = vunpack.c.0.s8 %v2400
    %v2402 = vlaneseq
    %v2403 = vshrl.u32 %v2402, 7
    %v2404 = vsub.s32 %v2401, %v2403
    %v2405 = vrot.slane %v2398, %v2404
    %v2407 = vmul.f32 %v1615, %v2405
    %v2409 = vlaneseq
    %v2410 = vshrl.u32 %v2409, 7
    %v2411 = vsub.s32 0, %v2410
    %v2412 = vrot.slane %v2407, %v2411
    %v2413 = vlaneseq
    %v2414 = vshrl.u32 %v2413, 7
    %v2415 = vsub.s32 1, %v2414
    %v2416 = vrot.slane %v2407, %v2415
    %v2417 = vlaneseq
    %v2418 = vshrl.u32 %v2417, 7
    %v2419 = vsub.s32 2, %v2418
    %v2420 = vrot.slane %v2407, %v2419
    %v2421 = vlaneseq
    %v2422 = vshrl.u32 %v2421, 7
    %v2423 = vsub.s32 3, %v2422
    %v2424 = vrot.slane %v2407, %v2423
    %v2429 = vmul.f32 %v1972, %v2412
    %v2430 = vmul.f32 %v1973, %v2416
    %v2431 = vmul.f32 %v1974, %v2420
    %v2432 = vmul.f32 %v1975, %v2424
    %v2433 = vmul.f32 %v1976, %v2412
    %v2434 = vmul.f32 %v1977, %v2416
    %v2435 = vmul.f32 %v1978, %v2420
    %v2436 = vmul.f32 %v1979, %v2424
    %v2437 = vmul.f32 %v1980, %v2412
    %v2438 = vmul.f32 %v1981, %v2416
    %v2439 = vmul.f32 %v1982, %v2420
    %v2440 = vmul.f32 %v1983, %v2424
    %v2441 = vmul.f32 %v1984, %v2412
    %v2442 = vmul.f32 %v1985, %v2416
    %v2443 = vmul.f32 %v1986, %v2420
    %v2444 = vmul.f32 %v1987, %v2424
    %v2445 = vmul.f32 %v1988, %v2412
    %v2446 = vmul.f32 %v1989, %v2416
    %v2447 = vmul.f32 %v1990, %v2420
    %v2448 = vmul.f32 %v1991, %v2424
    %v2449 = vmul.f32 %v1992, %v2412
    %v2450 = vmul.f32 %v1993, %v2416
    %v2451 = vmul.f32 %v1994, %v2420
    %v2452 = vmul.f32 %v1995, %v2424
    %v2453 = vmul.f32 %v1996, %v2412
    %v2454 = vmul.f32 %v1997, %v2416
    %v2455 = vmul.f32 %v1998, %v2420
    %v2456 = vmul.f32 %v1999, %v2424
    %v2457 = vmul.f32 %v2000, %v2412
    %v2458 = vmul.f32 %v2001, %v2416
    %v2459 = vmul.f32 %v2002, %v2420
    %v2460 = vmul.f32 %v2003, %v2424
    %v2462 = vlaneseq
    %v2463 = vshrl.u32 %v2462, 7
    %v2464 = vsub.s32 0, %v2463
    %v2465 = vrot.slane %v1616, %v2464
    %v2466 = vlaneseq
    %v2467 = vshrl.u32 %v2466, 7
    %v2468 = vsub.s32 1, %v2467
    %v2469 = vrot.slane %v1616, %v2468
    %v2470 = vlaneseq
    %v2471 = vshrl.u32 %v2470, 7
    %v2472 = vsub.s32 2, %v2471
    %v2473 = vrot.slane %v1616, %v2472
    %v2474 = vlaneseq
    %v2475 = vshrl.u32 %v2474, 7
    %v2476 = vsub.s32 3, %v2475
    %v2477 = vrot.slane %v1616, %v2476
    %v2482 = vadd.f32 %v2429, %v2465
    %v2483 = vadd.f32 %v2430, %v2469
    %v2484 = vadd.f32 %v2431, %v2473
    %v2485 = vadd.f32 %v2432, %v2477
    %v2486 = vadd.f32 %v2433, %v2465
    %v2487 = vadd.f32 %v2434, %v2469
    %v2488 = vadd.f32 %v2435, %v2473
    %v2489 = vadd.f32 %v2436, %v2477
    %v2490 = vadd.f32 %v2437, %v2465
    %v2491 = vadd.f32 %v2438, %v2469
    %v2492 = vadd.f32 %v2439, %v2473
    %v2493 = vadd.f32 %v2440, %v2477
    %v2494 = vadd.f32 %v2441, %v2465
    %v2495 = vadd.f32 %v2442, %v2469
    %v2496 = vadd.f32 %v2443, %v2473
    %v2497 = vadd.f32 %v2444, %v2477
    %v2498 = vadd.f32 %v2445, %v2465
    %v2499 = vadd.f32 %v2446, %v2469
    %v2500 = vadd.f32 %v2447, %v2473
    %v2501 = vadd.f32 %v2448, %v2477
    %v2502 = vadd.f32 %v2449, %v2465
    %v2503 = vadd.f32 %v2450, %v2469
    %v2504 = vadd.f32 %v2451, %v2473
    %v2505 = vadd.f32 %v2452, %v2477
    %v2506 = vadd.f32 %v2453, %v2465
    %v2507 = vadd.f32 %v2454, %v2469
    %v2508 = vadd.f32 %v2455, %v2473
    %v2509 = vadd.f32 %v2456, %v2477
    %v2510 = vadd.f32 %v2457, %v2465
    %v2511 = vadd.f32 %v2458, %v2469
    %v2512 = vadd.f32 %v2459, %v2473
    %v2513 = vadd.f32 %v2460, %v2477
    %v2514 = vtanh.pop %v2482
    %v2515 = vtanh.pop %v2483
    %v2516 = vtanh.pop %v2484
    %v2517 = vtanh.pop %v2485
    %v2518 = vtanh.pop %v2486
    %v2519 = vtanh.pop %v2487
    %v2520 = vtanh.pop %v2488
    %v2521 = vtanh.pop %v2489
    %v2522 = vtanh.pop %v2490
    %v2523 = vtanh.pop %v2491
    %v2524 = vtanh.pop %v2492
    %v2525 = vtanh.pop %v2493
    %v2526 = vtanh.pop %v2494
    %v2527 = vtanh.pop %v2495
    %v2528 = vtanh.pop %v2496
    %v2529 = vtanh.pop %v2497
    %v2530 = vtanh.pop %v2498
    %v2531 = vtanh.pop %v2499
    %v2532 = vtanh.pop %v2500
    %v2533 = vtanh.pop %v2501
    %v2534 = vtanh.pop %v2502
    %v2535 = vtanh.pop %v2503
    %v2536 = vtanh.pop %v2504
    %v2537 = vtanh.pop %v2505
    %v2538 = vtanh.pop %v2506
    %v2539 = vtanh.pop %v2507
    %v2540 = vtanh.pop %v2508
    %v2541 = vtanh.pop %v2509
    %v2542 = vtanh.pop %v2510
    %v2543 = vtanh.pop %v2511
    %v2544 = vtanh.pop %v2512
    %v2545 = vtanh.pop %v2513
    %v2546 = vld [vmem:[#allocation11] sm:$0xff]
    %v2547 = vld [vmem:[#allocation11 + $0x8] sm:$0xff]
    %v2548 = vld [vmem:[#allocation11 + $0x10] sm:$0xff]
    %v2549 = vld [vmem:[#allocation11 + $0x18] sm:$0xff]
    %v2550 = vld [vmem:[#allocation13] sm:$0xff]
    %v2551 = vld [vmem:[#allocation13 + $0x8] sm:$0xff]
    %v2552 = vld [vmem:[#allocation13 + $0x10] sm:$0xff]
    %v2553 = vld [vmem:[#allocation13 + $0x18] sm:$0xff]
    %v2554 = vld [vmem:[#allocation14] sm:$0xff]
    %v2555 = vld [vmem:[#allocation14 + $0x8] sm:$0xff]
    %v2556 = vld [vmem:[#allocation14 + $0x10] sm:$0xff]
    %v2557 = vld [vmem:[#allocation14 + $0x18] sm:$0xff]
    %v2558 = vld [vmem:[#allocation14 + $0x20] sm:$0xff]
    %v2559 = vld [vmem:[#allocation14 + $0x28] sm:$0xff]
    %v2560 = vld [vmem:[#allocation14 + $0x30] sm:$0xff]
    %v2561 = vld [vmem:[#allocation14 + $0x38] sm:$0xff]
    %v2562 = vld [vmem:[#allocation14 + $0x40] sm:$0xff]
    %v2563 = vld [vmem:[#allocation14 + $0x48] sm:$0xff]
    %v2564 = vld [vmem:[#allocation14 + $0x50] sm:$0xff]
    %v2565 = vld [vmem:[#allocation14 + $0x58] sm:$0xff]
    %v2566 = vld [vmem:[#allocation14 + $0x60] sm:$0xff]
    %v2567 = vld [vmem:[#allocation14 + $0x68] sm:$0xff]
    %v2568 = vld [vmem:[#allocation14 + $0x70] sm:$0xff]
    %v2569 = vld [vmem:[#allocation14 + $0x78] sm:$0xff]
    %v2570 = vld [vmem:[#allocation14 + $0x80] sm:$0xff]
    %v2571 = vld [vmem:[#allocation14 + $0x88] sm:$0xff]
    %v2572 = vld [vmem:[#allocation14 + $0x90] sm:$0xff]
    %v2573 = vld [vmem:[#allocation14 + $0x98] sm:$0xff]
    %v2574 = vld [vmem:[#allocation14 + $0xa0] sm:$0xff]
    %v2575 = vld [vmem:[#allocation14 + $0xa8] sm:$0xff]
    %v2576 = vld [vmem:[#allocation14 + $0xb0] sm:$0xff]
    %v2577 = vld [vmem:[#allocation14 + $0xb8] sm:$0xff]
    %v2578 = vld [vmem:[#allocation14 + $0xc0] sm:$0xff]
    %v2579 = vld [vmem:[#allocation14 + $0xc8] sm:$0xff]
    %v2580 = vld [vmem:[#allocation14 + $0xd0] sm:$0xff]
    %v2581 = vld [vmem:[#allocation14 + $0xd8] sm:$0xff]
    %v2582 = vld [vmem:[#allocation14 + $0xe0] sm:$0xff]
    %v2583 = vld [vmem:[#allocation14 + $0xe8] sm:$0xff]
    %v2584 = vld [vmem:[#allocation14 + $0xf0] sm:$0xff]
    %v2585 = vld [vmem:[#allocation14 + $0xf8] sm:$0xff]
    %v2586 = vld [vmem:[#allocation14 + $0x100] sm:$0xff]
    %v2587 = vld [vmem:[#allocation14 + $0x108] sm:$0xff]
    %v2588 = vld [vmem:[#allocation14 + $0x110] sm:$0xff]
    %v2589 = vld [vmem:[#allocation14 + $0x118] sm:$0xff]
    %v2590 = vld [vmem:[#allocation14 + $0x120] sm:$0xff]
    %v2591 = vld [vmem:[#allocation14 + $0x128] sm:$0xff]
    %v2592 = vld [vmem:[#allocation14 + $0x130] sm:$0xff]
    %v2593 = vld [vmem:[#allocation14 + $0x138] sm:$0xff]
    %v2594 = vld [vmem:[#allocation14 + $0x140] sm:$0xff]
    %v2595 = vld [vmem:[#allocation14 + $0x148] sm:$0xff]
    %v2596 = vld [vmem:[#allocation14 + $0x150] sm:$0xff]
    %v2597 = vld [vmem:[#allocation14 + $0x158] sm:$0xff]
    %v2598 = vld [vmem:[#allocation14 + $0x160] sm:$0xff]
    %v2599 = vld [vmem:[#allocation14 + $0x168] sm:$0xff]
    %v2600 = vld [vmem:[#allocation14 + $0x170] sm:$0xff]
    %v2601 = vld [vmem:[#allocation14 + $0x178] sm:$0xff]
    %v2602 = vld [vmem:[#allocation14 + $0x180] sm:$0xff]
    %v2603 = vld [vmem:[#allocation14 + $0x188] sm:$0xff]
    %v2604 = vld [vmem:[#allocation14 + $0x190] sm:$0xff]
    %v2605 = vld [vmem:[#allocation14 + $0x198] sm:$0xff]
    %v2606 = vld [vmem:[#allocation14 + $0x1a0] sm:$0xff]
    %v2607 = vld [vmem:[#allocation14 + $0x1a8] sm:$0xff]
    %v2608 = vld [vmem:[#allocation14 + $0x1b0] sm:$0xff]
    %v2609 = vld [vmem:[#allocation14 + $0x1b8] sm:$0xff]
    %v2610 = vld [vmem:[#allocation14 + $0x1c0] sm:$0xff]
    %v2611 = vld [vmem:[#allocation14 + $0x1c8] sm:$0xff]
    %v2612 = vld [vmem:[#allocation14 + $0x1d0] sm:$0xff]
    %v2613 = vld [vmem:[#allocation14 + $0x1d8] sm:$0xff]
    %v2614 = vld [vmem:[#allocation14 + $0x1e0] sm:$0xff]
    %v2615 = vld [vmem:[#allocation14 + $0x1e8] sm:$0xff]
    %v2616 = vld [vmem:[#allocation14 + $0x1f0] sm:$0xff]
    %v2617 = vld [vmem:[#allocation14 + $0x1f8] sm:$0xff]
    %v2618 = vld [vmem:[#allocation14 + $0x200] sm:$0xff]
    %v2619 = vld [vmem:[#allocation14 + $0x208] sm:$0xff]
    %v2620 = vld [vmem:[#allocation14 + $0x210] sm:$0xff]
    %v2621 = vld [vmem:[#allocation14 + $0x218] sm:$0xff]
    %v2622 = vld [vmem:[#allocation14 + $0x220] sm:$0xff]
    %v2623 = vld [vmem:[#allocation14 + $0x228] sm:$0xff]
    %v2624 = vld [vmem:[#allocation14 + $0x230] sm:$0xff]
    %v2625 = vld [vmem:[#allocation14 + $0x238] sm:$0xff]
    %v2626 = vld [vmem:[#allocation14 + $0x240] sm:$0xff]
    %v2627 = vld [vmem:[#allocation14 + $0x248] sm:$0xff]
    %v2628 = vld [vmem:[#allocation14 + $0x250] sm:$0xff]
    %v2629 = vld [vmem:[#allocation14 + $0x258] sm:$0xff]
    %v2630 = vld [vmem:[#allocation14 + $0x260] sm:$0xff]
    %v2631 = vld [vmem:[#allocation14 + $0x268] sm:$0xff]
    %v2632 = vld [vmem:[#allocation14 + $0x270] sm:$0xff]
    %v2633 = vld [vmem:[#allocation14 + $0x278] sm:$0xff]
    %v2634 = vld [vmem:[#allocation14 + $0x280] sm:$0xff]
    %v2635 = vld [vmem:[#allocation14 + $0x288] sm:$0xff]
    %v2636 = vld [vmem:[#allocation14 + $0x290] sm:$0xff]
    %v2637 = vld [vmem:[#allocation14 + $0x298] sm:$0xff]
    %v2638 = vld [vmem:[#allocation14 + $0x2a0] sm:$0xff]
    %v2639 = vld [vmem:[#allocation14 + $0x2a8] sm:$0xff]
    %v2640 = vld [vmem:[#allocation14 + $0x2b0] sm:$0xff]
    %v2641 = vld [vmem:[#allocation14 + $0x2b8] sm:$0xff]
    %v2642 = vld [vmem:[#allocation14 + $0x2c0] sm:$0xff]
    %v2643 = vld [vmem:[#allocation14 + $0x2c8] sm:$0xff]
    %v2644 = vld [vmem:[#allocation14 + $0x2d0] sm:$0xff]
    %v2645 = vld [vmem:[#allocation14 + $0x2d8] sm:$0xff]
    %v2646 = vld [vmem:[#allocation14 + $0x2e0] sm:$0xff]
    %v2647 = vld [vmem:[#allocation14 + $0x2e8] sm:$0xff]
    %v2648 = vld [vmem:[#allocation14 + $0x2f0] sm:$0xff]
    %v2649 = vld [vmem:[#allocation14 + $0x2f8] sm:$0xff]
    %v2650 = vld [vmem:[#allocation14 + $0x300] sm:$0xff]
    %v2651 = vld [vmem:[#allocation14 + $0x308] sm:$0xff]
    %v2652 = vld [vmem:[#allocation14 + $0x310] sm:$0xff]
    %v2653 = vld [vmem:[#allocation14 + $0x318] sm:$0xff]
    %v2654 = vld [vmem:[#allocation14 + $0x320] sm:$0xff]
    %v2655 = vld [vmem:[#allocation14 + $0x328] sm:$0xff]
    %v2656 = vld [vmem:[#allocation14 + $0x330] sm:$0xff]
    %v2657 = vld [vmem:[#allocation14 + $0x338] sm:$0xff]
    %v2658 = vld [vmem:[#allocation14 + $0x340] sm:$0xff]
    %v2659 = vld [vmem:[#allocation14 + $0x348] sm:$0xff]
    %v2660 = vld [vmem:[#allocation14 + $0x350] sm:$0xff]
    %v2661 = vld [vmem:[#allocation14 + $0x358] sm:$0xff]
    %v2662 = vld [vmem:[#allocation14 + $0x360] sm:$0xff]
    %v2663 = vld [vmem:[#allocation14 + $0x368] sm:$0xff]
    %v2664 = vld [vmem:[#allocation14 + $0x370] sm:$0xff]
    %v2665 = vld [vmem:[#allocation14 + $0x378] sm:$0xff]
    %v2666 = vld [vmem:[#allocation14 + $0x380] sm:$0xff]
    %v2667 = vld [vmem:[#allocation14 + $0x388] sm:$0xff]
    %v2668 = vld [vmem:[#allocation14 + $0x390] sm:$0xff]
    %v2669 = vld [vmem:[#allocation14 + $0x398] sm:$0xff]
    %v2670 = vld [vmem:[#allocation14 + $0x3a0] sm:$0xff]
    %v2671 = vld [vmem:[#allocation14 + $0x3a8] sm:$0xff]
    %v2672 = vld [vmem:[#allocation14 + $0x3b0] sm:$0xff]
    %v2673 = vld [vmem:[#allocation14 + $0x3b8] sm:$0xff]
    %v2674 = vld [vmem:[#allocation14 + $0x3c0] sm:$0xff]
    %v2675 = vld [vmem:[#allocation14 + $0x3c8] sm:$0xff]
    %v2676 = vld [vmem:[#allocation14 + $0x3d0] sm:$0xff]
    %v2677 = vld [vmem:[#allocation14 + $0x3d8] sm:$0xff]
    %v2678 = vld [vmem:[#allocation14 + $0x3e0] sm:$0xff]
    %v2679 = vld [vmem:[#allocation14 + $0x3e8] sm:$0xff]
    %v2680 = vld [vmem:[#allocation14 + $0x3f0] sm:$0xff]
    %v2681 = vld [vmem:[#allocation14 + $0x3f8] sm:$0xff]
    %v2683 = vsel %vm396, %v2546, 0
    %v2686 = vsel %vm396, %v2547, 0
    %v2689 = vsel %vm396, %v2548, 0
    %v2692 = vsel %vm396, %v2549, 0
    %2694 = vmatprep.subr.mxu0 %v2515
    %2695 = vmatpush1.msra.mxu0 %v2514
    %2696 = vmatprep.subr.mxu0 %v2519
    %2697 = vmatpush1.msra.mxu0 %v2518
    %2698 = vmatprep.subr.mxu0 %v2523
    %2699 = vmatpush1.msra.mxu0 %v2522
    %2700 = vmatprep.subr.mxu0 %v2527
    %2701 = vmatpush1.msra.mxu0 %v2526
    %2702 = vmatprep.subr.mxu0 %v2531
    %2703 = vmatpush1.msra.mxu0 %v2530
    %2704 = vmatprep.subr.mxu0 %v2535
    %2705 = vmatpush1.msra.mxu0 %v2534
    %2706 = vmatprep.subr.mxu0 %v2539
    %2707 = vmatpush1.msra.mxu0 %v2538
    %2708 = vmatprep.subr.mxu0 %v2543
    %2709 = vmatpush1.msra.mxu0 %v2542
    %2710 = vmatprep.subr.mxu0 0.0
    %2711 = vmatpush1.msra.mxu0 0.0
    %2712 = vmatprep.subr.mxu0 0.0
    %2713 = vmatpush1.msra.mxu0 0.0
    %2714 = vmatprep.subr.mxu0 0.0
    %2715 = vmatpush1.msra.mxu0 0.0
    %2716 = vmatprep.subr.mxu0 0.0
    %2717 = vmatpush1.msra.mxu0 0.0
    %2718 = vmatprep.subr.mxu0 0.0
    %2719 = vmatpush1.msra.mxu0 0.0
    %2720 = vmatprep.subr.mxu0 0.0
    %2721 = vmatpush1.msra.mxu0 0.0
    %2722 = vmatprep.subr.mxu0 0.0
    %2723 = vmatpush1.msra.mxu0 0.0
    %2724 = vmatprep.subr.mxu0 0.0
    %2725 = vmatpush1.msra.mxu0 0.0
    %2726 = vmatprep.subr.mxu0 0.0
    %2727 = vmatpush1.msra.mxu0 0.0
    %2728 = vmatprep.subr.mxu0 0.0
    %2729 = vmatpush1.msra.mxu0 0.0
    %2730 = vmatprep.subr.mxu0 0.0
    %2731 = vmatpush1.msra.mxu0 0.0
    %2732 = vmatprep.subr.mxu0 0.0
    %2733 = vmatpush1.msra.mxu0 0.0
    %2734 = vmatprep.subr.mxu0 0.0
    %2735 = vmatpush1.msra.mxu0 0.0
    %2736 = vmatprep.subr.mxu0 0.0
    %2737 = vmatpush1.msra.mxu0 0.0
    %2738 = vmatprep.subr.mxu0 0.0
    %2739 = vmatpush1.msra.mxu0 0.0
    %2740 = vmatprep.subr.mxu0 0.0
    %2741 = vmatpush1.msra.mxu0 0.0
    %2742 = vmatprep.subr.mxu0 0.0
    %2743 = vmatpush1.msra.mxu0 0.0
    %2744 = vmatprep.subr.mxu0 0.0
    %2745 = vmatpush1.msra.mxu0 0.0
    %2746 = vmatprep.subr.mxu0 0.0
    %2747 = vmatpush1.msra.mxu0 0.0
    %2748 = vmatprep.subr.mxu0 0.0
    %2749 = vmatpush1.msra.mxu0 0.0
    %2750 = vmatprep.subr.mxu0 0.0
    %2751 = vmatpush1.msra.mxu0 0.0
    %2752 = vmatprep.subr.mxu0 0.0
    %2753 = vmatpush1.msra.mxu0 0.0
    %2754 = vmatprep.subr.mxu0 0.0
    %2755 = vmatpush1.msra.mxu0 0.0
    %2756 = vmatprep.subr.mxu0 0.0
    %2757 = vmatpush1.msra.mxu0 0.0
    %2758 = vmatprep.mubr.f32.mxu0 0.0
    %2759 = vmatmul.mubr.f32.gmra.mrb[0].mxu0 %v2683
    %v2760 = vpop.f32.mrb[0].mxu0
    %v2761 = vadd.f32 0.0, %v2760
    %v2762 = vpop.f32.mrb[0].mxu0
    %v2763 = vadd.f32 0.0, %v2762
    %2764 = vmatprep.mubr.f32.mxu0 0.0
    %2765 = vmatmul.mubr.f32.gmra.mrb[0].mxu0 %v2686
    %v2766 = vpop.f32.mrb[0].mxu0
    %v2767 = vadd.f32 0.0, %v2766
    %v2768 = vpop.f32.mrb[0].mxu0
    %v2769 = vadd.f32 0.0, %v2768
    %2770 = vmatprep.mubr.f32.mxu0 0.0
    %2771 = vmatmul.mubr.f32.gmra.mrb[0].mxu0 %v2689
    %v2772 = vpop.f32.mrb[0].mxu0
    %v2773 = vadd.f32 0.0, %v2772
    %v2774 = vpop.f32.mrb[0].mxu0
    %v2775 = vadd.f32 0.0, %v2774
    %2776 = vmatprep.mubr.f32.mxu0 0.0
    %2777 = vmatmul.mubr.f32.gmra.mrb[0].mxu0 %v2692
    %v2778 = vpop.f32.mrb[0].mxu0
    %v2779 = vadd.f32 0.0, %v2778
    %v2780 = vpop.f32.mrb[0].mxu0
    %v2781 = vadd.f32 0.0, %v2780
    %2782 = vdwg.mxu0
    %2783 = vmatprep.subr.mxu0 %v2517
    %2784 = vmatpush1.msra.mxu0 %v2516
    %2785 = vmatprep.subr.mxu0 %v2521
    %2786 = vmatpush1.msra.mxu0 %v2520
    %2787 = vmatprep.subr.mxu0 %v2525
    %2788 = vmatpush1.msra.mxu0 %v2524
    %2789 = vmatprep.subr.mxu0 %v2529
    %2790 = vmatpush1.msra.mxu0 %v2528
    %2791 = vmatprep.subr.mxu0 %v2533
    %2792 = vmatpush1.msra.mxu0 %v2532
    %2793 = vmatprep.subr.mxu0 %v2537
    %2794 = vmatpush1.msra.mxu0 %v2536
    %2795 = vmatprep.subr.mxu0 %v2541
    %2796 = vmatpush1.msra.mxu0 %v2540
    %2797 = vmatprep.subr.mxu0 %v2545
    %2798 = vmatpush1.msra.mxu0 %v2544
    %2799 = vmatprep.subr.mxu0 0.0
    %2800 = vmatpush1.msra.mxu0 0.0
    %2801 = vmatprep.subr.mxu0 0.0
    %2802 = vmatpush1.msra.mxu0 0.0
    %2803 = vmatprep.subr.mxu0 0.0
    %2804 = vmatpush1.msra.mxu0 0.0
    %2805 = vmatprep.subr.mxu0 0.0
    %2806 = vmatpush1.msra.mxu0 0.0
    %2807 = vmatprep.subr.mxu0 0.0
    %2808 = vmatpush1.msra.mxu0 0.0
    %2809 = vmatprep.subr.mxu0 0.0
    %2810 = vmatpush1.msra.mxu0 0.0
    %2811 = vmatprep.subr.mxu0 0.0
    %2812 = vmatpush1.msra.mxu0 0.0
    %2813 = vmatprep.subr.mxu0 0.0
    %2814 = vmatpush1.msra.mxu0 0.0
    %2815 = vmatprep.subr.mxu0 0.0
    %2816 = vmatpush1.msra.mxu0 0.0
    %2817 = vmatprep.subr.mxu0 0.0
    %2818 = vmatpush1.msra.mxu0 0.0
    %2819 = vmatprep.subr.mxu0 0.0
    %2820 = vmatpush1.msra.mxu0 0.0
    %2821 = vmatprep.subr.mxu0 0.0
    %2822 = vmatpush1.msra.mxu0 0.0
    %2823 = vmatprep.subr.mxu0 0.0
    %2824 = vmatpush1.msra.mxu0 0.0
    %2825 = vmatprep.subr.mxu0 0.0
    %2826 = vmatpush1.msra.mxu0 0.0
    %2827 = vmatprep.subr.mxu0 0.0
    %2828 = vmatpush1.msra.mxu0 0.0
    %2829 = vmatprep.subr.mxu0 0.0
    %2830 = vmatpush1.msra.mxu0 0.0
    %2831 = vmatprep.subr.mxu0 0.0
    %2832 = vmatpush1.msra.mxu0 0.0
    %2833 = vmatprep.subr.mxu0 0.0
    %2834 = vmatpush1.msra.mxu0 0.0
    %2835 = vmatprep.subr.mxu0 0.0
    %2836 = vmatpush1.msra.mxu0 0.0
    %2837 = vmatprep.subr.mxu0 0.0
    %2838 = vmatpush1.msra.mxu0 0.0
    %2839 = vmatprep.subr.mxu0 0.0
    %2840 = vmatpush1.msra.mxu0 0.0
    %2841 = vmatprep.subr.mxu0 0.0
    %2842 = vmatpush1.msra.mxu0 0.0
    %2843 = vmatprep.subr.mxu0 0.0
    %2844 = vmatpush1.msra.mxu0 0.0
    %2845 = vmatprep.subr.mxu0 0.0
    %2846 = vmatpush1.msra.mxu0 0.0
    %2847 = vmatprep.mubr.f32.mxu0 0.0
    %2848 = vmatmul.mubr.f32.gmra.mrb[0].mxu0 %v2683
    %v2849 = vpop.f32.mrb[0].mxu0
    %v2850 = vadd.f32 0.0, %v2849
    %v2851 = vpop.f32.mrb[0].mxu0
    %v2852 = vadd.f32 0.0, %v2851
    %2853 = vmatprep.mubr.f32.mxu0 0.0
    %2854 = vmatmul.mubr.f32.gmra.mrb[0].mxu0 %v2686
    %v2855 = vpop.f32.mrb[0].mxu0
    %v2856 = vadd.f32 0.0, %v2855
    %v2857 = vpop.f32.mrb[0].mxu0
    %v2858 = vadd.f32 0.0, %v2857
    %2859 = vmatprep.mubr.f32.mxu0 0.0
    %2860 = vmatmul.mubr.f32.gmra.mrb[0].mxu0 %v2689
    %v2861 = vpop.f32.mrb[0].mxu0
    %v2862 = vadd.f32 0.0, %v2861
    %v2863 = vpop.f32.mrb[0].mxu0
    %v2864 = vadd.f32 0.0, %v2863
    %2865 = vmatprep.mubr.f32.mxu0 0.0
    %2866 = vmatmul.mubr.f32.gmra.mrb[0].mxu0 %v2692
    %v2867 = vpop.f32.mrb[0].mxu0
    %v2868 = vadd.f32 0.0, %v2867
    %v2869 = vpop.f32.mrb[0].mxu0
    %v2870 = vadd.f32 0.0, %v2869
    %2871 = vdwg.mxu0
    %v2873 = vsel %vm396, %v2550, 0
    %v2876 = vsel %vm396, %v2551, 0
    %v2879 = vsel %vm396, %v2552, 0
    %v2882 = vsel %vm396, %v2553, 0
    %2884 = vmatprep.subr.mxu0 %v2515
    %2885 = vmatpush1.msra.mxu0 %v2514
    %2886 = vmatprep.subr.mxu0 %v2519
    %2887 = vmatpush1.msra.mxu0 %v2518
    %2888 = vmatprep.subr.mxu0 %v2523
    %2889 = vmatpush1.msra.mxu0 %v2522
    %2890 = vmatprep.subr.mxu0 %v2527
    %2891 = vmatpush1.msra.mxu0 %v2526
    %2892 = vmatprep.subr.mxu0 %v2531
    %2893 = vmatpush1.msra.mxu0 %v2530
    %2894 = vmatprep.subr.mxu0 %v2535
    %2895 = vmatpush1.msra.mxu0 %v2534
    %2896 = vmatprep.subr.mxu0 %v2539
    %2897 = vmatpush1.msra.mxu0 %v2538
    %2898 = vmatprep.subr.mxu0 %v2543
    %2899 = vmatpush1.msra.mxu0 %v2542
    %2900 = vmatprep.subr.mxu0 0.0
    %2901 = vmatpush1.msra.mxu0 0.0
    %2902 = vmatprep.subr.mxu0 0.0
    %2903 = vmatpush1.msra.mxu0 0.0
    %2904 = vmatprep.subr.mxu0 0.0
    %2905 = vmatpush1.msra.mxu0 0.0
    %2906 = vmatprep.subr.mxu0 0.0
    %2907 = vmatpush1.msra.mxu0 0.0
    %2908 = vmatprep.subr.mxu0 0.0
    %2909 = vmatpush1.msra.mxu0 0.0
    %2910 = vmatprep.subr.mxu0 0.0
    %2911 = vmatpush1.msra.mxu0 0.0
    %2912 = vmatprep.subr.mxu0 0.0
    %2913 = vmatpush1.msra.mxu0 0.0
    %2914 = vmatprep.subr.mxu0 0.0
    %2915 = vmatpush1.msra.mxu0 0.0
    %2916 = vmatprep.subr.mxu0 0.0
    %2917 = vmatpush1.msra.mxu0 0.0
    %2918 = vmatprep.subr.mxu0 0.0
    %2919 = vmatpush1.msra.mxu0 0.0
    %2920 = vmatprep.subr.mxu0 0.0
    %2921 = vmatpush1.msra.mxu0 0.0
    %2922 = vmatprep.subr.mxu0 0.0
    %2923 = vmatpush1.msra.mxu0 0.0
    %2924 = vmatprep.subr.mxu0 0.0
    %2925 = vmatpush1.msra.mxu0 0.0
    %2926 = vmatprep.subr.mxu0 0.0
    %2927 = vmatpush1.msra.mxu0 0.0
    %2928 = vmatprep.subr.mxu0 0.0
    %2929 = vmatpush1.msra.mxu0 0.0
    %2930 = vmatprep.subr.mxu0 0.0
    %2931 = vmatpush1.msra.mxu0 0.0
    %2932 = vmatprep.subr.mxu0 0.0
    %2933 = vmatpush1.msra.mxu0 0.0
    %2934 = vmatprep.subr.mxu0 0.0
    %2935 = vmatpush1.msra.mxu0 0.0
    %2936 = vmatprep.subr.mxu0 0.0
    %2937 = vmatpush1.msra.mxu0 0.0
    %2938 = vmatprep.subr.mxu0 0.0
    %2939 = vmatpush1.msra.mxu0 0.0
    %2940 = vmatprep.subr.mxu0 0.0
    %2941 = vmatpush1.msra.mxu0 0.0
    %2942 = vmatprep.subr.mxu0 0.0
    %2943 = vmatpush1.msra.mxu0 0.0
    %2944 = vmatprep.subr.mxu0 0.0
    %2945 = vmatpush1.msra.mxu0 0.0
    %2946 = vmatprep.subr.mxu0 0.0
    %2947 = vmatpush1.msra.mxu0 0.0
    %2948 = vmatprep.mubr.f32.mxu0 0.0
    %2949 = vmatmul.mubr.f32.gmra.mrb[0].mxu0 %v2873
    %v2950 = vpop.f32.mrb[0].mxu0
    %v2951 = vadd.f32 0.0, %v2950
    %v2952 = vpop.f32.mrb[0].mxu0
    %v2953 = vadd.f32 0.0, %v2952
    %2954 = vmatprep.mubr.f32.mxu0 0.0
    %2955 = vmatmul.mubr.f32.gmra.mrb[0].mxu0 %v2876
    %v2956 = vpop.f32.mrb[0].mxu0
    %v2957 = vadd.f32 0.0, %v2956
    %v2958 = vpop.f32.mrb[0].mxu0
    %v2959 = vadd.f32 0.0, %v2958
    %2960 = vmatprep.mubr.f32.mxu0 0.0
    %2961 = vmatmul.mubr.f32.gmra.mrb[0].mxu0 %v2879
    %v2962 = vpop.f32.mrb[0].mxu0
    %v2963 = vadd.f32 0.0, %v2962
    %v2964 = vpop.f32.mrb[0].mxu0
    %v2965 = vadd.f32 0.0, %v2964
    %2966 = vmatprep.mubr.f32.mxu0 0.0
    %2967 = vmatmul.mubr.f32.gmra.mrb[0].mxu0 %v2882
    %v2968 = vpop.f32.mrb[0].mxu0
    %v2969 = vadd.f32 0.0, %v2968
    %v2970 = vpop.f32.mrb[0].mxu0
    %v2971 = vadd.f32 0.0, %v2970
    %2972 = vdwg.mxu0
    %2973 = vmatprep.subr.mxu0 %v2517
    %2974 = vmatpush1.msra.mxu0 %v2516
    %2975 = vmatprep.subr.mxu0 %v2521
    %2976 = vmatpush1.msra.mxu0 %v2520
    %2977 = vmatprep.subr.mxu0 %v2525
    %2978 = vmatpush1.msra.mxu0 %v2524
    %2979 = vmatprep.subr.mxu0 %v2529
    %2980 = vmatpush1.msra.mxu0 %v2528
    %2981 = vmatprep.subr.mxu0 %v2533
    %2982 = vmatpush1.msra.mxu0 %v2532
    %2983 = vmatprep.subr.mxu0 %v2537
    %2984 = vmatpush1.msra.mxu0 %v2536
    %2985 = vmatprep.subr.mxu0 %v2541
    %2986 = vmatpush1.msra.mxu0 %v2540
    %2987 = vmatprep.subr.mxu0 %v2545
    %2988 = vmatpush1.msra.mxu0 %v2544
    %2989 = vmatprep.subr.mxu0 0.0
    %2990 = vmatpush1.msra.mxu0 0.0
    %2991 = vmatprep.subr.mxu0 0.0
    %2992 = vmatpush1.msra.mxu0 0.0
    %2993 = vmatprep.subr.mxu0 0.0
    %2994 = vmatpush1.msra.mxu0 0.0
    %2995 = vmatprep.subr.mxu0 0.0
    %2996 = vmatpush1.msra.mxu0 0.0
    %2997 = vmatprep.subr.mxu0 0.0
    %2998 = vmatpush1.msra.mxu0 0.0
    %2999 = vmatprep.subr.mxu0 0.0
    %3000 = vmatpush1.msra.mxu0 0.0
    %3001 = vmatprep.subr.mxu0 0.0
    %3002 = vmatpush1.msra.mxu0 0.0
    %3003 = vmatprep.subr.mxu0 0.0
    %3004 = vmatpush1.msra.mxu0 0.0
    %3005 = vmatprep.subr.mxu0 0.0
    %3006 = vmatpush1.msra.mxu0 0.0
    %3007 = vmatprep.subr.mxu0 0.0
    %3008 = vmatpush1.msra.mxu0 0.0
    %3009 = vmatprep.subr.mxu0 0.0
    %3010 = vmatpush1.msra.mxu0 0.0
    %3011 = vmatprep.subr.mxu0 0.0
    %3012 = vmatpush1.msra.mxu0 0.0
    %3013 = vmatprep.subr.mxu0 0.0
    %3014 = vmatpush1.msra.mxu0 0.0
    %3015 = vmatprep.subr.mxu0 0.0
    %3016 = vmatpush1.msra.mxu0 0.0
    %3017 = vmatprep.subr.mxu0 0.0
    %3018 = vmatpush1.msra.mxu0 0.0
    %3019 = vmatprep.subr.mxu0 0.0
    %3020 = vmatpush1.msra.mxu0 0.0
    %3021 = vmatprep.subr.mxu0 0.0
    %3022 = vmatpush1.msra.mxu0 0.0
    %3023 = vmatprep.subr.mxu0 0.0
    %3024 = vmatpush1.msra.mxu0 0.0
    %3025 = vmatprep.subr.mxu0 0.0
    %3026 = vmatpush1.msra.mxu0 0.0
    %3027 = vmatprep.subr.mxu0 0.0
    %3028 = vmatpush1.msra.mxu0 0.0
    %3029 = vmatprep.subr.mxu0 0.0
    %3030 = vmatpush1.msra.mxu0 0.0
    %3031 = vmatprep.subr.mxu0 0.0
    %3032 = vmatpush1.msra.mxu0 0.0
    %3033 = vmatprep.subr.mxu0 0.0
    %3034 = vmatpush1.msra.mxu0 0.0
    %3035 = vmatprep.subr.mxu0 0.0
    %3036 = vmatpush1.msra.mxu0 0.0
    %3037 = vmatprep.mubr.f32.mxu0 0.0
    %3038 = vmatmul.mubr.f32.gmra.mrb[0].mxu0 %v2873
    %v3039 = vpop.f32.mrb[0].mxu0
    %v3040 = vadd.f32 0.0, %v3039
    %v3041 = vpop.f32.mrb[0].mxu0
    %v3042 = vadd.f32 0.0, %v3041
    %3043 = vmatprep.mubr.f32.mxu0 0.0
    %3044 = vmatmul.mubr.f32.gmra.mrb[0].mxu0 %v2876
    %v3045 = vpop.f32.mrb[0].mxu0
    %v3046 = vadd.f32 0.0, %v3045
    %v3047 = vpop.f32.mrb[0].mxu0
    %v3048 = vadd.f32 0.0, %v3047
    %3049 = vmatprep.mubr.f32.mxu0 0.0
    %3050 = vmatmul.mubr.f32.gmra.mrb[0].mxu0 %v2879
    %v3051 = vpop.f32.mrb[0].mxu0
    %v3052 = vadd.f32 0.0, %v3051
    %v3053 = vpop.f32.mrb[0].mxu0
    %v3054 = vadd.f32 0.0, %v3053
    %3055 = vmatprep.mubr.f32.mxu0 0.0
    %3056 = vmatmul.mubr.f32.gmra.mrb[0].mxu0 %v2882
    %v3057 = vpop.f32.mrb[0].mxu0
    %v3058 = vadd.f32 0.0, %v3057
    %v3059 = vpop.f32.mrb[0].mxu0
    %v3060 = vadd.f32 0.0, %v3059
    %3061 = vdwg.mxu0
    %v3062 = vmax.f32 %v2761, %v2951
    %v3063 = vmax.f32 %v2763, %v2953
    %v3064 = vmax.f32 %v2850, %v3040
    %v3065 = vmax.f32 %v2852, %v3042
    %v3066 = vmax.f32 %v2767, %v2957
    %v3067 = vmax.f32 %v2769, %v2959
    %v3068 = vmax.f32 %v2856, %v3046
    %v3069 = vmax.f32 %v2858, %v3048
    %v3070 = vmax.f32 %v2773, %v2963
    %v3071 = vmax.f32 %v2775, %v2965
    %v3072 = vmax.f32 %v2862, %v3052
    %v3073 = vmax.f32 %v2864, %v3054
    %v3074 = vmax.f32 %v2779, %v2969
    %v3075 = vmax.f32 %v2781, %v2971
    %v3076 = vmax.f32 %v2868, %v3058
    %v3077 = vmax.f32 %v2870, %v3060
    %3094 = vrot.lane.b32.xlu0 %v3062, 127
    %v3095 = vpop.permute.xlu0 %3094
    %3096 = vrot.lane.b32.xlu0 %v3063, 127
    %v3097 = vpop.permute.xlu0 %3096
    %3098 = vrot.lane.b32.xlu0 %v3064, 127
    %v3099 = vpop.permute.xlu0 %3098
    %3100 = vrot.lane.b32.xlu0 %v3065, 127
    %v3101 = vpop.permute.xlu0 %3100
    %3102 = vrot.lane.b32.xlu0 %v3066, 127
    %v3103 = vpop.permute.xlu0 %3102
    %3104 = vrot.lane.b32.xlu0 %v3067, 127
    %v3105 = vpop.permute.xlu0 %3104
    %3106 = vrot.lane.b32.xlu0 %v3068, 127
    %v3107 = vpop.permute.xlu0 %3106
    %3108 = vrot.lane.b32.xlu0 %v3069, 127
    %v3109 = vpop.permute.xlu0 %3108
    %3110 = vrot.lane.b32.xlu0 %v3070, 127
    %v3111 = vpop.permute.xlu0 %3110
    %3112 = vrot.lane.b32.xlu0 %v3071, 127
    %v3113 = vpop.permute.xlu0 %3112
    %3114 = vrot.lane.b32.xlu0 %v3072, 127
    %v3115 = vpop.permute.xlu0 %3114
    %3116 = vrot.lane.b32.xlu0 %v3073, 127
    %v3117 = vpop.permute.xlu0 %3116
    %3118 = vrot.lane.b32.xlu0 %v3074, 127
    %v3119 = vpop.permute.xlu0 %3118
    %3120 = vrot.lane.b32.xlu0 %v3075, 127
    %v3121 = vpop.permute.xlu0 %3120
    %3122 = vrot.lane.b32.xlu0 %v3076, 127
    %v3123 = vpop.permute.xlu0 %3122
    %3124 = vrot.lane.b32.xlu0 %v3077, 127
    %v3125 = vpop.permute.xlu0 %3124
    %vm3126 = vcmask 1039360
    %v3127 = vsel %vm3126, %v3095, %v3097
    %v3128 = vsel %vm3126, %v3097, %v3099
    %v3129 = vsel %vm3126, %v3099, %v3101
    %v3130 = vsel %vm3126, %v3103, %v3105
    %v3131 = vsel %vm3126, %v3105, %v3107
    %v3132 = vsel %vm3126, %v3107, %v3109
    %v3133 = vsel %vm3126, %v3111, %v3113
    %v3134 = vsel %vm3126, %v3113, %v3115
    %v3135 = vsel %vm3126, %v3115, %v3117
    %v3136 = vsel %vm3126, %v3119, %v3121
    %v3137 = vsel %vm3126, %v3121, %v3123
    %v3138 = vsel %vm3126, %v3123, %v3125
    %v3159 = vsel %vm3126, %v3101, %v3095
    %v3160 = vsel %vm3126, %v3109, %v3103
    %v3161 = vsel %vm3126, %v3117, %v3111
    %v3162 = vsel %vm3126, %v3125, %v3119
    %v3163 = vmax.f32 %v3062, %v3127
    %v3164 = vmax.f32 %v3063, %v3128
    %v3165 = vmax.f32 %v3064, %v3129
    %v3166 = vmax.f32 %v3065, %v3159
    %v3167 = vmax.f32 %v3066, %v3130
    %v3168 = vmax.f32 %v3067, %v3131
    %v3169 = vmax.f32 %v3068, %v3132
    %v3170 = vmax.f32 %v3069, %v3160
    %v3171 = vmax.f32 %v3070, %v3133
    %v3172 = vmax.f32 %v3071, %v3134
    %v3173 = vmax.f32 %v3072, %v3135
    %v3174 = vmax.f32 %v3073, %v3161
    %v3175 = vmax.f32 %v3074, %v3136
    %v3176 = vmax.f32 %v3075, %v3137
    %v3177 = vmax.f32 %v3076, %v3138
    %v3178 = vmax.f32 %v3077, %v3162
    %3179 = vmatprep.subr.mxu0 %v2555
    %3180 = vmatpush1.msra.mxu0 %v2554
    %3181 = vmatprep.subr.mxu0 %v2557
    %3182 = vmatpush1.msra.mxu0 %v2556
    %3183 = vmatprep.subr.mxu0 %v2559
    %3184 = vmatpush1.msra.mxu0 %v2558
    %3185 = vmatprep.subr.mxu0 %v2561
    %3186 = vmatpush1.msra.mxu0 %v2560
    %3187 = vmatprep.subr.mxu0 %v2563
    %3188 = vmatpush1.msra.mxu0 %v2562
    %3189 = vmatprep.subr.mxu0 %v2565
    %3190 = vmatpush1.msra.mxu0 %v2564
    %3191 = vmatprep.subr.mxu0 %v2567
    %3192 = vmatpush1.msra.mxu0 %v2566
    %3193 = vmatprep.subr.mxu0 %v2569
    %3194 = vmatpush1.msra.mxu0 %v2568
    %3195 = vmatprep.subr.mxu0 %v2571
    %3196 = vmatpush1.msra.mxu0 %v2570
    %3197 = vmatprep.subr.mxu0 %v2573
    %3198 = vmatpush1.msra.mxu0 %v2572
    %3199 = vmatprep.subr.mxu0 %v2575
    %3200 = vmatpush1.msra.mxu0 %v2574
    %3201 = vmatprep.subr.mxu0 %v2577
    %3202 = vmatpush1.msra.mxu0 %v2576
    %3203 = vmatprep.subr.mxu0 %v2579
    %3204 = vmatpush1.msra.mxu0 %v2578
    %3205 = vmatprep.subr.mxu0 %v2581
    %3206 = vmatpush1.msra.mxu0 %v2580
    %3207 = vmatprep.subr.mxu0 %v2583
    %3208 = vmatpush1.msra.mxu0 %v2582
    %3209 = vmatprep.subr.mxu0 %v2585
    %3210 = vmatpush1.msra.mxu0 %v2584
    %3211 = vmatprep.subr.mxu0 %v2587
    %3212 = vmatpush1.msra.mxu0 %v2586
    %3213 = vmatprep.subr.mxu0 %v2589
    %3214 = vmatpush1.msra.mxu0 %v2588
    %3215 = vmatprep.subr.mxu0 %v2591
    %3216 = vmatpush1.msra.mxu0 %v2590
    %3217 = vmatprep.subr.mxu0 %v2593
    %3218 = vmatpush1.msra.mxu0 %v2592
    %3219 = vmatprep.subr.mxu0 %v2595
    %3220 = vmatpush1.msra.mxu0 %v2594
    %3221 = vmatprep.subr.mxu0 %v2597
    %3222 = vmatpush1.msra.mxu0 %v2596
    %3223 = vmatprep.subr.mxu0 %v2599
    %3224 = vmatpush1.msra.mxu0 %v2598
    %3225 = vmatprep.subr.mxu0 %v2601
    %3226 = vmatpush1.msra.mxu0 %v2600
    %3227 = vmatprep.subr.mxu0 %v2603
    %3228 = vmatpush1.msra.mxu0 %v2602
    %3229 = vmatprep.subr.mxu0 %v2605
    %3230 = vmatpush1.msra.mxu0 %v2604
    %3231 = vmatprep.subr.mxu0 %v2607
    %3232 = vmatpush1.msra.mxu0 %v2606
    %3233 = vmatprep.subr.mxu0 %v2609
    %3234 = vmatpush1.msra.mxu0 %v2608
    %3235 = vmatprep.subr.mxu0 %v2611
    %3236 = vmatpush1.msra.mxu0 %v2610
    %3237 = vmatprep.subr.mxu0 %v2613
    %3238 = vmatpush1.msra.mxu0 %v2612
    %3239 = vmatprep.subr.mxu0 %v2615
    %3240 = vmatpush1.msra.mxu0 %v2614
    %3241 = vmatprep.subr.mxu0 %v2617
    %3242 = vmatpush1.msra.mxu0 %v2616
    %3243 = vmatprep.mubr.f32.mxu0 %v3164
    %3244 = vmatmul.mubr.f32.gmra.mrb[0].mxu0 %v3163
    %v3245 = vpop.f32.mrb[0].mxu0
    %v3246 = vadd.f32 0.0, %v3245
    %v3247 = vpop.f32.mrb[0].mxu0
    %v3248 = vadd.f32 0.0, %v3247
    %3249 = vmatprep.mubr.f32.mxu0 %v3168
    %3250 = vmatmul.mubr.f32.gmra.mrb[0].mxu0 %v3167
    %v3251 = vpop.f32.mrb[0].mxu0
    %v3252 = vadd.f32 0.0, %v3251
    %v3253 = vpop.f32.mrb[0].mxu0
    %v3254 = vadd.f32 0.0, %v3253
    %3255 = vmatprep.mubr.f32.mxu0 %v3172
    %3256 = vmatmul.mubr.f32.gmra.mrb[0].mxu0 %v3171
    %v3257 = vpop.f32.mrb[0].mxu0
    %v3258 = vadd.f32 0.0, %v3257
    %v3259 = vpop.f32.mrb[0].mxu0
    %v3260 = vadd.f32 0.0, %v3259
    %3261 = vmatprep.mubr.f32.mxu0 %v3176
    %3262 = vmatmul.mubr.f32.gmra.mrb[0].mxu0 %v3175
    %v3263 = vpop.f32.mrb[0].mxu0
    %v3264 = vadd.f32 0.0, %v3263
    %v3265 = vpop.f32.mrb[0].mxu0
    %v3266 = vadd.f32 0.0, %v3265
    %3267 = vdwg.mxu0
    %3268 = vmatprep.subr.mxu0 %v2619
    %3269 = vmatpush1.msra.mxu0 %v2618
    %3270 = vmatprep.subr.mxu0 %v2621
    %3271 = vmatpush1.msra.mxu0 %v2620
    %3272 = vmatprep.subr.mxu0 %v2623
    %3273 = vmatpush1.msra.mxu0 %v2622
    %3274 = vmatprep.subr.mxu0 %v2625
    %3275 = vmatpush1.msra.mxu0 %v2624
    %3276 = vmatprep.subr.mxu0 %v2627
    %3277 = vmatpush1.msra.mxu0 %v2626
    %3278 = vmatprep.subr.mxu0 %v2629
    %3279 = vmatpush1.msra.mxu0 %v2628
    %3280 = vmatprep.subr.mxu0 %v2631
    %3281 = vmatpush1.msra.mxu0 %v2630
    %3282 = vmatprep.subr.mxu0 %v2633
    %3283 = vmatpush1.msra.mxu0 %v2632
    %3284 = vmatprep.subr.mxu0 %v2635
    %3285 = vmatpush1.msra.mxu0 %v2634
    %3286 = vmatprep.subr.mxu0 %v2637
    %3287 = vmatpush1.msra.mxu0 %v2636
    %3288 = vmatprep.subr.mxu0 %v2639
    %3289 = vmatpush1.msra.mxu0 %v2638
    %3290 = vmatprep.subr.mxu0 %v2641
    %3291 = vmatpush1.msra.mxu0 %v2640
    %3292 = vmatprep.subr.mxu0 %v2643
    %3293 = vmatpush1.msra.mxu0 %v2642
    %3294 = vmatprep.subr.mxu0 %v2645
    %3295 = vmatpush1.msra.mxu0 %v2644
    %3296 = vmatprep.subr.mxu0 %v2647
    %3297 = vmatpush1.msra.mxu0 %v2646
    %3298 = vmatprep.subr.mxu0 %v2649
    %3299 = vmatpush1.msra.mxu0 %v2648
    %3300 = vmatprep.subr.mxu0 %v2651
    %3301 = vmatpush1.msra.mxu0 %v2650
    %3302 = vmatprep.subr.mxu0 %v2653
    %3303 = vmatpush1.msra.mxu0 %v2652
    %3304 = vmatprep.subr.mxu0 %v2655
    %3305 = vmatpush1.msra.mxu0 %v2654
    %3306 = vmatprep.subr.mxu0 %v2657
    %3307 = vmatpush1.msra.mxu0 %v2656
    %3308 = vmatprep.subr.mxu0 %v2659
    %3309 = vmatpush1.msra.mxu0 %v2658
    %3310 = vmatprep.subr.mxu0 %v2661
    %3311 = vmatpush1.msra.mxu0 %v2660
    %3312 = vmatprep.subr.mxu0 %v2663
    %3313 = vmatpush1.msra.mxu0 %v2662
    %3314 = vmatprep.subr.mxu0 %v2665
    %3315 = vmatpush1.msra.mxu0 %v2664
    %3316 = vmatprep.subr.mxu0 %v2667
    %3317 = vmatpush1.msra.mxu0 %v2666
    %3318 = vmatprep.subr.mxu0 %v2669
    %3319 = vmatpush1.msra.mxu0 %v2668
    %3320 = vmatprep.subr.mxu0 %v2671
    %3321 = vmatpush1.msra.mxu0 %v2670
    %3322 = vmatprep.subr.mxu0 %v2673
    %3323 = vmatpush1.msra.mxu0 %v2672
    %3324 = vmatprep.subr.mxu0 %v2675
    %3325 = vmatpush1.msra.mxu0 %v2674
    %3326 = vmatprep.subr.mxu0 %v2677
    %3327 = vmatpush1.msra.mxu0 %v2676
    %3328 = vmatprep.subr.mxu0 %v2679
    %3329 = vmatpush1.msra.mxu0 %v2678
    %3330 = vmatprep.subr.mxu0 %v2681
    %3331 = vmatpush1.msra.mxu0 %v2680
    %3332 = vmatprep.mubr.f32.mxu0 %v3166
    %3333 = vmatmul.mubr.f32.gmra.mrb[0].mxu0 %v3165
    %v3334 = vpop.f32.mrb[0].mxu0
    %v3335 = vadd.f32 %v3246, %v3334
    %v3336 = vpop.f32.mrb[0].mxu0
    %v3337 = vadd.f32 %v3248, %v3336
    %3338 = vmatprep.mubr.f32.mxu0 %v3170
    %3339 = vmatmul.mubr.f32.gmra.mrb[0].mxu0 %v3169
    %v3340 = vpop.f32.mrb[0].mxu0
    %v3341 = vadd.f32 %v3252, %v3340
    %v3342 = vpop.f32.mrb[0].mxu0
    %v3343 = vadd.f32 %v3254, %v3342
    %3344 = vmatprep.mubr.f32.mxu0 %v3174
    %3345 = vmatmul.mubr.f32.gmra.mrb[0].mxu0 %v3173
    %v3346 = vpop.f32.mrb[0].mxu0
    %v3347 = vadd.f32 %v3258, %v3346
    %v3348 = vpop.f32.mrb[0].mxu0
    %v3349 = vadd.f32 %v3260, %v3348
    %3350 = vmatprep.mubr.f32.mxu0 %v3178
    %3351 = vmatmul.mubr.f32.gmra.mrb[0].mxu0 %v3177
    %v3352 = vpop.f32.mrb[0].mxu0
    %v3353 = vadd.f32 %v3264, %v3352
    %v3354 = vpop.f32.mrb[0].mxu0
    %v3355 = vadd.f32 %v3266, %v3354
    %3356 = vdwg.mxu0
    %s3357 = scalar_lea.vmem %s11, 256
    %v3358 = vld [vmem:[%s3357] sm:$0xff]
    %v3359 = vld [vmem:[%s3357 + $0x8] sm:$0xff]
    %v3360 = vld [vmem:[%s3357 + $0x10] sm:$0xff]
    %v3361 = vld [vmem:[%s3357 + $0x18] sm:$0xff]
    %v3362 = vld [vmem:[%s3357 + $0x20] sm:$0xff]
    %v3363 = vld [vmem:[%s3357 + $0x28] sm:$0xff]
    %v3364 = vld [vmem:[%s3357 + $0x30] sm:$0xff]
    %v3365 = vld [vmem:[%s3357 + $0x38] sm:$0xff]
    %v3366 = vld [vmem:[%s3357 + $0x40] sm:$0xff]
    %v3367 = vld [vmem:[%s3357 + $0x48] sm:$0xff]
    %v3368 = vld [vmem:[%s3357 + $0x50] sm:$0xff]
    %v3369 = vld [vmem:[%s3357 + $0x58] sm:$0xff]
    %v3370 = vld [vmem:[%s3357 + $0x60] sm:$0xff]
    %v3371 = vld [vmem:[%s3357 + $0x68] sm:$0xff]
    %v3372 = vld [vmem:[%s3357 + $0x70] sm:$0xff]
    %v3373 = vld [vmem:[%s3357 + $0x78] sm:$0xff]
    %v3374 = vld [vmem:[%s3357 + $0x80] sm:$0xff]
    %v3375 = vld [vmem:[%s3357 + $0x88] sm:$0xff]
    %v3376 = vld [vmem:[%s3357 + $0x90] sm:$0xff]
    %v3377 = vld [vmem:[%s3357 + $0x98] sm:$0xff]
    %v3378 = vld [vmem:[%s3357 + $0xa0] sm:$0xff]
    %v3379 = vld [vmem:[%s3357 + $0xa8] sm:$0xff]
    %v3380 = vld [vmem:[%s3357 + $0xb0] sm:$0xff]
    %v3381 = vld [vmem:[%s3357 + $0xb8] sm:$0xff]
    %v3382 = vld [vmem:[%s3357 + $0xc0] sm:$0xff]
    %v3383 = vld [vmem:[%s3357 + $0xc8] sm:$0xff]
    %v3384 = vld [vmem:[%s3357 + $0xd0] sm:$0xff]
    %v3385 = vld [vmem:[%s3357 + $0xd8] sm:$0xff]
    %v3386 = vld [vmem:[%s3357 + $0xe0] sm:$0xff]
    %v3387 = vld [vmem:[%s3357 + $0xe8] sm:$0xff]
    %v3388 = vld [vmem:[%s3357 + $0xf0] sm:$0xff]
    %v3389 = vld [vmem:[%s3357 + $0xf8] sm:$0xff]
    %v3390 = vld [vmem:[#allocation16] sm:$0xff]
    %v3391 = vld [vmem:[#allocation16 + $0x8] sm:$0xff]
    %v3392 = vld [vmem:[#allocation16 + $0x10] sm:$0xff]
    %v3393 = vld [vmem:[#allocation16 + $0x18] sm:$0xff]
    %vm3394 = vcmask 261120
    %v3396 = vsel %vm3394, %v3390, 0
    %v3399 = vsel %vm3394, %v3391, 0
    %v3402 = vsel %vm3394, %v3392, 0
    %v3405 = vsel %vm3394, %v3393, 0
    %3407 = vmatprep.subr.mxu0 %v3337
    %3408 = vmatpush1.msra.mxu0 %v3335
    %3409 = vmatprep.subr.mxu0 %v3343
    %3410 = vmatpush1.msra.mxu0 %v3341
    %3411 = vmatprep.subr.mxu0 %v3349
    %3412 = vmatpush1.msra.mxu0 %v3347
    %3413 = vmatprep.subr.mxu0 %v3355
    %3414 = vmatpush1.msra.mxu0 %v3353
    %3415 = vmatprep.subr.mxu0 0.0
    %3416 = vmatpush1.msra.mxu0 0.0
    %3417 = vmatprep.subr.mxu0 0.0
    %3418 = vmatpush1.msra.mxu0 0.0
    %3419 = vmatprep.subr.mxu0 0.0
    %3420 = vmatpush1.msra.mxu0 0.0
    %3421 = vmatprep.subr.mxu0 0.0
    %3422 = vmatpush1.msra.mxu0 0.0
    %3423 = vmatprep.subr.mxu0 0.0
    %3424 = vmatpush1.msra.mxu0 0.0
    %3425 = vmatprep.subr.mxu0 0.0
    %3426 = vmatpush1.msra.mxu0 0.0
    %3427 = vmatprep.subr.mxu0 0.0
    %3428 = vmatpush1.msra.mxu0 0.0
    %3429 = vmatprep.subr.mxu0 0.0
    %3430 = vmatpush1.msra.mxu0 0.0
    %3431 = vmatprep.subr.mxu0 0.0
    %3432 = vmatpush1.msra.mxu0 0.0
    %3433 = vmatprep.subr.mxu0 0.0
    %3434 = vmatpush1.msra.mxu0 0.0
    %3435 = vmatprep.subr.mxu0 0.0
    %3436 = vmatpush1.msra.mxu0 0.0
    %3437 = vmatprep.subr.mxu0 0.0
    %3438 = vmatpush1.msra.mxu0 0.0
    %3439 = vmatprep.subr.mxu0 0.0
    %3440 = vmatpush1.msra.mxu0 0.0
    %3441 = vmatprep.subr.mxu0 0.0
    %3442 = vmatpush1.msra.mxu0 0.0
    %3443 = vmatprep.subr.mxu0 0.0
    %3444 = vmatpush1.msra.mxu0 0.0
    %3445 = vmatprep.subr.mxu0 0.0
    %3446 = vmatpush1.msra.mxu0 0.0
    %3447 = vmatprep.subr.mxu0 0.0
    %3448 = vmatpush1.msra.mxu0 0.0
    %3449 = vmatprep.subr.mxu0 0.0
    %3450 = vmatpush1.msra.mxu0 0.0
    %3451 = vmatprep.subr.mxu0 0.0
    %3452 = vmatpush1.msra.mxu0 0.0
    %3453 = vmatprep.subr.mxu0 0.0
    %3454 = vmatpush1.msra.mxu0 0.0
    %3455 = vmatprep.subr.mxu0 0.0
    %3456 = vmatpush1.msra.mxu0 0.0
    %3457 = vmatprep.subr.mxu0 0.0
    %3458 = vmatpush1.msra.mxu0 0.0
    %3459 = vmatprep.subr.mxu0 0.0
    %3460 = vmatpush1.msra.mxu0 0.0
    %3461 = vmatprep.subr.mxu0 0.0
    %3462 = vmatpush1.msra.mxu0 0.0
    %3463 = vmatprep.subr.mxu0 0.0
    %3464 = vmatpush1.msra.mxu0 0.0
    %3465 = vmatprep.subr.mxu0 0.0
    %3466 = vmatpush1.msra.mxu0 0.0
    %3467 = vmatprep.subr.mxu0 0.0
    %3468 = vmatpush1.msra.mxu0 0.0
    %3469 = vmatprep.subr.mxu0 0.0
    %3470 = vmatpush1.msra.mxu0 0.0
    %3471 = vmatprep.mubr.f32.mxu0 0.0
    %3472 = vmatmul.mubr.f32.gmra.mrb[0].mxu0 %v3396
    %v3473 = vpop.f32.mrb[0].mxu0
    %v3474 = vadd.f32 0.0, %v3473
    %v3475 = vpop.f32.mrb[0].mxu0
    %v3476 = vadd.f32 0.0, %v3475
    %3477 = vmatprep.mubr.f32.mxu0 0.0
    %3478 = vmatmul.mubr.f32.gmra.mrb[0].mxu0 %v3399
    %v3479 = vpop.f32.mrb[0].mxu0
    %v3480 = vadd.f32 0.0, %v3479
    %v3481 = vpop.f32.mrb[0].mxu0
    %v3482 = vadd.f32 0.0, %v3481
    %3483 = vmatprep.mubr.f32.mxu0 0.0
    %3484 = vmatmul.mubr.f32.gmra.mrb[0].mxu0 %v3402
    %v3485 = vpop.f32.mrb[0].mxu0
    %v3486 = vadd.f32 0.0, %v3485
    %v3487 = vpop.f32.mrb[0].mxu0
    %v3488 = vadd.f32 0.0, %v3487
    %3489 = vmatprep.mubr.f32.mxu0 0.0
    %3490 = vmatmul.mubr.f32.gmra.mrb[0].mxu0 %v3405
    %v3491 = vpop.f32.mrb[0].mxu0
    %v3492 = vadd.f32 0.0, %v3491
    %v3493 = vpop.f32.mrb[0].mxu0
    %v3494 = vadd.f32 0.0, %v3493
    %3495 = vdwg.mxu0
    %v3496 = vld [vmem:[%s11] sm:$0xff]
    %v3497 = vld [vmem:[%s11 + $0x8] sm:$0xff]
    %v3498 = vld [vmem:[%s11 + $0x10] sm:$0xff]
    %v3499 = vld [vmem:[%s11 + $0x18] sm:$0xff]
    %v3500 = vld [vmem:[%s11 + $0x20] sm:$0xff]
    %v3501 = vld [vmem:[%s11 + $0x28] sm:$0xff]
    %v3502 = vld [vmem:[%s11 + $0x30] sm:$0xff]
    %v3503 = vld [vmem:[%s11 + $0x38] sm:$0xff]
    %v3504 = vld [vmem:[%s11 + $0x40] sm:$0xff]
    %v3505 = vld [vmem:[%s11 + $0x48] sm:$0xff]
    %v3506 = vld [vmem:[%s11 + $0x50] sm:$0xff]
    %v3507 = vld [vmem:[%s11 + $0x58] sm:$0xff]
    %v3508 = vld [vmem:[%s11 + $0x60] sm:$0xff]
    %v3509 = vld [vmem:[%s11 + $0x68] sm:$0xff]
    %v3510 = vld [vmem:[%s11 + $0x70] sm:$0xff]
    %v3511 = vld [vmem:[%s11 + $0x78] sm:$0xff]
    %v3512 = vld [vmem:[%s11 + $0x80] sm:$0xff]
    %v3513 = vld [vmem:[%s11 + $0x88] sm:$0xff]
    %v3514 = vld [vmem:[%s11 + $0x90] sm:$0xff]
    %v3515 = vld [vmem:[%s11 + $0x98] sm:$0xff]
    %v3516 = vld [vmem:[%s11 + $0xa0] sm:$0xff]
    %v3517 = vld [vmem:[%s11 + $0xa8] sm:$0xff]
    %v3518 = vld [vmem:[%s11 + $0xb0] sm:$0xff]
    %v3519 = vld [vmem:[%s11 + $0xb8] sm:$0xff]
    %v3520 = vld [vmem:[%s11 + $0xc0] sm:$0xff]
    %v3521 = vld [vmem:[%s11 + $0xc8] sm:$0xff]
    %v3522 = vld [vmem:[%s11 + $0xd0] sm:$0xff]
    %v3523 = vld [vmem:[%s11 + $0xd8] sm:$0xff]
    %v3524 = vld [vmem:[%s11 + $0xe0] sm:$0xff]
    %v3525 = vld [vmem:[%s11 + $0xe8] sm:$0xff]
    %v3526 = vld [vmem:[%s11 + $0xf0] sm:$0xff]
    %v3527 = vld [vmem:[%s11 + $0xf8] sm:$0xff]
    %3528 = vmatprep.subr.mxu0 0.0
    %3529 = vmatpush1.msra.mxu0 %v3496
    %3530 = vmatprep.subr.mxu0 0.0
    %3531 = vmatpush1.msra.mxu0 %v3497
    %3532 = vmatprep.subr.mxu0 0.0
    %3533 = vmatpush1.msra.mxu0 %v3498
    %3534 = vmatprep.subr.mxu0 0.0
    %3535 = vmatpush1.msra.mxu0 %v3499
    %3536 = vmatprep.subr.mxu0 0.0
    %3537 = vmatpush1.msra.mxu0 %v3500
    %3538 = vmatprep.subr.mxu0 0.0
    %3539 = vmatpush1.msra.mxu0 %v3501
    %3540 = vmatprep.subr.mxu0 0.0
    %3541 = vmatpush1.msra.mxu0 %v3502
    %3542 = vmatprep.subr.mxu0 0.0
    %3543 = vmatpush1.msra.mxu0 %v3503
    %3544 = vmatprep.subr.mxu0 0.0
    %3545 = vmatpush1.msra.mxu0 %v3504
    %3546 = vmatprep.subr.mxu0 0.0
    %3547 = vmatpush1.msra.mxu0 %v3505
    %3548 = vmatprep.subr.mxu0 0.0
    %3549 = vmatpush1.msra.mxu0 %v3506
    %3550 = vmatprep.subr.mxu0 0.0
    %3551 = vmatpush1.msra.mxu0 %v3507
    %3552 = vmatprep.subr.mxu0 0.0
    %3553 = vmatpush1.msra.mxu0 %v3508
    %3554 = vmatprep.subr.mxu0 0.0
    %3555 = vmatpush1.msra.mxu0 %v3509
    %3556 = vmatprep.subr.mxu0 0.0
    %3557 = vmatpush1.msra.mxu0 %v3510
    %3558 = vmatprep.subr.mxu0 0.0
    %3559 = vmatpush1.msra.mxu0 %v3511
    %3560 = vmatprep.subr.mxu0 0.0
    %3561 = vmatpush1.msra.mxu0 %v3512
    %3562 = vmatprep.subr.mxu0 0.0
    %3563 = vmatpush1.msra.mxu0 %v3513
    %3564 = vmatprep.subr.mxu0 0.0
    %3565 = vmatpush1.msra.mxu0 %v3514
    %3566 = vmatprep.subr.mxu0 0.0
    %3567 = vmatpush1.msra.mxu0 %v3515
    %3568 = vmatprep.subr.mxu0 0.0
    %3569 = vmatpush1.msra.mxu0 %v3516
    %3570 = vmatprep.subr.mxu0 0.0
    %3571 = vmatpush1.msra.mxu0 %v3517
    %3572 = vmatprep.subr.mxu0 0.0
    %3573 = vmatpush1.msra.mxu0 %v3518
    %3574 = vmatprep.subr.mxu0 0.0
    %3575 = vmatpush1.msra.mxu0 %v3519
    %3576 = vmatprep.subr.mxu0 0.0
    %3577 = vmatpush1.msra.mxu0 %v3520
    %3578 = vmatprep.subr.mxu0 0.0
    %3579 = vmatpush1.msra.mxu0 %v3521
    %3580 = vmatprep.subr.mxu0 0.0
    %3581 = vmatpush1.msra.mxu0 %v3522
    %3582 = vmatprep.subr.mxu0 0.0
    %3583 = vmatpush1.msra.mxu0 %v3523
    %3584 = vmatprep.subr.mxu0 0.0
    %3585 = vmatpush1.msra.mxu0 %v3524
    %3586 = vmatprep.subr.mxu0 0.0
    %3587 = vmatpush1.msra.mxu0 %v3525
    %3588 = vmatprep.subr.mxu0 0.0
    %3589 = vmatpush1.msra.mxu0 %v3526
    %3590 = vmatprep.subr.mxu0 0.0
    %3591 = vmatpush1.msra.mxu0 %v3527
    %3592 = vmatprep.mubr.f32.mxu0 %v3476
    %3593 = vmatmul.mubr.f32.gmra.mrb[0].mxu0 %v3474
    %v3594 = vpop.f32.mrb[0].mxu0
    %v3595 = vadd.f32 0.0, %v3594
    %v3596 = vpop.f32.mrb[0].mxu0
    %3597 = vmatprep.mubr.f32.mxu0 %v3482
    %3598 = vmatmul.mubr.f32.gmra.mrb[0].mxu0 %v3480
    %v3599 = vpop.f32.mrb[0].mxu0
    %v3600 = vadd.f32 0.0, %v3599
    %v3601 = vpop.f32.mrb[0].mxu0
    %3602 = vmatprep.mubr.f32.mxu0 %v3488
    %3603 = vmatmul.mubr.f32.gmra.mrb[0].mxu0 %v3486
    %v3604 = vpop.f32.mrb[0].mxu0
    %v3605 = vadd.f32 0.0, %v3604
    %v3606 = vpop.f32.mrb[0].mxu0
    %3607 = vmatprep.mubr.f32.mxu0 %v3494
    %3608 = vmatmul.mubr.f32.gmra.mrb[0].mxu0 %v3492
    %v3609 = vpop.f32.mrb[0].mxu0
    %v3610 = vadd.f32 0.0, %v3609
    %v3611 = vpop.f32.mrb[0].mxu0
    %3612 = vdwg.mxu0
    %3613 = vmatprep.subr.mxu0 0.0
    %3614 = vmatpush1.msra.mxu0 %v3358
    %3615 = vmatprep.subr.mxu0 0.0
    %3616 = vmatpush1.msra.mxu0 %v3359
    %3617 = vmatprep.subr.mxu0 0.0
    %3618 = vmatpush1.msra.mxu0 %v3360
    %3619 = vmatprep.subr.mxu0 0.0
    %3620 = vmatpush1.msra.mxu0 %v3361
    %3621 = vmatprep.subr.mxu0 0.0
    %3622 = vmatpush1.msra.mxu0 %v3362
    %3623 = vmatprep.subr.mxu0 0.0
    %3624 = vmatpush1.msra.mxu0 %v3363
    %3625 = vmatprep.subr.mxu0 0.0
    %3626 = vmatpush1.msra.mxu0 %v3364
    %3627 = vmatprep.subr.mxu0 0.0
    %3628 = vmatpush1.msra.mxu0 %v3365
    %3629 = vmatprep.subr.mxu0 0.0
    %3630 = vmatpush1.msra.mxu0 %v3366
    %3631 = vmatprep.subr.mxu0 0.0
    %3632 = vmatpush1.msra.mxu0 %v3367
    %3633 = vmatprep.subr.mxu0 0.0
    %3634 = vmatpush1.msra.mxu0 %v3368
    %3635 = vmatprep.subr.mxu0 0.0
    %3636 = vmatpush1.msra.mxu0 %v3369
    %3637 = vmatprep.subr.mxu0 0.0
    %3638 = vmatpush1.msra.mxu0 %v3370
    %3639 = vmatprep.subr.mxu0 0.0
    %3640 = vmatpush1.msra.mxu0 %v3371
    %3641 = vmatprep.subr.mxu0 0.0
    %3642 = vmatpush1.msra.mxu0 %v3372
    %3643 = vmatprep.subr.mxu0 0.0
    %3644 = vmatpush1.msra.mxu0 %v3373
    %3645 = vmatprep.subr.mxu0 0.0
    %3646 = vmatpush1.msra.mxu0 %v3374
    %3647 = vmatprep.subr.mxu0 0.0
    %3648 = vmatpush1.msra.mxu0 %v3375
    %3649 = vmatprep.subr.mxu0 0.0
    %3650 = vmatpush1.msra.mxu0 %v3376
    %3651 = vmatprep.subr.mxu0 0.0
    %3652 = vmatpush1.msra.mxu0 %v3377
    %3653 = vmatprep.subr.mxu0 0.0
    %3654 = vmatpush1.msra.mxu0 %v3378
    %3655 = vmatprep.subr.mxu0 0.0
    %3656 = vmatpush1.msra.mxu0 %v3379
    %3657 = vmatprep.subr.mxu0 0.0
    %3658 = vmatpush1.msra.mxu0 %v3380
    %3659 = vmatprep.subr.mxu0 0.0
    %3660 = vmatpush1.msra.mxu0 %v3381
    %3661 = vmatprep.subr.mxu0 0.0
    %3662 = vmatpush1.msra.mxu0 %v3382
    %3663 = vmatprep.subr.mxu0 0.0
    %3664 = vmatpush1.msra.mxu0 %v3383
    %3665 = vmatprep.subr.mxu0 0.0
    %3666 = vmatpush1.msra.mxu0 %v3384
    %3667 = vmatprep.subr.mxu0 0.0
    %3668 = vmatpush1.msra.mxu0 %v3385
    %3669 = vmatprep.subr.mxu0 0.0
    %3670 = vmatpush1.msra.mxu0 %v3386
    %3671 = vmatprep.subr.mxu0 0.0
    %3672 = vmatpush1.msra.mxu0 %v3387
    %3673 = vmatprep.subr.mxu0 0.0
    %3674 = vmatpush1.msra.mxu0 %v3388
    %3675 = vmatprep.subr.mxu0 0.0
    %3676 = vmatpush1.msra.mxu0 %v3389
    %3677 = vmatprep.mubr.f32.mxu0 %v3337
    %3678 = vmatmul.mubr.f32.gmra.mrb[0].mxu0 %v3335
    %v3679 = vpop.f32.mrb[0].mxu0
    %v3680 = vadd.f32 %v3595, %v3679
    %v3681 = vpop.f32.mrb[0].mxu0
    %3682 = vmatprep.mubr.f32.mxu0 %v3343
    %3683 = vmatmul.mubr.f32.gmra.mrb[0].mxu0 %v3341
    %v3684 = vpop.f32.mrb[0].mxu0
    %v3685 = vadd.f32 %v3600, %v3684
    %v3686 = vpop.f32.mrb[0].mxu0
    %3687 = vmatprep.mubr.f32.mxu0 %v3349
    %3688 = vmatmul.mubr.f32.gmra.mrb[0].mxu0 %v3347
    %v3689 = vpop.f32.mrb[0].mxu0
    %v3690 = vadd.f32 %v3605, %v3689
    %v3691 = vpop.f32.mrb[0].mxu0
    %3692 = vmatprep.mubr.f32.mxu0 %v3355
    %3693 = vmatmul.mubr.f32.gmra.mrb[0].mxu0 %v3353
    %v3694 = vpop.f32.mrb[0].mxu0
    %v3695 = vadd.f32 %v3610, %v3694
    %v3696 = vpop.f32.mrb[0].mxu0
    %3697 = vdwg.mxu0
    %v3698 = vld [vmem:[#allocation17] sm:$0xff]
    %v3699 = vld [vmem:[#allocation17 + $0x8] sm:$0xff]
    %v3700 = vld [vmem:[#allocation17 + $0x10] sm:$0xff]
    %v3701 = vld [vmem:[#allocation17 + $0x18] sm:$0xff]
    %v3703 = vsel %vm3394, %v3698, 0
    %v3706 = vsel %vm3394, %v3699, 0
    %v3709 = vsel %vm3394, %v3700, 0
    %v3712 = vsel %vm3394, %v3701, 0
    %3714 = vmatprep.subr.mxu0 %v3337
    %3715 = vmatpush1.msra.mxu0 %v3335
    %3716 = vmatprep.subr.mxu0 %v3343
    %3717 = vmatpush1.msra.mxu0 %v3341
    %3718 = vmatprep.subr.mxu0 %v3349
    %3719 = vmatpush1.msra.mxu0 %v3347
    %3720 = vmatprep.subr.mxu0 %v3355
    %3721 = vmatpush1.msra.mxu0 %v3353
    %3722 = vmatprep.subr.mxu0 0.0
    %3723 = vmatpush1.msra.mxu0 0.0
    %3724 = vmatprep.subr.mxu0 0.0
    %3725 = vmatpush1.msra.mxu0 0.0
    %3726 = vmatprep.subr.mxu0 0.0
    %3727 = vmatpush1.msra.mxu0 0.0
    %3728 = vmatprep.subr.mxu0 0.0
    %3729 = vmatpush1.msra.mxu0 0.0
    %3730 = vmatprep.subr.mxu0 0.0
    %3731 = vmatpush1.msra.mxu0 0.0
    %3732 = vmatprep.subr.mxu0 0.0
    %3733 = vmatpush1.msra.mxu0 0.0
    %3734 = vmatprep.subr.mxu0 0.0
    %3735 = vmatpush1.msra.mxu0 0.0
    %3736 = vmatprep.subr.mxu0 0.0
    %3737 = vmatpush1.msra.mxu0 0.0
    %3738 = vmatprep.subr.mxu0 0.0
    %3739 = vmatpush1.msra.mxu0 0.0
    %3740 = vmatprep.subr.mxu0 0.0
    %3741 = vmatpush1.msra.mxu0 0.0
    %3742 = vmatprep.subr.mxu0 0.0
    %3743 = vmatpush1.msra.mxu0 0.0
    %3744 = vmatprep.subr.mxu0 0.0
    %3745 = vmatpush1.msra.mxu0 0.0
    %3746 = vmatprep.subr.mxu0 0.0
    %3747 = vmatpush1.msra.mxu0 0.0
    %3748 = vmatprep.subr.mxu0 0.0
    %3749 = vmatpush1.msra.mxu0 0.0
    %3750 = vmatprep.subr.mxu0 0.0
    %3751 = vmatpush1.msra.mxu0 0.0
    %3752 = vmatprep.subr.mxu0 0.0
    %3753 = vmatpush1.msra.mxu0 0.0
    %3754 = vmatprep.subr.mxu0 0.0
    %3755 = vmatpush1.msra.mxu0 0.0
    %3756 = vmatprep.subr.mxu0 0.0
    %3757 = vmatpush1.msra.mxu0 0.0
    %3758 = vmatprep.subr.mxu0 0.0
    %3759 = vmatpush1.msra.mxu0 0.0
    %3760 = vmatprep.subr.mxu0 0.0
    %3761 = vmatpush1.msra.mxu0 0.0
    %3762 = vmatprep.subr.mxu0 0.0
    %3763 = vmatpush1.msra.mxu0 0.0
    %3764 = vmatprep.subr.mxu0 0.0
    %3765 = vmatpush1.msra.mxu0 0.0
    %3766 = vmatprep.subr.mxu0 0.0
    %3767 = vmatpush1.msra.mxu0 0.0
    %3768 = vmatprep.subr.mxu0 0.0
    %3769 = vmatpush1.msra.mxu0 0.0
    %3770 = vmatprep.subr.mxu0 0.0
    %3771 = vmatpush1.msra.mxu0 0.0
    %3772 = vmatprep.subr.mxu0 0.0
    %3773 = vmatpush1.msra.mxu0 0.0
    %3774 = vmatprep.subr.mxu0 0.0
    %3775 = vmatpush1.msra.mxu0 0.0
    %3776 = vmatprep.subr.mxu0 0.0
    %3777 = vmatpush1.msra.mxu0 0.0
    %3778 = vmatprep.mubr.f32.mxu0 0.0
    %3779 = vmatmul.mubr.f32.gmra.mrb[0].mxu0 %v3703
    %v3780 = vpop.f32.mrb[0].mxu0
    %v3781 = vadd.f32 0.0, %v3780
    %v3782 = vpop.f32.mrb[0].mxu0
    %v3783 = vadd.f32 0.0, %v3782
    %3784 = vmatprep.mubr.f32.mxu0 0.0
    %3785 = vmatmul.mubr.f32.gmra.mrb[0].mxu0 %v3706
    %v3786 = vpop.f32.mrb[0].mxu0
    %v3787 = vadd.f32 0.0, %v3786
    %v3788 = vpop.f32.mrb[0].mxu0
    %v3789 = vadd.f32 0.0, %v3788
    %3790 = vmatprep.mubr.f32.mxu0 0.0
    %3791 = vmatmul.mubr.f32.gmra.mrb[0].mxu0 %v3709
    %v3792 = vpop.f32.mrb[0].mxu0
    %v3793 = vadd.f32 0.0, %v3792
    %v3794 = vpop.f32.mrb[0].mxu0
    %v3795 = vadd.f32 0.0, %v3794
    %3796 = vmatprep.mubr.f32.mxu0 0.0
    %3797 = vmatmul.mubr.f32.gmra.mrb[0].mxu0 %v3712
    %v3798 = vpop.f32.mrb[0].mxu0
    %v3799 = vadd.f32 0.0, %v3798
    %v3800 = vpop.f32.mrb[0].mxu0
    %v3801 = vadd.f32 0.0, %v3800
    %3802 = vdwg.mxu0
    %s3803 = scalar_lea.vmem %s11, 512
    %v3804 = vld [vmem:[%s3803] sm:$0xff]
    %v3805 = vld [vmem:[%s3803 + $0x8] sm:$0xff]
    %v3806 = vld [vmem:[%s3803 + $0x10] sm:$0xff]
    %v3807 = vld [vmem:[%s3803 + $0x18] sm:$0xff]
    %v3808 = vld [vmem:[%s3803 + $0x20] sm:$0xff]
    %v3809 = vld [vmem:[%s3803 + $0x28] sm:$0xff]
    %v3810 = vld [vmem:[%s3803 + $0x30] sm:$0xff]
    %v3811 = vld [vmem:[%s3803 + $0x38] sm:$0xff]
    %v3812 = vld [vmem:[%s3803 + $0x40] sm:$0xff]
    %v3813 = vld [vmem:[%s3803 + $0x48] sm:$0xff]
    %v3814 = vld [vmem:[%s3803 + $0x50] sm:$0xff]
    %v3815 = vld [vmem:[%s3803 + $0x58] sm:$0xff]
    %v3816 = vld [vmem:[%s3803 + $0x60] sm:$0xff]
    %v3817 = vld [vmem:[%s3803 + $0x68] sm:$0xff]
    %v3818 = vld [vmem:[%s3803 + $0x70] sm:$0xff]
    %v3819 = vld [vmem:[%s3803 + $0x78] sm:$0xff]
    %v3820 = vld [vmem:[%s3803 + $0x80] sm:$0xff]
    %v3821 = vld [vmem:[%s3803 + $0x88] sm:$0xff]
    %v3822 = vld [vmem:[%s3803 + $0x90] sm:$0xff]
    %v3823 = vld [vmem:[%s3803 + $0x98] sm:$0xff]
    %v3824 = vld [vmem:[%s3803 + $0xa0] sm:$0xff]
    %v3825 = vld [vmem:[%s3803 + $0xa8] sm:$0xff]
    %v3826 = vld [vmem:[%s3803 + $0xb0] sm:$0xff]
    %v3827 = vld [vmem:[%s3803 + $0xb8] sm:$0xff]
    %v3828 = vld [vmem:[%s3803 + $0xc0] sm:$0xff]
    %v3829 = vld [vmem:[%s3803 + $0xc8] sm:$0xff]
    %v3830 = vld [vmem:[%s3803 + $0xd0] sm:$0xff]
    %v3831 = vld [vmem:[%s3803 + $0xd8] sm:$0xff]
    %v3832 = vld [vmem:[%s3803 + $0xe0] sm:$0xff]
    %v3833 = vld [vmem:[%s3803 + $0xe8] sm:$0xff]
    %v3834 = vld [vmem:[%s3803 + $0xf0] sm:$0xff]
    %v3835 = vld [vmem:[%s3803 + $0xf8] sm:$0xff]
    %3836 = vmatprep.subr.mxu0 0.0
    %3837 = vmatpush1.msra.mxu0 %v3804
    %3838 = vmatprep.subr.mxu0 0.0
    %3839 = vmatpush1.msra.mxu0 %v3805
    %3840 = vmatprep.subr.mxu0 0.0
    %3841 = vmatpush1.msra.mxu0 %v3806
    %3842 = vmatprep.subr.mxu0 0.0
    %3843 = vmatpush1.msra.mxu0 %v3807
    %3844 = vmatprep.subr.mxu0 0.0
    %3845 = vmatpush1.msra.mxu0 %v3808
    %3846 = vmatprep.subr.mxu0 0.0
    %3847 = vmatpush1.msra.mxu0 %v3809
    %3848 = vmatprep.subr.mxu0 0.0
    %3849 = vmatpush1.msra.mxu0 %v3810
    %3850 = vmatprep.subr.mxu0 0.0
    %3851 = vmatpush1.msra.mxu0 %v3811
    %3852 = vmatprep.subr.mxu0 0.0
    %3853 = vmatpush1.msra.mxu0 %v3812
    %3854 = vmatprep.subr.mxu0 0.0
    %3855 = vmatpush1.msra.mxu0 %v3813
    %3856 = vmatprep.subr.mxu0 0.0
    %3857 = vmatpush1.msra.mxu0 %v3814
    %3858 = vmatprep.subr.mxu0 0.0
    %3859 = vmatpush1.msra.mxu0 %v3815
    %3860 = vmatprep.subr.mxu0 0.0
    %3861 = vmatpush1.msra.mxu0 %v3816
    %3862 = vmatprep.subr.mxu0 0.0
    %3863 = vmatpush1.msra.mxu0 %v3817
    %3864 = vmatprep.subr.mxu0 0.0
    %3865 = vmatpush1.msra.mxu0 %v3818
    %3866 = vmatprep.subr.mxu0 0.0
    %3867 = vmatpush1.msra.mxu0 %v3819
    %3868 = vmatprep.subr.mxu0 0.0
    %3869 = vmatpush1.msra.mxu0 %v3820
    %3870 = vmatprep.subr.mxu0 0.0
    %3871 = vmatpush1.msra.mxu0 %v3821
    %3872 = vmatprep.subr.mxu0 0.0
    %3873 = vmatpush1.msra.mxu0 %v3822
    %3874 = vmatprep.subr.mxu0 0.0
    %3875 = vmatpush1.msra.mxu0 %v3823
    %3876 = vmatprep.subr.mxu0 0.0
    %3877 = vmatpush1.msra.mxu0 %v3824
    %3878 = vmatprep.subr.mxu0 0.0
    %3879 = vmatpush1.msra.mxu0 %v3825
    %3880 = vmatprep.subr.mxu0 0.0
    %3881 = vmatpush1.msra.mxu0 %v3826
    %3882 = vmatprep.subr.mxu0 0.0
    %3883 = vmatpush1.msra.mxu0 %v3827
    %3884 = vmatprep.subr.mxu0 0.0
    %3885 = vmatpush1.msra.mxu0 %v3828
    %3886 = vmatprep.subr.mxu0 0.0
    %3887 = vmatpush1.msra.mxu0 %v3829
    %3888 = vmatprep.subr.mxu0 0.0
    %3889 = vmatpush1.msra.mxu0 %v3830
    %3890 = vmatprep.subr.mxu0 0.0
    %3891 = vmatpush1.msra.mxu0 %v3831
    %3892 = vmatprep.subr.mxu0 0.0
    %3893 = vmatpush1.msra.mxu0 %v3832
    %3894 = vmatprep.subr.mxu0 0.0
    %3895 = vmatpush1.msra.mxu0 %v3833
    %3896 = vmatprep.subr.mxu0 0.0
    %3897 = vmatpush1.msra.mxu0 %v3834
    %3898 = vmatprep.subr.mxu0 0.0
    %3899 = vmatpush1.msra.mxu0 %v3835
    %3900 = vmatprep.mubr.f32.mxu0 %v3783
    %3901 = vmatmul.mubr.f32.gmra.mrb[0].mxu0 %v3781
    %v3902 = vpop.f32.mrb[0].mxu0
    %v3903 = vadd.f32 0.0, %v3902
    %v3904 = vpop.f32.mrb[0].mxu0
    %3905 = vmatprep.mubr.f32.mxu0 %v3789
    %3906 = vmatmul.mubr.f32.gmra.mrb[0].mxu0 %v3787
    %v3907 = vpop.f32.mrb[0].mxu0
    %v3908 = vadd.f32 0.0, %v3907
    %v3909 = vpop.f32.mrb[0].mxu0
    %3910 = vmatprep.mubr.f32.mxu0 %v3795
    %3911 = vmatmul.mubr.f32.gmra.mrb[0].mxu0 %v3793
    %v3912 = vpop.f32.mrb[0].mxu0
    %v3913 = vadd.f32 0.0, %v3912
    %v3914 = vpop.f32.mrb[0].mxu0
    %3915 = vmatprep.mubr.f32.mxu0 %v3801
    %3916 = vmatmul.mubr.f32.gmra.mrb[0].mxu0 %v3799
    %v3917 = vpop.f32.mrb[0].mxu0
    %v3918 = vadd.f32 0.0, %v3917
    %v3919 = vpop.f32.mrb[0].mxu0
    %3920 = vdwg.mxu0
    %v3921 = vadd.f32 %v3680, %v3903
    %v3922 = vadd.f32 %v3685, %v3908
    %v3923 = vadd.f32 %v3690, %v3913
    %v3924 = vadd.f32 %v3695, %v3918
    %v3925 = vld [vmem:[%s14] sm:$0xff]
    %v3926 = vld [vmem:[%s14 + $0x8] sm:$0xff]
    %v3927 = vld [vmem:[%s14 + $0x10] sm:$0xff]
    %v3928 = vld [vmem:[%s14 + $0x18] sm:$0xff]
    %v3929 = vld [vmem:[%s14 + $0x20] sm:$0xff]
    %v3930 = vld [vmem:[%s14 + $0x28] sm:$0xff]
    %v3931 = vld [vmem:[%s14 + $0x30] sm:$0xff]
    %v3932 = vld [vmem:[%s14 + $0x38] sm:$0xff]
    %v3933 = vld [vmem:[%s14 + $0x40] sm:$0xff]
    %v3934 = vld [vmem:[%s14 + $0x48] sm:$0xff]
    %v3935 = vld [vmem:[%s14 + $0x50] sm:$0xff]
    %v3936 = vld [vmem:[%s14 + $0x58] sm:$0xff]
    %v3937 = vld [vmem:[%s14 + $0x60] sm:$0xff]
    %v3938 = vld [vmem:[%s14 + $0x68] sm:$0xff]
    %v3939 = vld [vmem:[%s14 + $0x70] sm:$0xff]
    %v3940 = vld [vmem:[%s14 + $0x78] sm:$0xff]
    %v3941 = vld [vmem:[#allocation19] sm:$0xff]
    %v3942 = vld [vmem:[#allocation20] sm:$0x1]
    %v3943 = vld [vmem:[#allocation22] sm:$0x1]
    %v3944 = vadd.f32 %v3921, %v3922
    %v3945 = vadd.f32 %v3944, %v3923
    %v3946 = vadd.f32 %v3945, %v3924
    %v3947 = vrot.slane %v3946, 4
    %v3948 = vadd.f32 %v3946, %v3947
    %v3949 = vrot.slane %v3948, 2
    %v3950 = vadd.f32 %v3948, %v3949
    %v3951 = vrot.slane %v3950, 1
    %v3952 = vadd.f32 %v3950, %v3951
    %3953 = vmatprep.subr.mxu0 0.0
    %3954 = vmatpush1.msra.mxu0 %v3925
    %3955 = vmatprep.subr.mxu0 0.0
    %3956 = vmatpush1.msra.mxu0 %v3926
    %3957 = vmatprep.subr.mxu0 0.0
    %3958 = vmatpush1.msra.mxu0 %v3927
    %3959 = vmatprep.subr.mxu0 0.0
    %3960 = vmatpush1.msra.mxu0 %v3928
    %3961 = vmatprep.subr.mxu0 0.0
    %3962 = vmatpush1.msra.mxu0 %v3929
    %3963 = vmatprep.subr.mxu0 0.0
    %3964 = vmatpush1.msra.mxu0 %v3930
    %3965 = vmatprep.subr.mxu0 0.0
    %3966 = vmatpush1.msra.mxu0 %v3931
    %3967 = vmatprep.subr.mxu0 0.0
    %3968 = vmatpush1.msra.mxu0 %v3932
    %3969 = vmatprep.subr.mxu0 0.0
    %3970 = vmatpush1.msra.mxu0 %v3933
    %3971 = vmatprep.subr.mxu0 0.0
    %3972 = vmatpush1.msra.mxu0 %v3934
    %3973 = vmatprep.subr.mxu0 0.0
    %3974 = vmatpush1.msra.mxu0 %v3935
    %3975 = vmatprep.subr.mxu0 0.0
    %3976 = vmatpush1.msra.mxu0 %v3936
    %3977 = vmatprep.subr.mxu0 0.0
    %3978 = vmatpush1.msra.mxu0 %v3937
    %3979 = vmatprep.subr.mxu0 0.0
    %3980 = vmatpush1.msra.mxu0 %v3938
    %3981 = vmatprep.subr.mxu0 0.0
    %3982 = vmatpush1.msra.mxu0 %v3939
    %3983 = vmatprep.subr.mxu0 0.0
    %3984 = vmatpush1.msra.mxu0 %v3940
    %3985 = vmatprep.subr.mxu0 0.0
    %3986 = vmatpush1.msra.mxu0 0.0
    %3987 = vmatprep.subr.mxu0 0.0
    %3988 = vmatpush1.msra.mxu0 0.0
    %3989 = vmatprep.subr.mxu0 0.0
    %3990 = vmatpush1.msra.mxu0 0.0
    %3991 = vmatprep.subr.mxu0 0.0
    %3992 = vmatpush1.msra.mxu0 0.0
    %3993 = vmatprep.subr.mxu0 0.0
    %3994 = vmatpush1.msra.mxu0 0.0
    %3995 = vmatprep.subr.mxu0 0.0
    %3996 = vmatpush1.msra.mxu0 0.0
    %3997 = vmatprep.subr.mxu0 0.0
    %3998 = vmatpush1.msra.mxu0 0.0
    %3999 = vmatprep.subr.mxu0 0.0
    %4000 = vmatpush1.msra.mxu0 0.0
    %4001 = vmatprep.subr.mxu0 0.0
    %4002 = vmatpush1.msra.mxu0 0.0
    %4003 = vmatprep.subr.mxu0 0.0
    %4004 = vmatpush1.msra.mxu0 0.0
    %4005 = vmatprep.subr.mxu0 0.0
    %4006 = vmatpush1.msra.mxu0 0.0
    %4007 = vmatprep.subr.mxu0 0.0
    %4008 = vmatpush1.msra.mxu0 0.0
    %4009 = vmatprep.subr.mxu0 0.0
    %4010 = vmatpush1.msra.mxu0 0.0
    %4011 = vmatprep.subr.mxu0 0.0
    %4012 = vmatpush1.msra.mxu0 0.0
    %4013 = vmatprep.subr.mxu0 0.0
    %4014 = vmatpush1.msra.mxu0 0.0
    %4015 = vmatprep.subr.mxu0 0.0
    %4016 = vmatpush1.msra.mxu0 0.0
    %4017 = vmatprep.mubr.f32.mxu0 0.0
    %4018 = vmatmul.mubr.f32.gmra.mrb[0].mxu0 %v3952
    %v4019 = vpop.f32.mrb[0].mxu0
    %v4020 = vadd.f32 0.0, %v4019
    %v4021 = vpop.f32.mrb[0].mxu0
    %4022 = vdwg.mxu0
    %v4023 = vmul.f32 %v4020, 0.001953125
    %vm4024 = vcmask 64512
    %v4026 = vsel %vm4024, %v4023, 0
    %4028 = vmatprep.subr.mxu0 0.0
    %4029 = vmatpush1.msra.mxu0 %v3941
    %4030 = vmatprep.subr.mxu0 0.0
    %4031 = vmatpush1.msra.mxu0 0.0
    %4032 = vmatprep.subr.mxu0 0.0
    %4033 = vmatpush1.msra.mxu0 0.0
    %4034 = vmatprep.subr.mxu0 0.0
    %4035 = vmatpush1.msra.mxu0 0.0
    %4036 = vmatprep.subr.mxu0 0.0
    %4037 = vmatpush1.msra.mxu0 0.0
    %4038 = vmatprep.subr.mxu0 0.0
    %4039 = vmatpush1.msra.mxu0 0.0
    %4040 = vmatprep.subr.mxu0 0.0
    %4041 = vmatpush1.msra.mxu0 0.0
    %4042 = vmatprep.subr.mxu0 0.0
    %4043 = vmatpush1.msra.mxu0 0.0
    %4044 = vmatprep.subr.mxu0 0.0
    %4045 = vmatpush1.msra.mxu0 0.0
    %4046 = vmatprep.subr.mxu0 0.0
    %4047 = vmatpush1.msra.mxu0 0.0
    %4048 = vmatprep.subr.mxu0 0.0
    %4049 = vmatpush1.msra.mxu0 0.0
    %4050 = vmatprep.subr.mxu0 0.0
    %4051 = vmatpush1.msra.mxu0 0.0
    %4052 = vmatprep.subr.mxu0 0.0
    %4053 = vmatpush1.msra.mxu0 0.0
    %4054 = vmatprep.subr.mxu0 0.0
    %4055 = vmatpush1.msra.mxu0 0.0
    %4056 = vmatprep.subr.mxu0 0.0
    %4057 = vmatpush1.msra.mxu0 0.0
    %4058 = vmatprep.subr.mxu0 0.0
    %4059 = vmatpush1.msra.mxu0 0.0
    %4060 = vmatprep.subr.mxu0 0.0
    %4061 = vmatpush1.msra.mxu0 0.0
    %4062 = vmatprep.subr.mxu0 0.0
    %4063 = vmatpush1.msra.mxu0 0.0
    %4064 = vmatprep.subr.mxu0 0.0
    %4065 = vmatpush1.msra.mxu0 0.0
    %4066 = vmatprep.subr.mxu0 0.0
    %4067 = vmatpush1.msra.mxu0 0.0
    %4068 = vmatprep.subr.mxu0 0.0
    %4069 = vmatpush1.msra.mxu0 0.0
    %4070 = vmatprep.subr.mxu0 0.0
    %4071 = vmatpush1.msra.mxu0 0.0
    %4072 = vmatprep.subr.mxu0 0.0
    %4073 = vmatpush1.msra.mxu0 0.0
    %4074 = vmatprep.subr.mxu0 0.0
    %4075 = vmatpush1.msra.mxu0 0.0
    %4076 = vmatprep.subr.mxu0 0.0
    %4077 = vmatpush1.msra.mxu0 0.0
    %4078 = vmatprep.subr.mxu0 0.0
    %4079 = vmatpush1.msra.mxu0 0.0
    %4080 = vmatprep.subr.mxu0 0.0
    %4081 = vmatpush1.msra.mxu0 0.0
    %4082 = vmatprep.subr.mxu0 0.0
    %4083 = vmatpush1.msra.mxu0 0.0
    %4084 = vmatprep.subr.mxu0 0.0
    %4085 = vmatpush1.msra.mxu0 0.0
    %4086 = vmatprep.subr.mxu0 0.0
    %4087 = vmatpush1.msra.mxu0 0.0
    %4088 = vmatprep.subr.mxu0 0.0
    %4089 = vmatpush1.msra.mxu0 0.0
    %4090 = vmatprep.subr.mxu0 0.0
    %4091 = vmatpush1.msra.mxu0 0.0
    %4092 = vmatprep.mubr.f32.mxu0 0.0
    %4093 = vmatmul.mubr.f32.gmra.mrb[0].mxu0 %v4026
    %v4094 = vpop.f32.mrb[0].mxu0
    %v4095 = vadd.f32 0.0, %v4094
    %v4096 = vpop.f32.mrb[0].mxu0
    %4097 = vdwg.mxu0
    %v4098 = vlaneseq
    %v4099 = vshrl.u32 %v4098, 7
    %v4100 = vsub.s32 0, %v4099
    %v4101 = vrot.slane %v4095, %v4100
    %v4102 = vsub.f32 %v3921, %v4101
    %v4103 = vsub.f32 %v3922, %v4101
    %v4104 = vsub.f32 %v3923, %v4101
    %v4105 = vsub.f32 %v3924, %v4101
    %v4106 = vmul.f32 %v4102, %v4102
    %v4107 = vmul.f32 %v4103, %v4103
    %v4108 = vmul.f32 %v4104, %v4104
    %v4109 = vmul.f32 %v4105, %v4105
    %v4110 = vadd.f32 %v4106, %v4107
    %v4111 = vadd.f32 %v4110, %v4108
    %v4112 = vadd.f32 %v4111, %v4109
    %v4113 = vrot.slane %v4112, 4
    %v4114 = vadd.f32 %v4112, %v4113
    %v4115 = vrot.slane %v4114, 2
    %v4116 = vadd.f32 %v4114, %v4115
    %v4117 = vrot.slane %v4116, 1
    %v4118 = vadd.f32 %v4116, %v4117
    %4119 = vmatprep.subr.mxu0 0.0
    %4120 = vmatpush1.msra.mxu0 %v3925
    %4121 = vmatprep.subr.mxu0 0.0
    %4122 = vmatpush1.msra.mxu0 %v3926
    %4123 = vmatprep.subr.mxu0 0.0
    %4124 = vmatpush1.msra.mxu0 %v3927
    %4125 = vmatprep.subr.mxu0 0.0
    %4126 = vmatpush1.msra.mxu0 %v3928
    %4127 = vmatprep.subr.mxu0 0.0
    %4128 = vmatpush1.msra.mxu0 %v3929
    %4129 = vmatprep.subr.mxu0 0.0
    %4130 = vmatpush1.msra.mxu0 %v3930
    %4131 = vmatprep.subr.mxu0 0.0
    %4132 = vmatpush1.msra.mxu0 %v3931
    %4133 = vmatprep.subr.mxu0 0.0
    %4134 = vmatpush1.msra.mxu0 %v3932
    %4135 = vmatprep.subr.mxu0 0.0
    %4136 = vmatpush1.msra.mxu0 %v3933
    %4137 = vmatprep.subr.mxu0 0.0
    %4138 = vmatpush1.msra.mxu0 %v3934
    %4139 = vmatprep.subr.mxu0 0.0
    %4140 = vmatpush1.msra.mxu0 %v3935
    %4141 = vmatprep.subr.mxu0 0.0
    %4142 = vmatpush1.msra.mxu0 %v3936
    %4143 = vmatprep.subr.mxu0 0.0
    %4144 = vmatpush1.msra.mxu0 %v3937
    %4145 = vmatprep.subr.mxu0 0.0
    %4146 = vmatpush1.msra.mxu0 %v3938
    %4147 = vmatprep.subr.mxu0 0.0
    %4148 = vmatpush1.msra.mxu0 %v3939
    %4149 = vmatprep.subr.mxu0 0.0
    %4150 = vmatpush1.msra.mxu0 %v3940
    %4151 = vmatprep.subr.mxu0 0.0
    %4152 = vmatpush1.msra.mxu0 0.0
    %4153 = vmatprep.subr.mxu0 0.0
    %4154 = vmatpush1.msra.mxu0 0.0
    %4155 = vmatprep.subr.mxu0 0.0
    %4156 = vmatpush1.msra.mxu0 0.0
    %4157 = vmatprep.subr.mxu0 0.0
    %4158 = vmatpush1.msra.mxu0 0.0
    %4159 = vmatprep.subr.mxu0 0.0
    %4160 = vmatpush1.msra.mxu0 0.0
    %4161 = vmatprep.subr.mxu0 0.0
    %4162 = vmatpush1.msra.mxu0 0.0
    %4163 = vmatprep.subr.mxu0 0.0
    %4164 = vmatpush1.msra.mxu0 0.0
    %4165 = vmatprep.subr.mxu0 0.0
    %4166 = vmatpush1.msra.mxu0 0.0
    %4167 = vmatprep.subr.mxu0 0.0
    %4168 = vmatpush1.msra.mxu0 0.0
    %4169 = vmatprep.subr.mxu0 0.0
    %4170 = vmatpush1.msra.mxu0 0.0
    %4171 = vmatprep.subr.mxu0 0.0
    %4172 = vmatpush1.msra.mxu0 0.0
    %4173 = vmatprep.subr.mxu0 0.0
    %4174 = vmatpush1.msra.mxu0 0.0
    %4175 = vmatprep.subr.mxu0 0.0
    %4176 = vmatpush1.msra.mxu0 0.0
    %4177 = vmatprep.subr.mxu0 0.0
    %4178 = vmatpush1.msra.mxu0 0.0
    %4179 = vmatprep.subr.mxu0 0.0
    %4180 = vmatpush1.msra.mxu0 0.0
    %4181 = vmatprep.subr.mxu0 0.0
    %4182 = vmatpush1.msra.mxu0 0.0
    %4183 = vmatprep.mubr.f32.mxu0 0.0
    %4184 = vmatmul.mubr.f32.gmra.mrb[0].mxu0 %v4118
    %v4185 = vpop.f32.mrb[0].mxu0
    %v4186 = vadd.f32 0.0, %v4185
    %v4187 = vpop.f32.mrb[0].mxu0
    %4188 = vdwg.mxu0
    %v4189 = vmul.f32 %v4186, 0.001953125
    %v4191 = vsel %vm4024, %v4189, 0
    %4193 = vmatprep.subr.mxu0 0.0
    %4194 = vmatpush1.msra.mxu0 %v3941
    %4195 = vmatprep.subr.mxu0 0.0
    %4196 = vmatpush1.msra.mxu0 0.0
    %4197 = vmatprep.subr.mxu0 0.0
    %4198 = vmatpush1.msra.mxu0 0.0
    %4199 = vmatprep.subr.mxu0 0.0
    %4200 = vmatpush1.msra.mxu0 0.0
    %4201 = vmatprep.subr.mxu0 0.0
    %4202 = vmatpush1.msra.mxu0 0.0
    %4203 = vmatprep.subr.mxu0 0.0
    %4204 = vmatpush1.msra.mxu0 0.0
    %4205 = vmatprep.subr.mxu0 0.0
    %4206 = vmatpush1.msra.mxu0 0.0
    %4207 = vmatprep.subr.mxu0 0.0
    %4208 = vmatpush1.msra.mxu0 0.0
    %4209 = vmatprep.subr.mxu0 0.0
    %4210 = vmatpush1.msra.mxu0 0.0
    %4211 = vmatprep.subr.mxu0 0.0
    %4212 = vmatpush1.msra.mxu0 0.0
    %4213 = vmatprep.subr.mxu0 0.0
    %4214 = vmatpush1.msra.mxu0 0.0
    %4215 = vmatprep.subr.mxu0 0.0
    %4216 = vmatpush1.msra.mxu0 0.0
    %4217 = vmatprep.subr.mxu0 0.0
    %4218 = vmatpush1.msra.mxu0 0.0
    %4219 = vmatprep.subr.mxu0 0.0
    %4220 = vmatpush1.msra.mxu0 0.0
    %4221 = vmatprep.subr.mxu0 0.0
    %4222 = vmatpush1.msra.mxu0 0.0
    %4223 = vmatprep.subr.mxu0 0.0
    %4224 = vmatpush1.msra.mxu0 0.0
    %4225 = vmatprep.subr.mxu0 0.0
    %4226 = vmatpush1.msra.mxu0 0.0
    %4227 = vmatprep.subr.mxu0 0.0
    %4228 = vmatpush1.msra.mxu0 0.0
    %4229 = vmatprep.subr.mxu0 0.0
    %4230 = vmatpush1.msra.mxu0 0.0
    %4231 = vmatprep.subr.mxu0 0.0
    %4232 = vmatpush1.msra.mxu0 0.0
    %4233 = vmatprep.subr.mxu0 0.0
    %4234 = vmatpush1.msra.mxu0 0.0
    %4235 = vmatprep.subr.mxu0 0.0
    %4236 = vmatpush1.msra.mxu0 0.0
    %4237 = vmatprep.subr.mxu0 0.0
    %4238 = vmatpush1.msra.mxu0 0.0
    %4239 = vmatprep.subr.mxu0 0.0
    %4240 = vmatpush1.msra.mxu0 0.0
    %4241 = vmatprep.subr.mxu0 0.0
    %4242 = vmatpush1.msra.mxu0 0.0
    %4243 = vmatprep.subr.mxu0 0.0
    %4244 = vmatpush1.msra.mxu0 0.0
    %4245 = vmatprep.subr.mxu0 0.0
    %4246 = vmatpush1.msra.mxu0 0.0
    %4247 = vmatprep.subr.mxu0 0.0
    %4248 = vmatpush1.msra.mxu0 0.0
    %4249 = vmatprep.subr.mxu0 0.0
    %4250 = vmatpush1.msra.mxu0 0.0
    %4251 = vmatprep.subr.mxu0 0.0
    %4252 = vmatpush1.msra.mxu0 0.0
    %4253 = vmatprep.subr.mxu0 0.0
    %4254 = vmatpush1.msra.mxu0 0.0
    %4255 = vmatprep.subr.mxu0 0.0
    %4256 = vmatpush1.msra.mxu0 0.0
    %4257 = vmatprep.mubr.f32.mxu0 0.0
    %4258 = vmatmul.mubr.f32.gmra.mrb[0].mxu0 %v4191
    %v4259 = vpop.f32.mrb[0].mxu0
    %v4260 = vadd.f32 1e-05, %v4259
    %v4261 = vpop.f32.mrb[0].mxu0
    %4262 = vdwg.mxu0
    %v4263 = vrsqrt.pop %v4260
    %v4264 = vmul.f32 %v3942, %v4263
    %v4266 = vlaneseq
    %v4267 = vshrl.u32 %v4266, 7
    %v4268 = vsub.s32 0, %v4267
    %v4269 = vrot.slane %v4264, %v4268
    %v4271 = vmul.f32 %v4102, %v4269
    %v4272 = vmul.f32 %v4103, %v4269
    %v4273 = vmul.f32 %v4104, %v4269
    %v4274 = vmul.f32 %v4105, %v4269
    %v4276 = vlaneseq
    %v4277 = vshrl.u32 %v4276, 7
    %v4278 = vsub.s32 0, %v4277
    %v4279 = vrot.slane %v3943, %v4278
    %v4281 = vadd.f32 %v4271, %v4279
    %v4282 = vadd.f32 %v4272, %v4279
    %v4283 = vadd.f32 %v4273, %v4279
    %v4284 = vadd.f32 %v4274, %v4279
    %v4285 = vtanh.pop %v4281
    %v4286 = vtanh.pop %v4282
    %v4287 = vtanh.pop %v4283
    %v4288 = vtanh.pop %v4284
    %v4289 = vld [vmem:[%s18] sm:$0xff]
    %v4290 = vld [vmem:[%s18 + $0x8] sm:$0xff]
    %v4291 = vld [vmem:[#allocation23] sm:$0xff]
    %v4292 = vld [vmem:[#allocation23 + $0x8] sm:$0xff]
    %v4293 = vld [vmem:[%s20] sm:$0xff]
    %v4294 = vld [vmem:[%s20 + $0x8] sm:$0xff]
    %v4295 = vld [vmem:[%s20 + $0x10] sm:$0xff]
    %v4296 = vld [vmem:[%s20 + $0x18] sm:$0xff]
    %v4297 = vld [vmem:[%s20 + $0x20] sm:$0xff]
    %v4298 = vld [vmem:[%s20 + $0x28] sm:$0xff]
    %v4299 = vld [vmem:[%s20 + $0x30] sm:$0xff]
    %v4300 = vld [vmem:[%s20 + $0x38] sm:$0xff]
    %v4301 = vld [vmem:[%s20 + $0x40] sm:$0xff]
    %v4302 = vld [vmem:[%s20 + $0x48] sm:$0xff]
    %v4303 = vld [vmem:[%s20 + $0x50] sm:$0xff]
    %v4304 = vld [vmem:[%s20 + $0x58] sm:$0xff]
    %v4305 = vld [vmem:[%s20 + $0x60] sm:$0xff]
    %v4306 = vld [vmem:[%s20 + $0x68] sm:$0xff]
    %v4307 = vld [vmem:[%s20 + $0x70] sm:$0xff]
    %v4308 = vld [vmem:[%s20 + $0x78] sm:$0xff]
    %v4310 = vsel %vm3394, %v4289, 0
    %v4313 = vsel %vm3394, %v4290, 0
    %4315 = vmatprep.subr.mxu0 0.0
    %4316 = vmatpush1.msra.mxu0 %v4285
    %4317 = vmatprep.subr.mxu0 0.0
    %4318 = vmatpush1.msra.mxu0 %v4286
    %4319 = vmatprep.subr.mxu0 0.0
    %4320 = vmatpush1.msra.mxu0 %v4287
    %4321 = vmatprep.subr.mxu0 0.0
    %4322 = vmatpush1.msra.mxu0 %v4288
    %4323 = vmatprep.subr.mxu0 0.0
    %4324 = vmatpush1.msra.mxu0 0.0
    %4325 = vmatprep.subr.mxu0 0.0
    %4326 = vmatpush1.msra.mxu0 0.0
    %4327 = vmatprep.subr.mxu0 0.0
    %4328 = vmatpush1.msra.mxu0 0.0
    %4329 = vmatprep.subr.mxu0 0.0
    %4330 = vmatpush1.msra.mxu0 0.0
    %4331 = vmatprep.subr.mxu0 0.0
    %4332 = vmatpush1.msra.mxu0 0.0
    %4333 = vmatprep.subr.mxu0 0.0
    %4334 = vmatpush1.msra.mxu0 0.0
    %4335 = vmatprep.subr.mxu0 0.0
    %4336 = vmatpush1.msra.mxu0 0.0
    %4337 = vmatprep.subr.mxu0 0.0
    %4338 = vmatpush1.msra.mxu0 0.0
    %4339 = vmatprep.subr.mxu0 0.0
    %4340 = vmatpush1.msra.mxu0 0.0
    %4341 = vmatprep.subr.mxu0 0.0
    %4342 = vmatpush1.msra.mxu0 0.0
    %4343 = vmatprep.subr.mxu0 0.0
    %4344 = vmatpush1.msra.mxu0 0.0
    %4345 = vmatprep.subr.mxu0 0.0
    %4346 = vmatpush1.msra.mxu0 0.0
    %4347 = vmatprep.subr.mxu0 0.0
    %4348 = vmatpush1.msra.mxu0 0.0
    %4349 = vmatprep.subr.mxu0 0.0
    %4350 = vmatpush1.msra.mxu0 0.0
    %4351 = vmatprep.subr.mxu0 0.0
    %4352 = vmatpush1.msra.mxu0 0.0
    %4353 = vmatprep.subr.mxu0 0.0
    %4354 = vmatpush1.msra.mxu0 0.0
    %4355 = vmatprep.subr.mxu0 0.0
    %4356 = vmatpush1.msra.mxu0 0.0
    %4357 = vmatprep.subr.mxu0 0.0
    %4358 = vmatpush1.msra.mxu0 0.0
    %4359 = vmatprep.subr.mxu0 0.0
    %4360 = vmatpush1.msra.mxu0 0.0
    %4361 = vmatprep.subr.mxu0 0.0
    %4362 = vmatpush1.msra.mxu0 0.0
    %4363 = vmatprep.subr.mxu0 0.0
    %4364 = vmatpush1.msra.mxu0 0.0
    %4365 = vmatprep.subr.mxu0 0.0
    %4366 = vmatpush1.msra.mxu0 0.0
    %4367 = vmatprep.subr.mxu0 0.0
    %4368 = vmatpush1.msra.mxu0 0.0
    %4369 = vmatprep.subr.mxu0 0.0
    %4370 = vmatpush1.msra.mxu0 0.0
    %4371 = vmatprep.subr.mxu0 0.0
    %4372 = vmatpush1.msra.mxu0 0.0
    %4373 = vmatprep.subr.mxu0 0.0
    %4374 = vmatpush1.msra.mxu0 0.0
    %4375 = vmatprep.subr.mxu0 0.0
    %4376 = vmatpush1.msra.mxu0 0.0
    %4377 = vmatprep.subr.mxu0 0.0
    %4378 = vmatpush1.msra.mxu0 0.0
    %4379 = vmatprep.mubr.f32.mxu0 0.0
    %4380 = vmatmul.mubr.f32.gmra.mrb[0].mxu0 %v4310
    %v4381 = vpop.f32.mrb[0].mxu0
    %v4382 = vadd.f32 0.0, %v4381
    %v4383 = vpop.f32.mrb[0].mxu0
    %4384 = vmatprep.mubr.f32.mxu0 0.0
    %4385 = vmatmul.mubr.f32.gmra.mrb[0].mxu0 %v4313
    %v4386 = vpop.f32.mrb[0].mxu0
    %v4387 = vadd.f32 0.0, %v4386
    %v4388 = vpop.f32.mrb[0].mxu0
    %4389 = vdwg.mxu0
    %v4391 = vsel %vm3394, %v4291, 0
    %v4394 = vsel %vm3394, %v4292, 0
    %4396 = vmatprep.subr.mxu0 0.0
    %4397 = vmatpush1.msra.mxu0 %v4285
    %4398 = vmatprep.subr.mxu0 0.0
    %4399 = vmatpush1.msra.mxu0 %v4286
    %4400 = vmatprep.subr.mxu0 0.0
    %4401 = vmatpush1.msra.mxu0 %v4287
    %4402 = vmatprep.subr.mxu0 0.0
    %4403 = vmatpush1.msra.mxu0 %v4288
    %4404 = vmatprep.subr.mxu0 0.0
    %4405 = vmatpush1.msra.mxu0 0.0
    %4406 = vmatprep.subr.mxu0 0.0
    %4407 = vmatpush1.msra.mxu0 0.0
    %4408 = vmatprep.subr.mxu0 0.0
    %4409 = vmatpush1.msra.mxu0 0.0
    %4410 = vmatprep.subr.mxu0 0.0
    %4411 = vmatpush1.msra.mxu0 0.0
    %4412 = vmatprep.subr.mxu0 0.0
    %4413 = vmatpush1.msra.mxu0 0.0
    %4414 = vmatprep.subr.mxu0 0.0
    %4415 = vmatpush1.msra.mxu0 0.0
    %4416 = vmatprep.subr.mxu0 0.0
    %4417 = vmatpush1.msra.mxu0 0.0
    %4418 = vmatprep.subr.mxu0 0.0
    %4419 = vmatpush1.msra.mxu0 0.0
    %4420 = vmatprep.subr.mxu0 0.0
    %4421 = vmatpush1.msra.mxu0 0.0
    %4422 = vmatprep.subr.mxu0 0.0
    %4423 = vmatpush1.msra.mxu0 0.0
    %4424 = vmatprep.subr.mxu0 0.0
    %4425 = vmatpush1.msra.mxu0 0.0
    %4426 = vmatprep.subr.mxu0 0.0
    %4427 = vmatpush1.msra.mxu0 0.0
    %4428 = vmatprep.subr.mxu0 0.0
    %4429 = vmatpush1.msra.mxu0 0.0
    %4430 = vmatprep.subr.mxu0 0.0
    %4431 = vmatpush1.msra.mxu0 0.0
    %4432 = vmatprep.subr.mxu0 0.0
    %4433 = vmatpush1.msra.mxu0 0.0
    %4434 = vmatprep.subr.mxu0 0.0
    %4435 = vmatpush1.msra.mxu0 0.0
    %4436 = vmatprep.subr.mxu0 0.0
    %4437 = vmatpush1.msra.mxu0 0.0
    %4438 = vmatprep.subr.mxu0 0.0
    %4439 = vmatpush1.msra.mxu0 0.0
    %4440 = vmatprep.subr.mxu0 0.0
    %4441 = vmatpush1.msra.mxu0 0.0
    %4442 = vmatprep.subr.mxu0 0.0
    %4443 = vmatpush1.msra.mxu0 0.0
    %4444 = vmatprep.subr.mxu0 0.0
    %4445 = vmatpush1.msra.mxu0 0.0
    %4446 = vmatprep.subr.mxu0 0.0
    %4447 = vmatpush1.msra.mxu0 0.0
    %4448 = vmatprep.subr.mxu0 0.0
    %4449 = vmatpush1.msra.mxu0 0.0
    %4450 = vmatprep.subr.mxu0 0.0
    %4451 = vmatpush1.msra.mxu0 0.0
    %4452 = vmatprep.subr.mxu0 0.0
    %4453 = vmatpush1.msra.mxu0 0.0
    %4454 = vmatprep.subr.mxu0 0.0
    %4455 = vmatpush1.msra.mxu0 0.0
    %4456 = vmatprep.subr.mxu0 0.0
    %4457 = vmatpush1.msra.mxu0 0.0
    %4458 = vmatprep.subr.mxu0 0.0
    %4459 = vmatpush1.msra.mxu0 0.0
    %4460 = vmatprep.mubr.f32.mxu0 0.0
    %4461 = vmatmul.mubr.f32.gmra.mrb[0].mxu0 %v4391
    %v4462 = vpop.f32.mrb[0].mxu0
    %v4463 = vadd.f32 0.0, %v4462
    %v4464 = vpop.f32.mrb[0].mxu0
    %4465 = vmatprep.mubr.f32.mxu0 0.0
    %4466 = vmatmul.mubr.f32.gmra.mrb[0].mxu0 %v4394
    %v4467 = vpop.f32.mrb[0].mxu0
    %v4468 = vadd.f32 0.0, %v4467
    %v4469 = vpop.f32.mrb[0].mxu0
    %4470 = vdwg.mxu0
    %v4471 = vmax.f32 %v4382, %v4463
    %v4472 = vmax.f32 %v4387, %v4468
    %4475 = vrot.lane.b32.xlu0 %v4471, 127
    %v4476 = vpop.permute.xlu0 %4475
    %4477 = vrot.lane.b32.xlu0 %v4472, 127
    %v4478 = vpop.permute.xlu0 %4477
    %v4481 = vmax.f32 %v4471, %v4476
    %v4482 = vmax.f32 %v4472, %v4478
    %4483 = vmatprep.subr.mxu0 0.0
    %4484 = vmatpush1.msra.mxu0 %v4293
    %4485 = vmatprep.subr.mxu0 0.0
    %4486 = vmatpush1.msra.mxu0 %v4294
    %4487 = vmatprep.subr.mxu0 0.0
    %4488 = vmatpush1.msra.mxu0 %v4295
    %4489 = vmatprep.subr.mxu0 0.0
    %4490 = vmatpush1.msra.mxu0 %v4296
    %4491 = vmatprep.subr.mxu0 0.0
    %4492 = vmatpush1.msra.mxu0 %v4297
    %4493 = vmatprep.subr.mxu0 0.0
    %4494 = vmatpush1.msra.mxu0 %v4298
    %4495 = vmatprep.subr.mxu0 0.0
    %4496 = vmatpush1.msra.mxu0 %v4299
    %4497 = vmatprep.subr.mxu0 0.0
    %4498 = vmatpush1.msra.mxu0 %v4300
    %4499 = vmatprep.subr.mxu0 0.0
    %4500 = vmatpush1.msra.mxu0 %v4301
    %4501 = vmatprep.subr.mxu0 0.0
    %4502 = vmatpush1.msra.mxu0 %v4302
    %4503 = vmatprep.subr.mxu0 0.0
    %4504 = vmatpush1.msra.mxu0 %v4303
    %4505 = vmatprep.subr.mxu0 0.0
    %4506 = vmatpush1.msra.mxu0 %v4304
    %4507 = vmatprep.subr.mxu0 0.0
    %4508 = vmatpush1.msra.mxu0 %v4305
    %4509 = vmatprep.subr.mxu0 0.0
    %4510 = vmatpush1.msra.mxu0 %v4306
    %4511 = vmatprep.subr.mxu0 0.0
    %4512 = vmatpush1.msra.mxu0 %v4307
    %4513 = vmatprep.subr.mxu0 0.0
    %4514 = vmatpush1.msra.mxu0 %v4308
    %4515 = vmatprep.subr.mxu0 0.0
    %4516 = vmatpush1.msra.mxu0 0.0
    %4517 = vmatprep.subr.mxu0 0.0
    %4518 = vmatpush1.msra.mxu0 0.0
    %4519 = vmatprep.subr.mxu0 0.0
    %4520 = vmatpush1.msra.mxu0 0.0
    %4521 = vmatprep.subr.mxu0 0.0
    %4522 = vmatpush1.msra.mxu0 0.0
    %4523 = vmatprep.subr.mxu0 0.0
    %4524 = vmatpush1.msra.mxu0 0.0
    %4525 = vmatprep.subr.mxu0 0.0
    %4526 = vmatpush1.msra.mxu0 0.0
    %4527 = vmatprep.subr.mxu0 0.0
    %4528 = vmatpush1.msra.mxu0 0.0
    %4529 = vmatprep.subr.mxu0 0.0
    %4530 = vmatpush1.msra.mxu0 0.0
    %4531 = vmatprep.subr.mxu0 0.0
    %4532 = vmatpush1.msra.mxu0 0.0
    %4533 = vmatprep.subr.mxu0 0.0
    %4534 = vmatpush1.msra.mxu0 0.0
    %4535 = vmatprep.subr.mxu0 0.0
    %4536 = vmatpush1.msra.mxu0 0.0
    %4537 = vmatprep.subr.mxu0 0.0
    %4538 = vmatpush1.msra.mxu0 0.0
    %4539 = vmatprep.subr.mxu0 0.0
    %4540 = vmatpush1.msra.mxu0 0.0
    %4541 = vmatprep.subr.mxu0 0.0
    %4542 = vmatpush1.msra.mxu0 0.0
    %4543 = vmatprep.subr.mxu0 0.0
    %4544 = vmatpush1.msra.mxu0 0.0
    %4545 = vmatprep.subr.mxu0 0.0
    %4546 = vmatpush1.msra.mxu0 0.0
    %4547 = vmatprep.mubr.f32.mxu0 0.0
    %4548 = vmatmul.mubr.f32.gmra.mrb[0].mxu0 %v4481
    %v4549 = vpop.f32.mrb[0].mxu0
    %v4550 = vadd.f32 0.0, %v4549
    %v4551 = vpop.f32.mrb[0].mxu0
    %4552 = vmatprep.mubr.f32.mxu0 0.0
    %4553 = vmatmul.mubr.f32.gmra.mrb[0].mxu0 %v4482
    %v4554 = vpop.f32.mrb[0].mxu0
    %v4555 = vadd.f32 0.0, %v4554
    %v4556 = vpop.f32.mrb[0].mxu0
    %4557 = vdwg.mxu0
    %v4558 = vld [vmem:[#allocation25] sm:$0xff]
    %v4559 = vld [vmem:[#allocation25 + $0x8] sm:$0xff]
    %v4560 = vld [vmem:[#allocation25 + $0x10] sm:$0xff]
    %v4561 = vld [vmem:[#allocation25 + $0x18] sm:$0xff]
    %v4562 = vld [vmem:[#allocation25 + $0x20] sm:$0xff]
    %v4563 = vld [vmem:[#allocation25 + $0x28] sm:$0xff]
    %v4564 = vld [vmem:[#allocation25 + $0x30] sm:$0xff]
    %v4565 = vld [vmem:[#allocation25 + $0x38] sm:$0xff]
    %v4566 = vld [vmem:[#allocation25 + $0x40] sm:$0xff]
    %v4567 = vld [vmem:[#allocation25 + $0x48] sm:$0xff]
    %v4568 = vld [vmem:[#allocation25 + $0x50] sm:$0xff]
    %v4569 = vld [vmem:[#allocation25 + $0x58] sm:$0xff]
    %v4570 = vld [vmem:[#allocation25 + $0x60] sm:$0xff]
    %v4571 = vld [vmem:[#allocation25 + $0x68] sm:$0xff]
    %v4572 = vld [vmem:[#allocation25 + $0x70] sm:$0xff]
    %v4573 = vld [vmem:[#allocation25 + $0x78] sm:$0xff]
    %v4575 = vsel %vm396, %v4550, 0
    %v4578 = vsel %vm396, %v4555, 0
    %4580 = vmatprep.subr.mxu0 %v4559
    %4581 = vmatpush1.msra.mxu0 %v4558
    %4582 = vmatprep.subr.mxu0 %v4561
    %4583 = vmatpush1.msra.mxu0 %v4560
    %4584 = vmatprep.subr.mxu0 %v4563
    %4585 = vmatpush1.msra.mxu0 %v4562
    %4586 = vmatprep.subr.mxu0 %v4565
    %4587 = vmatpush1.msra.mxu0 %v4564
    %4588 = vmatprep.subr.mxu0 %v4567
    %4589 = vmatpush1.msra.mxu0 %v4566
    %4590 = vmatprep.subr.mxu0 %v4569
    %4591 = vmatpush1.msra.mxu0 %v4568
    %4592 = vmatprep.subr.mxu0 %v4571
    %4593 = vmatpush1.msra.mxu0 %v4570
    %4594 = vmatprep.subr.mxu0 %v4573
    %4595 = vmatpush1.msra.mxu0 %v4572
    %4596 = vmatprep.subr.mxu0 0.0
    %4597 = vmatpush1.msra.mxu0 0.0
    %4598 = vmatprep.subr.mxu0 0.0
    %4599 = vmatpush1.msra.mxu0 0.0
    %4600 = vmatprep.subr.mxu0 0.0
    %4601 = vmatpush1.msra.mxu0 0.0
    %4602 = vmatprep.subr.mxu0 0.0
    %4603 = vmatpush1.msra.mxu0 0.0
    %4604 = vmatprep.subr.mxu0 0.0
    %4605 = vmatpush1.msra.mxu0 0.0
    %4606 = vmatprep.subr.mxu0 0.0
    %4607 = vmatpush1.msra.mxu0 0.0
    %4608 = vmatprep.subr.mxu0 0.0
    %4609 = vmatpush1.msra.mxu0 0.0
    %4610 = vmatprep.subr.mxu0 0.0
    %4611 = vmatpush1.msra.mxu0 0.0
    %4612 = vmatprep.subr.mxu0 0.0
    %4613 = vmatpush1.msra.mxu0 0.0
    %4614 = vmatprep.subr.mxu0 0.0
    %4615 = vmatpush1.msra.mxu0 0.0
    %4616 = vmatprep.subr.mxu0 0.0
    %4617 = vmatpush1.msra.mxu0 0.0
    %4618 = vmatprep.subr.mxu0 0.0
    %4619 = vmatpush1.msra.mxu0 0.0
    %4620 = vmatprep.subr.mxu0 0.0
    %4621 = vmatpush1.msra.mxu0 0.0
    %4622 = vmatprep.subr.mxu0 0.0
    %4623 = vmatpush1.msra.mxu0 0.0
    %4624 = vmatprep.subr.mxu0 0.0
    %4625 = vmatpush1.msra.mxu0 0.0
    %4626 = vmatprep.subr.mxu0 0.0
    %4627 = vmatpush1.msra.mxu0 0.0
    %4628 = vmatprep.subr.mxu0 0.0
    %4629 = vmatpush1.msra.mxu0 0.0
    %4630 = vmatprep.subr.mxu0 0.0
    %4631 = vmatpush1.msra.mxu0 0.0
    %4632 = vmatprep.subr.mxu0 0.0
    %4633 = vmatpush1.msra.mxu0 0.0
    %4634 = vmatprep.subr.mxu0 0.0
    %4635 = vmatpush1.msra.mxu0 0.0
    %4636 = vmatprep.subr.mxu0 0.0
    %4637 = vmatpush1.msra.mxu0 0.0
    %4638 = vmatprep.subr.mxu0 0.0
    %4639 = vmatpush1.msra.mxu0 0.0
    %4640 = vmatprep.subr.mxu0 0.0
    %4641 = vmatpush1.msra.mxu0 0.0
    %4642 = vmatprep.subr.mxu0 0.0
    %4643 = vmatpush1.msra.mxu0 0.0
    %4644 = vmatprep.mubr.f32.mxu0 0.0
    %4645 = vmatmul.mubr.f32.gmra.mrb[0].mxu0 %v4575
    %v4646 = vpop.f32.mrb[0].mxu0
    %v4647 = vadd.f32 0.0, %v4646
    %v4648 = vpop.f32.mrb[0].mxu0
    %v4649 = vadd.f32 0.0, %v4648
    %4650 = vmatprep.mubr.f32.mxu0 0.0
    %4651 = vmatmul.mubr.f32.gmra.mrb[0].mxu0 %v4578
    %v4652 = vpop.f32.mrb[0].mxu0
    %v4653 = vadd.f32 0.0, %v4652
    %v4654 = vpop.f32.mrb[0].mxu0
    %v4655 = vadd.f32 0.0, %v4654
    %4656 = vdwg.mxu0
    %v4657 = vld [vmem:[#allocation26] sm:$0xff]
    %v4658 = vld [vmem:[#allocation26 + $0x8] sm:$0xff]
    %v4659 = vld [vmem:[#allocation26 + $0x10] sm:$0xff]
    %v4660 = vld [vmem:[#allocation26 + $0x18] sm:$0xff]
    %v4661 = vmul.f32 %v4647, %v4657
    %v4662 = vmul.f32 %v4649, %v4658
    %v4663 = vmul.f32 %v4653, %v4659
    %v4664 = vmul.f32 %v4655, %v4660
    %v4665 = vld [vmem:[%s23] sm:$0xff]
    %v4666 = vld [vmem:[%s23 + $0x8] sm:$0xff]
    %v4667 = vld [vmem:[%s23 + $0x10] sm:$0xff]
    %v4668 = vld [vmem:[%s23 + $0x18] sm:$0xff]
    %v4669 = vld [vmem:[%s23 + $0x20] sm:$0xff]
    %v4670 = vld [vmem:[%s23 + $0x28] sm:$0xff]
    %v4671 = vld [vmem:[%s23 + $0x30] sm:$0xff]
    %v4672 = vld [vmem:[%s23 + $0x38] sm:$0xff]
    %v4673 = vld [vmem:[%s23 + $0x40] sm:$0xff]
    %v4674 = vld [vmem:[%s23 + $0x48] sm:$0xff]
    %v4675 = vld [vmem:[%s23 + $0x50] sm:$0xff]
    %v4676 = vld [vmem:[%s23 + $0x58] sm:$0xff]
    %v4677 = vld [vmem:[%s23 + $0x60] sm:$0xff]
    %v4678 = vld [vmem:[%s23 + $0x68] sm:$0xff]
    %v4679 = vld [vmem:[%s23 + $0x70] sm:$0xff]
    %v4680 = vld [vmem:[%s23 + $0x78] sm:$0xff]
    %v4681 = vld [vmem:[%s23 + $0x80] sm:$0xff]
    %v4682 = vld [vmem:[%s23 + $0x88] sm:$0xff]
    %v4683 = vld [vmem:[%s23 + $0x90] sm:$0xff]
    %v4684 = vld [vmem:[%s23 + $0x98] sm:$0xff]
    %v4685 = vld [vmem:[%s23 + $0xa0] sm:$0xff]
    %v4686 = vld [vmem:[%s23 + $0xa8] sm:$0xff]
    %v4687 = vld [vmem:[%s23 + $0xb0] sm:$0xff]
    %v4688 = vld [vmem:[%s23 + $0xb8] sm:$0xff]
    %v4689 = vld [vmem:[%s23 + $0xc0] sm:$0xff]
    %v4690 = vld [vmem:[%s23 + $0xc8] sm:$0xff]
    %v4691 = vld [vmem:[%s23 + $0xd0] sm:$0xff]
    %v4692 = vld [vmem:[%s23 + $0xd8] sm:$0xff]
    %v4693 = vld [vmem:[%s23 + $0xe0] sm:$0xff]
    %v4694 = vld [vmem:[%s23 + $0xe8] sm:$0xff]
    %v4695 = vld [vmem:[%s23 + $0xf0] sm:$0xff]
    %v4696 = vld [vmem:[%s23 + $0xf8] sm:$0xff]
    %4697 = vmatprep.subr.mxu0 0.0
    %4698 = vmatpush1.msra.mxu0 %v4665
    %4699 = vmatprep.subr.mxu0 0.0
    %4700 = vmatpush1.msra.mxu0 %v4666
    %4701 = vmatprep.subr.mxu0 0.0
    %4702 = vmatpush1.msra.mxu0 %v4667
    %4703 = vmatprep.subr.mxu0 0.0
    %4704 = vmatpush1.msra.mxu0 %v4668
    %4705 = vmatprep.subr.mxu0 0.0
    %4706 = vmatpush1.msra.mxu0 %v4669
    %4707 = vmatprep.subr.mxu0 0.0
    %4708 = vmatpush1.msra.mxu0 %v4670
    %4709 = vmatprep.subr.mxu0 0.0
    %4710 = vmatpush1.msra.mxu0 %v4671
    %4711 = vmatprep.subr.mxu0 0.0
    %4712 = vmatpush1.msra.mxu0 %v4672
    %4713 = vmatprep.subr.mxu0 0.0
    %4714 = vmatpush1.msra.mxu0 %v4673
    %4715 = vmatprep.subr.mxu0 0.0
    %4716 = vmatpush1.msra.mxu0 %v4674
    %4717 = vmatprep.subr.mxu0 0.0
    %4718 = vmatpush1.msra.mxu0 %v4675
    %4719 = vmatprep.subr.mxu0 0.0
    %4720 = vmatpush1.msra.mxu0 %v4676
    %4721 = vmatprep.subr.mxu0 0.0
    %4722 = vmatpush1.msra.mxu0 %v4677
    %4723 = vmatprep.subr.mxu0 0.0
    %4724 = vmatpush1.msra.mxu0 %v4678
    %4725 = vmatprep.subr.mxu0 0.0
    %4726 = vmatpush1.msra.mxu0 %v4679
    %4727 = vmatprep.subr.mxu0 0.0
    %4728 = vmatpush1.msra.mxu0 %v4680
    %4729 = vmatprep.subr.mxu0 0.0
    %4730 = vmatpush1.msra.mxu0 %v4681
    %4731 = vmatprep.subr.mxu0 0.0
    %4732 = vmatpush1.msra.mxu0 %v4682
    %4733 = vmatprep.subr.mxu0 0.0
    %4734 = vmatpush1.msra.mxu0 %v4683
    %4735 = vmatprep.subr.mxu0 0.0
    %4736 = vmatpush1.msra.mxu0 %v4684
    %4737 = vmatprep.subr.mxu0 0.0
    %4738 = vmatpush1.msra.mxu0 %v4685
    %4739 = vmatprep.subr.mxu0 0.0
    %4740 = vmatpush1.msra.mxu0 %v4686
    %4741 = vmatprep.subr.mxu0 0.0
    %4742 = vmatpush1.msra.mxu0 %v4687
    %4743 = vmatprep.subr.mxu0 0.0
    %4744 = vmatpush1.msra.mxu0 %v4688
    %4745 = vmatprep.subr.mxu0 0.0
    %4746 = vmatpush1.msra.mxu0 %v4689
    %4747 = vmatprep.subr.mxu0 0.0
    %4748 = vmatpush1.msra.mxu0 %v4690
    %4749 = vmatprep.subr.mxu0 0.0
    %4750 = vmatpush1.msra.mxu0 %v4691
    %4751 = vmatprep.subr.mxu0 0.0
    %4752 = vmatpush1.msra.mxu0 %v4692
    %4753 = vmatprep.subr.mxu0 0.0
    %4754 = vmatpush1.msra.mxu0 %v4693
    %4755 = vmatprep.subr.mxu0 0.0
    %4756 = vmatpush1.msra.mxu0 %v4694
    %4757 = vmatprep.subr.mxu0 0.0
    %4758 = vmatpush1.msra.mxu0 %v4695
    %4759 = vmatprep.subr.mxu0 0.0
    %4760 = vmatpush1.msra.mxu0 %v4696
    %4761 = vmatprep.mubr.f32.mxu0 %v4662
    %4762 = vmatmul.mubr.f32.gmra.mrb[0].mxu0 %v4661
    %v4763 = vpop.f32.mrb[0].mxu0
    %v4764 = vadd.f32 0.0, %v4763
    %v4765 = vpop.f32.mrb[0].mxu0
    %4766 = vmatprep.mubr.f32.mxu0 %v4664
    %4767 = vmatmul.mubr.f32.gmra.mrb[0].mxu0 %v4663
    %v4768 = vpop.f32.mrb[0].mxu0
    %v4769 = vadd.f32 0.0, %v4768
    %v4770 = vpop.f32.mrb[0].mxu0
    %4771 = vdwg.mxu0
    %v4772 = vld [vmem:[#allocation28] sm:$0x3]
    %v4773 = vld [vmem:[#allocation29] sm:$0x1]
    %v4775 = vlaneseq
    %v4776 = vshrl.u32 %v4775, 7
    %v4777 = vsub.s32 0, %v4776
    %v4778 = vrot.slane %v4773, %v4777
    %v4781 = vsel %vm1810, %v4772, 0
    %4783 = vmatprep.subr.mxu0 0.0
    %4784 = vmatpush1.msra.mxu0 %v4764
    %4785 = vmatprep.subr.mxu0 0.0
    %4786 = vmatpush1.msra.mxu0 %v4769
    %4787 = vmatprep.subr.mxu0 0.0
    %4788 = vmatpush1.msra.mxu0 0.0
    %4789 = vmatprep.subr.mxu0 0.0
    %4790 = vmatpush1.msra.mxu0 0.0
    %4791 = vmatprep.subr.mxu0 0.0
    %4792 = vmatpush1.msra.mxu0 0.0
    %4793 = vmatprep.subr.mxu0 0.0
    %4794 = vmatpush1.msra.mxu0 0.0
    %4795 = vmatprep.subr.mxu0 0.0
    %4796 = vmatpush1.msra.mxu0 0.0
    %4797 = vmatprep.subr.mxu0 0.0
    %4798 = vmatpush1.msra.mxu0 0.0
    %4799 = vmatprep.subr.mxu0 0.0
    %4800 = vmatpush1.msra.mxu0 0.0
    %4801 = vmatprep.subr.mxu0 0.0
    %4802 = vmatpush1.msra.mxu0 0.0
    %4803 = vmatprep.subr.mxu0 0.0
    %4804 = vmatpush1.msra.mxu0 0.0
    %4805 = vmatprep.subr.mxu0 0.0
    %4806 = vmatpush1.msra.mxu0 0.0
    %4807 = vmatprep.subr.mxu0 0.0
    %4808 = vmatpush1.msra.mxu0 0.0
    %4809 = vmatprep.subr.mxu0 0.0
    %4810 = vmatpush1.msra.mxu0 0.0
    %4811 = vmatprep.subr.mxu0 0.0
    %4812 = vmatpush1.msra.mxu0 0.0
    %4813 = vmatprep.subr.mxu0 0.0
    %4814 = vmatpush1.msra.mxu0 0.0
    %4815 = vmatprep.subr.mxu0 0.0
    %4816 = vmatpush1.msra.mxu0 0.0
    %4817 = vmatprep.subr.mxu0 0.0
    %4818 = vmatpush1.msra.mxu0 0.0
    %4819 = vmatprep.subr.mxu0 0.0
    %4820 = vmatpush1.msra.mxu0 0.0
    %4821 = vmatprep.subr.mxu0 0.0
    %4822 = vmatpush1.msra.mxu0 0.0
    %4823 = vmatprep.subr.mxu0 0.0
    %4824 = vmatpush1.msra.mxu0 0.0
    %4825 = vmatprep.subr.mxu0 0.0
    %4826 = vmatpush1.msra.mxu0 0.0
    %4827 = vmatprep.subr.mxu0 0.0
    %4828 = vmatpush1.msra.mxu0 0.0
    %4829 = vmatprep.subr.mxu0 0.0
    %4830 = vmatpush1.msra.mxu0 0.0
    %4831 = vmatprep.subr.mxu0 0.0
    %4832 = vmatpush1.msra.mxu0 0.0
    %4833 = vmatprep.subr.mxu0 0.0
    %4834 = vmatpush1.msra.mxu0 0.0
    %4835 = vmatprep.subr.mxu0 0.0
    %4836 = vmatpush1.msra.mxu0 0.0
    %4837 = vmatprep.subr.mxu0 0.0
    %4838 = vmatpush1.msra.mxu0 0.0
    %4839 = vmatprep.subr.mxu0 0.0
    %4840 = vmatpush1.msra.mxu0 0.0
    %4841 = vmatprep.subr.mxu0 0.0
    %4842 = vmatpush1.msra.mxu0 0.0
    %4843 = vmatprep.subr.mxu0 0.0
    %4844 = vmatpush1.msra.mxu0 0.0
    %4845 = vmatprep.subr.mxu0 0.0
    %4846 = vmatpush1.msra.mxu0 0.0
    %4847 = vmatprep.mubr.f32.mxu0 0.0
    %4848 = vmatmul.mubr.f32.gmra.mrb[0].mxu0 %v4781
    %v4849 = vpop.f32.mrb[0].mxu0
    %v4850 = vadd.f32 %v4778, %v4849
    %v4851 = vpop.f32.mrb[0].mxu0
    %4852 = vdwg.mxu0
    %v4853 = vtanh.pop %v4850
    %v4854 = vld [vmem:[%s26] sm:$0xff]
    %v4855 = vld [vmem:[%s26 + $0x8] sm:$0xff]
    %v4856 = vld [vmem:[%s26 + $0x10] sm:$0xff]
    %v4857 = vld [vmem:[%s26 + $0x18] sm:$0xff]
    %v4858 = vld [vmem:[#allocation31] sm:$0x1]
    %v4860 = vlaneseq
    %v4861 = vshrl.u32 %v4860, 7
    %v4862 = vsub.s32 0, %v4861
    %v4863 = vrot.slane %v4858, %v4862
    %v4866 = vsel %vm3394, %v4853, 0
    %4868 = vmatprep.subr.mxu0 0.0
    %4869 = vmatpush1.msra.mxu0 %v4854
    %4870 = vmatprep.subr.mxu0 0.0
    %4871 = vmatpush1.msra.mxu0 %v4855
    %4872 = vmatprep.subr.mxu0 0.0
    %4873 = vmatpush1.msra.mxu0 %v4856
    %4874 = vmatprep.subr.mxu0 0.0
    %4875 = vmatpush1.msra.mxu0 %v4857
    %4876 = vmatprep.subr.mxu0 0.0
    %4877 = vmatpush1.msra.mxu0 0.0
    %4878 = vmatprep.subr.mxu0 0.0
    %4879 = vmatpush1.msra.mxu0 0.0
    %4880 = vmatprep.subr.mxu0 0.0
    %4881 = vmatpush1.msra.mxu0 0.0
    %4882 = vmatprep.subr.mxu0 0.0
    %4883 = vmatpush1.msra.mxu0 0.0
    %4884 = vmatprep.subr.mxu0 0.0
    %4885 = vmatpush1.msra.mxu0 0.0
    %4886 = vmatprep.subr.mxu0 0.0
    %4887 = vmatpush1.msra.mxu0 0.0
    %4888 = vmatprep.subr.mxu0 0.0
    %4889 = vmatpush1.msra.mxu0 0.0
    %4890 = vmatprep.subr.mxu0 0.0
    %4891 = vmatpush1.msra.mxu0 0.0
    %4892 = vmatprep.subr.mxu0 0.0
    %4893 = vmatpush1.msra.mxu0 0.0
    %4894 = vmatprep.subr.mxu0 0.0
    %4895 = vmatpush1.msra.mxu0 0.0
    %4896 = vmatprep.subr.mxu0 0.0
    %4897 = vmatpush1.msra.mxu0 0.0
    %4898 = vmatprep.subr.mxu0 0.0
    %4899 = vmatpush1.msra.mxu0 0.0
    %4900 = vmatprep.subr.mxu0 0.0
    %4901 = vmatpush1.msra.mxu0 0.0
    %4902 = vmatprep.subr.mxu0 0.0
    %4903 = vmatpush1.msra.mxu0 0.0
    %4904 = vmatprep.subr.mxu0 0.0
    %4905 = vmatpush1.msra.mxu0 0.0
    %4906 = vmatprep.subr.mxu0 0.0
    %4907 = vmatpush1.msra.mxu0 0.0
    %4908 = vmatprep.subr.mxu0 0.0
    %4909 = vmatpush1.msra.mxu0 0.0
    %4910 = vmatprep.subr.mxu0 0.0
    %4911 = vmatpush1.msra.mxu0 0.0
    %4912 = vmatprep.subr.mxu0 0.0
    %4913 = vmatpush1.msra.mxu0 0.0
    %4914 = vmatprep.subr.mxu0 0.0
    %4915 = vmatpush1.msra.mxu0 0.0
    %4916 = vmatprep.subr.mxu0 0.0
    %4917 = vmatpush1.msra.mxu0 0.0
    %4918 = vmatprep.subr.mxu0 0.0
    %4919 = vmatpush1.msra.mxu0 0.0
    %4920 = vmatprep.subr.mxu0 0.0
    %4921 = vmatpush1.msra.mxu0 0.0
    %4922 = vmatprep.subr.mxu0 0.0
    %4923 = vmatpush1.msra.mxu0 0.0
    %4924 = vmatprep.subr.mxu0 0.0
    %4925 = vmatpush1.msra.mxu0 0.0
    %4926 = vmatprep.subr.mxu0 0.0
    %4927 = vmatpush1.msra.mxu0 0.0
    %4928 = vmatprep.subr.mxu0 0.0
    %4929 = vmatpush1.msra.mxu0 0.0
    %4930 = vmatprep.subr.mxu0 0.0
    %4931 = vmatpush1.msra.mxu0 0.0
    %4932 = vmatprep.mubr.f32.mxu0 0.0
    %4933 = vmatmul.mubr.f32.gmra.mrb[0].mxu0 %v4866
    %v4934 = vpop.f32.mrb[0].mxu0
    %v4935 = vadd.f32 %v4863, %v4934
    %v4936 = vpop.f32.mrb[0].mxu0
    %4937 = vdwg.mxu0
    %v4938 = vtanh.pop %v4935
    %vm4939 = vcmask 9216
    %4940 = vst.msk [vmem:[#allocation32] sm:$0x3] %vm4939, %v4938
    // Predicated region
    $region190: #{forward_prepared.1} parent=1 // pred_check
      _
    $region191: #{forward_prepared.1} parent=1 // pred_check_branch
      %4942 = sbr.rel (0) target = $region193
    $region192: #{forward_prepared.1} parent=1 // pred_region
      %s4944 = ssub.s32 32, 32
      %4945 = vsyncadd [#allocation4], %s4944
      %s4947 = sshll.u32 [#allocation32], 4
      %s4948 = int_to_ptr.vmem [resolvable:$true] %s4947
      %4950 = dma.vmem_to_hbm [thread:$0]  %s4948, 32, %s28, [#allocation4]
    $region193: #{forward_prepared.1} parent=1 // pred_fallthru
      _
    // Predicated region
    $region194: #{forward_prepared.1} parent=1 // pred_check
      _
    $region195: #{forward_prepared.1} parent=1 // pred_check_branch
      %4952 = sbr.rel (0) target = $region197
    $region196: #{forward_prepared.1} parent=1 // pred_region
      %4953 = dma.done [#allocation4], 32
    $region197: #{forward_prepared.1} parent=1 // pred_fallthru
      _
    %4954 = vsyncpa [#allocation3], 1
    %4955 = vsyncpa [#allocation6], 1
    %4956 = vsyncpa [#allocation9], 1
    %4957 = vsyncpa [#allocation12], 1
    %4958 = vsyncpa [#allocation15], 1
    %4959 = vsyncpa [#allocation18], 1
    %4960 = vsyncpa [#allocation21], 1
    %4961 = vsyncpa [#allocation24], 1
    %4962 = vsyncpa [#allocation27], 1
    %4963 = vsyncpa [#allocation30], 1
    %4964 = vsyncpa [#allocation4], 1

</llo_original>
